<compile_context>
chip_gen: v5e
topology: v5e:2x2
jax: 0.10.0
libtpu: 0.0.40
codegen_flags: <defaults>
</compile_context>

<pallas_src>
import functools

import jax
import jax.numpy as jnp
from jax.experimental import pallas as pl
from jax.experimental.pallas import tpu as pltpu

LANE = 128


# --------------------------------- fused kernel ---------------------------------
def _fused_kernel(tok_ref,                      # VMEM (1, T*BB, 1) int32 token ids (t-major rows)
                  embih_ref,                    # VMEM (V_pad, 8H) bf16  fused  emb @ [Wih_f|Wih_b]
                  b_fb_ref,                     # VMEM (1, 8H) f32   [b_f | b_b] (b_ih+b_hh combined)
                  whh_f_ref,                    # VMEM (H, 4H) bf16
                  w1_ref, b1_ref,               # (2H,128) bf16 / (1,128) f32
                  w2_ref, b2_ref,               # (128,128) bf16 / (1,128) f32   (64 -> lane-padded)
                  w3_ref, b3_ref,               # (128,NPAD) bf16 / (1,NPAD) f32 (lane-padded)
                  o_ref,                        # VMEM (BB, NPAD) f32 logits (padded)
                  gx_sc):                       # VMEM scratch (T*BB, 8H) f32  staged gate pre-acts
    TB = tok_ref.shape[1]                       # T * BB rows
    BB = o_ref.shape[0]                         # batch rows per block (multiple of 8)
    T = TB // BB
    H = whh_f_ref.shape[0]
    V_pad = embih_ref.shape[0]

    # ---- embedding lookup + hoisted input projection for BOTH directions: one MXU one-hot matmul.
    # Row r = t*BB + b of the one-hot selects token (b, t); columns [0,4H)=fwd gates, [4H,8H)=bwd.
    tok = tok_ref[0]                                                  # (T*BB, 1) int32
    vocab_iota = jax.lax.broadcasted_iota(jnp.int32, (TB, V_pad), 1)
    onehot = (vocab_iota == tok).astype(jnp.bfloat16)                 # (T*BB, V_pad) bf16
    gx_sc[...] = jnp.dot(onehot, embih_ref[...],
                         preferred_element_type=jnp.float32) + b_fb_ref[...]   # (T*BB, 8H) f32

    # ---- forward recurrence, fully unrolled (T is small); only h @ W_hh stays in the loop.
    # Per-step reads are sublane-aligned (BB multiple of 8) slices from the VMEM scratch.
    h = jnp.zeros((BB, H), jnp.float32)
    c = jnp.zeros((BB, H), jnp.float32)
    for t in range(T):
        gates = gx_sc[t * BB:(t + 1) * BB, 0:4 * H] + jnp.dot(
            h.astype(jnp.bfloat16), whh_f_ref[...],
            preferred_element_type=jnp.float32)                       # (BB, 4H) f32
        i_g = jax.nn.sigmoid(gates[:, 0 * H:1 * H])
        f_g = jax.nn.sigmoid(gates[:, 1 * H:2 * H])
        g_g = jnp.tanh(gates[:, 2 * H:3 * H])
        o_g = jax.nn.sigmoid(gates[:, 3 * H:4 * H])
        c = f_g * c + i_g * g_g
        h = o_g * jnp.tanh(c)

    # ---- backward direction: lstm_out[:, -1, H:] is exactly one cell step from zero state
    #      (h0 = c0 = 0), so h @ W_hh_b vanishes, the f-gate is unused, and only t = T-1 is needed.
    gb = gx_sc[(T - 1) * BB:T * BB, 4 * H:8 * H]                      # (BB, 4H)
    i_b = jax.nn.sigmoid(gb[:, 0 * H:1 * H])
    g_b = jnp.tanh(gb[:, 2 * H:3 * H])
    o_b = jax.nn.sigmoid(gb[:, 3 * H:4 * H])
    hb = o_b * jnp.tanh(i_b * g_b)

    # ---- MLP head (dropout = identity at inference); everything lane-padded to 128 ----
    last = jnp.concatenate([h, hb], axis=-1).astype(jnp.bfloat16)     # (BB, 2H)
    h1 = jnp.maximum(jnp.dot(last, w1_ref[...],
                             preferred_element_type=jnp.float32) + b1_ref[...], 0.0)
    h2 = jnp.maximum(jnp.dot(h1.astype(jnp.bfloat16), w2_ref[...],
                             preferred_element_type=jnp.float32) + b2_ref[...], 0.0)
    o_ref[...] = jnp.dot(h2.astype(jnp.bfloat16), w3_ref[...],
                         preferred_element_type=jnp.float32) + b3_ref[...]


def _fused_call(tokens, kp):
    B, T = tokens.shape
    H = kp["whh_f"].shape[0]
    npad = kp["w3"].shape[1]

    # Rows per grid step: one sublane tile for tiny batches, bigger blocks when batch grows so the
    # recurrence / head matmuls fill the MXU.  Grid over blocks is "parallel" -> both TCs on v7x.
    BB = 8 if B <= 8 else 128
    nblk = (B + BB - 1) // BB
    B_pad = nblk * BB

    # Token layout per block: row r = t*BB + b  (t-major), as (nblk, T*BB, 1) int32.
    tok_p = jnp.zeros((B_pad, T), jnp.int32).at[:B].set(tokens)
    tok_col = tok_p.reshape(nblk, BB, T).transpose(0, 2, 1).reshape(nblk, T * BB, 1)

    full = lambda a: pl.BlockSpec(a.shape, lambda i, _r=a.ndim: (0,) * _r)

    out = pl.pallas_call(
        _fused_kernel,
        out_shape=jax.ShapeDtypeStruct((B_pad, npad), jnp.float32),
        grid=(nblk,),
        in_specs=[
            pl.BlockSpec((1, T * BB, 1), lambda i: (i, 0, 0)),        # tokens (per batch block)
            full(kp["embih_fb"]),
            full(kp["b_fb"]),
            full(kp["whh_f"]),
            full(kp["w1"]), full(kp["b1"]),
            full(kp["w2"]), full(kp["b2"]),
            full(kp["w3"]), full(kp["b3"]),
        ],
        out_specs=pl.BlockSpec((BB, npad), lambda i: (i, 0)),
        scratch_shapes=[pltpu.VMEM((T * BB, 8 * H), jnp.float32)],
        compiler_params=pltpu.CompilerParams(
            dimension_semantics=("parallel",),
            vmem_limit_bytes=32 * 1024 * 1024,
        ),
    )(tok_col, kp["embih_fb"], kp["b_fb"], kp["whh_f"],
      kp["w1"], kp["b1"], kp["w2"], kp["b2"], kp["w3"], kp["b3"])
    return out


@functools.partial(jax.jit, static_argnames=("num_classes",))
def code_analysis_forward(tokens, kparams, *, num_classes):
    """tokens: (B, T) int32. Returns (B, num_classes) f32 logits."""
    B = tokens.shape[0]
    logits_padded = _fused_call(tokens, kparams)          # (B_pad, NPAD)
    return logits_padded[:B, :num_classes]


# ---------------------------- parameter preparation -----------------------------
def init_params(key, vocab_size, embedding_dim, hidden_dim, num_classes):
    """Master f32 parameters (layouts already transposed to (in, out); gate order i,f,g,o)."""
    ks = jax.random.split(key, 16)
    s = 0.05
    H4 = 4 * hidden_dim
    return {
        "embedding": jax.random.normal(ks[0], (vocab_size, embedding_dim), jnp.float32),
        "wih_f": s * jax.random.normal(ks[1], (embedding_dim, H4), jnp.float32),
        "whh_f": s * jax.random.normal(ks[2], (hidden_dim, H4), jnp.float32),
        "b_f":   s * jax.random.normal(ks[3], (1, H4), jnp.float32),   # b_ih + b_hh combined
        "wih_b": s * jax.random.normal(ks[4], (embedding_dim, H4), jnp.float32),
        "whh_b": s * jax.random.normal(ks[5], (hidden_dim, H4), jnp.float32),
        "b_b":   s * jax.random.normal(ks[6], (1, H4), jnp.float32),
        "w1": s * jax.random.normal(ks[7], (2 * hidden_dim, 128), jnp.float32),
        "b1": s * jax.random.normal(ks[8], (1, 128), jnp.float32),
        "w2": s * jax.random.normal(ks[9], (128, 64), jnp.float32),
        "b2": s * jax.random.normal(ks[10], (1, 64), jnp.float32),
        "w3": s * jax.random.normal(ks[11], (64, num_classes), jnp.float32),
        "b3": s * jax.random.normal(ks[12], (1, num_classes), jnp.float32),
    }


def prepare_kernel_params(params):
    """Kernel-side params: embedding folded into the input projection, bf16 MXU weights,
    lane-padded head.  NOTE: a real PyTorch checkpoint loader must sum b_ih+b_hh and keep the
    i,f,g,o gate order, and bf16 weight quantization drifts logits ~1e-2 vs f32 (intentional)."""
    V, E = params["embedding"].shape
    H = params["whh_f"].shape[0]
    ncls = params["w3"].shape[1]
    npad = ((max(ncls, 1) + LANE - 1) // LANE) * LANE
    v_pad = ((V + LANE - 1) // LANE) * LANE

    # Fused embedding + fwd/bwd input projection: (V_pad, 8H).  Columns [0,4H)=fwd, [4H,8H)=bwd.
    wih_fb = jnp.concatenate([params["wih_f"], params["wih_b"]], axis=1)          # (E, 8H)
    embih = params["embedding"] @ wih_fb                                           # (V, 8H) f32
    embih_p = jnp.zeros((v_pad, 8 * H), jnp.float32).at[:V].set(embih)

    b_fb = jnp.concatenate([params["b_f"], params["b_b"]], axis=1)                 # (1, 8H)

    # Head: pad the 64-wide fc2 hidden and the logits to full 128-lane tiles (zero padding,
    # zero w3 rows for the padded lanes -> logits unaffected).
    w2p = jnp.zeros((params["w2"].shape[0], LANE), jnp.float32).at[:, :64].set(params["w2"])
    b2p = jnp.zeros((1, LANE), jnp.float32).at[:, :64].set(params["b2"])
    w3p = jnp.zeros((LANE, npad), jnp.float32).at[:64, :ncls].set(params["w3"])
    b3p = jnp.zeros((1, npad), jnp.float32).at[:, :ncls].set(params["b3"])

    bf16 = lambda a: a.astype(jnp.bfloat16)
    return {
        "embih_fb": bf16(embih_p),
        "b_fb": b_fb,
        "whh_f": bf16(params["whh_f"]),
        # whh_b intentionally dropped: the backward hidden at the last original timestep is one
        # cell step from zero state, so h0 @ whh_b == 0 and the weight is never needed.
        "w1": bf16(params["w1"]), "b1": params["b1"],
        "w2": bf16(w2p), "b2": b2p,
        "w3": bf16(w3p), "b3": b3p,
    }


# ------------------------------ pure-JAX reference -------------------------------
def _reference_forward(tokens, params):
    """Faithful port of the PyTorch forward (full bidirectional LSTM, f32)."""
    emb = params["embedding"][tokens]            # (B, T, E)
    B, T, _ = emb.shape
    H = params["whh_f"].shape[0]

    def cell(x_t, h, c, wih, whh, b):
        gates = x_t @ wih + h @ whh + b[0]
        i = jax.nn.sigmoid(gates[:, 0 * H:1 * H])
        f = jax.nn.sigmoid(gates[:, 1 * H:2 * H])
        g = jnp.tanh(gates[:, 2 * H:3 * H])
        o = jax.nn.sigmoid(gates[:, 3 * H:4 * H])
        c = f * c + i * g
        return o * jnp.tanh(c), c

    h = jnp.zeros((B, H)); c = jnp.zeros((B, H))
    fwd = []
    for t in range(T):
        h, c = cell(emb[:, t], h, c, params["wih_f"], params["whh_f"], params["b_f"])
        fwd.append(h)
    hb = jnp.zeros((B, H)); cb = jnp.zeros((B, H))
    bwd = [None] * T
    for t in reversed(range(T)):
        hb, cb = cell(emb[:, t], hb, cb, params["wih_b"], params["whh_b"], params["b_b"])
        bwd[t] = hb
    last = jnp.concatenate([fwd[-1], bwd[-1]], axis=-1)   # lstm_out[:, -1, :]
    x = jnp.maximum(last @ params["w1"] + params["b1"][0], 0.0)
    x = jnp.maximum(x @ params["w2"] + params["b2"][0], 0.0)
    return x @ params["w3"] + params["b3"][0]


# ------------------------------------- main ---------------------------------------
if __name__ == "__main__":
    VOCAB, EMB, HID, NCLS = 50, 128, 256, 5
    B, T = 2, 8

    key = jax.random.PRNGKey(0)
    kp_key, kx_key = jax.random.split(key)
    params = init_params(kp_key, VOCAB, EMB, HID, NCLS)
    kparams = prepare_kernel_params(params)
    tokens = jax.random.randint(kx_key, (B, T), 0, VOCAB, dtype=jnp.int32)

    logits = code_analysis_forward(tokens, kparams, num_classes=NCLS)
    logits = jax.block_until_ready(logits)
    assert logits.shape == (B, NCLS) and logits.dtype == jnp.float32

    ref = jax.block_until_ready(_reference_forward(tokens, params))
    assert jnp.allclose(logits, ref, rtol=5e-2, atol=5e-2), "mismatch vs reference"

    print("KERNEL_OK")
</pallas_src>

<mosaic_0001>
module attributes {stable_mosaic.version = 11 : i64} {
  func.func @_fused_kernel(%arg0: i32, %arg1: memref<1x64x1xi32, #tpu.memory_space<vmem>>, %arg2: memref<128x2048xbf16, #tpu.memory_space<vmem>>, %arg3: memref<1x2048xf32, #tpu.memory_space<vmem>>, %arg4: memref<256x1024xbf16, #tpu.memory_space<vmem>>, %arg5: memref<512x128xbf16, #tpu.memory_space<vmem>>, %arg6: memref<1x128xf32, #tpu.memory_space<vmem>>, %arg7: memref<128x128xbf16, #tpu.memory_space<vmem>>, %arg8: memref<1x128xf32, #tpu.memory_space<vmem>>, %arg9: memref<128x128xbf16, #tpu.memory_space<vmem>>, %arg10: memref<1x128xf32, #tpu.memory_space<vmem>>, %arg11: memref<8x128xf32, #tpu.memory_space<vmem>>, %arg12: memref<64x2048xf32, #tpu.memory_space<vmem>>) attributes {dimension_semantics = [#tpu.dimension_semantics<parallel>], iteration_bounds = array<i64: 1>, scalar_prefetch = 0 : i64, scratch_operands = 1 : i64, tpu.core_type = #tpu.core_type<tc>, window_params = [{transform_indices = @transform_0, window_bounds = array<i64: 1, 64, 1>}, {pipeline_mode = #tpu.pipeline_mode<synchronous>, transform_indices = @transform_1, window_bounds = array<i64: 128, 2048>}, {pipeline_mode = #tpu.pipeline_mode<synchronous>, transform_indices = @transform_2, window_bounds = array<i64: 1, 2048>}, {pipeline_mode = #tpu.pipeline_mode<synchronous>, transform_indices = @transform_3, window_bounds = array<i64: 256, 1024>}, {pipeline_mode = #tpu.pipeline_mode<synchronous>, transform_indices = @transform_4, window_bounds = array<i64: 512, 128>}, {pipeline_mode = #tpu.pipeline_mode<synchronous>, transform_indices = @transform_5, window_bounds = array<i64: 1, 128>}, {pipeline_mode = #tpu.pipeline_mode<synchronous>, transform_indices = @transform_6, window_bounds = array<i64: 128, 128>}, {pipeline_mode = #tpu.pipeline_mode<synchronous>, transform_indices = @transform_7, window_bounds = array<i64: 1, 128>}, {pipeline_mode = #tpu.pipeline_mode<synchronous>, transform_indices = @transform_8, window_bounds = array<i64: 128, 128>}, {pipeline_mode = #tpu.pipeline_mode<synchronous>, transform_indices = @transform_9, window_bounds = array<i64: 1, 128>}, {transform_indices = @transform_10, window_bounds = array<i64: 8, 128>}]} {
    %c0 = arith.constant 0 : index
    %c0_0 = arith.constant 0 : index
    %c0_1 = arith.constant 0 : index
    %0 = vector.load %arg1[%c0, %c0_0, %c0_1] : memref<1x64x1xi32, #tpu.memory_space<vmem>>, vector<1x64x1xi32>
    %1 = vector.shape_cast %0 : vector<1x64x1xi32> to vector<64x1xi32>
    %2 = tpu.iota {dimensions = array<i32: 1>} : vector<64x128xi32>
    %3 = vector.broadcast %1 : vector<64x1xi32> to vector<64x128xi32>
    %4 = arith.cmpi eq, %2, %3 : vector<64x128xi32>
    %5 = arith.extui %4 : vector<64x128xi1> to vector<64x128xi32>
    %6 = arith.sitofp %5 : vector<64x128xi32> to vector<64x128xf32>
    %7 = arith.truncf %6 : vector<64x128xf32> to vector<64x128xbf16>
    %c0_2 = arith.constant 0 : index
    %c0_3 = arith.constant 0 : index
    %8 = vector.load %arg2[%c0_2, %c0_3] : memref<128x2048xbf16, #tpu.memory_space<vmem>>, vector<128x2048xbf16>
    %cst = arith.constant dense<0.000000e+00> : vector<64x2048xf32>
    %9 = tpu.matmul %7, %8, %cst {dimension_numbers = #tpu.dot_dimension_numbers<[1], [0], [0], [1], [0, 0, 1, 1], [], []>} : vector<64x128xbf16>, vector<128x2048xbf16>, vector<64x2048xf32> -> vector<64x2048xf32>
    %c0_4 = arith.constant 0 : index
    %c0_5 = arith.constant 0 : index
    %10 = vector.load %arg3[%c0_4, %c0_5] : memref<1x2048xf32, #tpu.memory_space<vmem>>, vector<1x2048xf32>
    %11 = vector.broadcast %10 : vector<1x2048xf32> to vector<64x2048xf32>
    %12 = arith.addf %9, %11 : vector<64x2048xf32>
    %c0_6 = arith.constant 0 : index
    %c0_7 = arith.constant 0 : index
    %13 = vector.load %arg12[%c0_6, %c0_7] : memref<64x2048xf32, #tpu.memory_space<vmem>>, vector<64x2048xf32>
    tpu.vector_store %arg12[%c0_6, %c0_7], %12 {strides = array<i32>} : memref<64x2048xf32, #tpu.memory_space<vmem>>, vector<64x2048xf32>,
    %cst_8 = arith.constant 0.000000e+00 : f32
    %14 = vector.broadcast %cst_8 : f32 to vector<8x256xf32>
    %cst_9 = arith.constant 0.000000e+00 : f32
    %15 = vector.broadcast %cst_9 : f32 to vector<8x256xf32>
    %c0_10 = arith.constant 0 : index
    %c0_11 = arith.constant 0 : index
    %16 = vector.load %arg12[%c0_10, %c0_11] : memref<64x2048xf32, #tpu.memory_space<vmem>>, vector<8x1024xf32>
    %17 = arith.truncf %14 : vector<8x256xf32> to vector<8x256xbf16>
    %c0_12 = arith.constant 0 : index
    %c0_13 = arith.constant 0 : index
    %18 = vector.load %arg4[%c0_12, %c0_13] : memref<256x1024xbf16, #tpu.memory_space<vmem>>, vector<256x1024xbf16>
    %cst_14 = arith.constant dense<0.000000e+00> : vector<8x1024xf32>
    %19 = tpu.matmul %17, %18, %cst_14 {dimension_numbers = #tpu.dot_dimension_numbers<[1], [0], [0], [1], [0, 0, 1, 1], [], []>} : vector<8x256xbf16>, vector<256x1024xbf16>, vector<8x1024xf32> -> vector<8x1024xf32>
    %20 = arith.addf %16, %19 : vector<8x1024xf32>
    %21 = vector.extract_strided_slice %20 {offsets = [0, 0], sizes = [8, 256], strides = [1, 1]} : vector<8x1024xf32> to vector<8x256xf32>
    %22 = arith.negf %21 : vector<8x256xf32>
    %23 = math.exp %22 : vector<8x256xf32>
    %cst_15 = arith.constant 1.000000e+00 : f32
    %24 = vector.broadcast %cst_15 : f32 to vector<8x256xf32>
    %25 = arith.addf %24, %23 : vector<8x256xf32>
    %26 = arith.divf %24, %25 : vector<8x256xf32>
    %27 = vector.extract_strided_slice %20 {offsets = [0, 256], sizes = [8, 256], strides = [1, 1]} : vector<8x1024xf32> to vector<8x256xf32>
    %28 = arith.negf %27 : vector<8x256xf32>
    %29 = math.exp %28 : vector<8x256xf32>
    %cst_16 = arith.constant 1.000000e+00 : f32
    %30 = vector.broadcast %cst_16 : f32 to vector<8x256xf32>
    %31 = arith.addf %30, %29 : vector<8x256xf32>
    %32 = arith.divf %30, %31 : vector<8x256xf32>
    %33 = vector.extract_strided_slice %20 {offsets = [0, 512], sizes = [8, 256], strides = [1, 1]} : vector<8x1024xf32> to vector<8x256xf32>
    %34 = math.tanh %33 : vector<8x256xf32>
    %35 = vector.extract_strided_slice %20 {offsets = [0, 768], sizes = [8, 256], strides = [1, 1]} : vector<8x1024xf32> to vector<8x256xf32>
    %36 = arith.negf %35 : vector<8x256xf32>
    %37 = math.exp %36 : vector<8x256xf32>
    %cst_17 = arith.constant 1.000000e+00 : f32
    %38 = vector.broadcast %cst_17 : f32 to vector<8x256xf32>
    %39 = arith.addf %38, %37 : vector<8x256xf32>
    %40 = arith.divf %38, %39 : vector<8x256xf32>
    %41 = arith.mulf %32, %15 : vector<8x256xf32>
    %42 = arith.mulf %26, %34 : vector<8x256xf32>
    %43 = arith.addf %41, %42 : vector<8x256xf32>
    %44 = math.tanh %43 : vector<8x256xf32>
    %45 = arith.mulf %40, %44 : vector<8x256xf32>
    %c8 = arith.constant 8 : index
    %c0_18 = arith.constant 0 : index
    %46 = vector.load %arg12[%c8, %c0_18] : memref<64x2048xf32, #tpu.memory_space<vmem>>, vector<8x1024xf32>
    %47 = arith.truncf %45 : vector<8x256xf32> to vector<8x256xbf16>
    %c0_19 = arith.constant 0 : index
    %c0_20 = arith.constant 0 : index
    %48 = vector.load %arg4[%c0_19, %c0_20] : memref<256x1024xbf16, #tpu.memory_space<vmem>>, vector<256x1024xbf16>
    %cst_21 = arith.constant dense<0.000000e+00> : vector<8x1024xf32>
    %49 = tpu.matmul %47, %48, %cst_21 {dimension_numbers = #tpu.dot_dimension_numbers<[1], [0], [0], [1], [0, 0, 1, 1], [], []>} : vector<8x256xbf16>, vector<256x1024xbf16>, vector<8x1024xf32> -> vector<8x1024xf32>
    %50 = arith.addf %46, %49 : vector<8x1024xf32>
    %51 = vector.extract_strided_slice %50 {offsets = [0, 0], sizes = [8, 256], strides = [1, 1]} : vector<8x1024xf32> to vector<8x256xf32>
    %52 = arith.negf %51 : vector<8x256xf32>
    %53 = math.exp %52 : vector<8x256xf32>
    %cst_22 = arith.constant 1.000000e+00 : f32
    %54 = vector.broadcast %cst_22 : f32 to vector<8x256xf32>
    %55 = arith.addf %54, %53 : vector<8x256xf32>
    %56 = arith.divf %54, %55 : vector<8x256xf32>
    %57 = vector.extract_strided_slice %50 {offsets = [0, 256], sizes = [8, 256], strides = [1, 1]} : vector<8x1024xf32> to vector<8x256xf32>
    %58 = arith.negf %57 : vector<8x256xf32>
    %59 = math.exp %58 : vector<8x256xf32>
    %cst_23 = arith.constant 1.000000e+00 : f32
    %60 = vector.broadcast %cst_23 : f32 to vector<8x256xf32>
    %61 = arith.addf %60, %59 : vector<8x256xf32>
    %62 = arith.divf %60, %61 : vector<8x256xf32>
    %63 = vector.extract_strided_slice %50 {offsets = [0, 512], sizes = [8, 256], strides = [1, 1]} : vector<8x1024xf32> to vector<8x256xf32>
    %64 = math.tanh %63 : vector<8x256xf32>
    %65 = vector.extract_strided_slice %50 {offsets = [0, 768], sizes = [8, 256], strides = [1, 1]} : vector<8x1024xf32> to vector<8x256xf32>
    %66 = arith.negf %65 : vector<8x256xf32>
    %67 = math.exp %66 : vector<8x256xf32>
    %cst_24 = arith.constant 1.000000e+00 : f32
    %68 = vector.broadcast %cst_24 : f32 to vector<8x256xf32>
    %69 = arith.addf %68, %67 : vector<8x256xf32>
    %70 = arith.divf %68, %69 : vector<8x256xf32>
    %71 = arith.mulf %62, %43 : vector<8x256xf32>
    %72 = arith.mulf %56, %64 : vector<8x256xf32>
    %73 = arith.addf %71, %72 : vector<8x256xf32>
    %74 = math.tanh %73 : vector<8x256xf32>
    %75 = arith.mulf %70, %74 : vector<8x256xf32>
    %c16 = arith.constant 16 : index
    %c0_25 = arith.constant 0 : index
    %76 = vector.load %arg12[%c16, %c0_25] : memref<64x2048xf32, #tpu.memory_space<vmem>>, vector<8x1024xf32>
    %77 = arith.truncf %75 : vector<8x256xf32> to vector<8x256xbf16>
    %c0_26 = arith.constant 0 : index
    %c0_27 = arith.constant 0 : index
    %78 = vector.load %arg4[%c0_26, %c0_27] : memref<256x1024xbf16, #tpu.memory_space<vmem>>, vector<256x1024xbf16>
    %cst_28 = arith.constant dense<0.000000e+00> : vector<8x1024xf32>
    %79 = tpu.matmul %77, %78, %cst_28 {dimension_numbers = #tpu.dot_dimension_numbers<[1], [0], [0], [1], [0, 0, 1, 1], [], []>} : vector<8x256xbf16>, vector<256x1024xbf16>, vector<8x1024xf32> -> vector<8x1024xf32>
    %80 = arith.addf %76, %79 : vector<8x1024xf32>
    %81 = vector.extract_strided_slice %80 {offsets = [0, 0], sizes = [8, 256], strides = [1, 1]} : vector<8x1024xf32> to vector<8x256xf32>
    %82 = arith.negf %81 : vector<8x256xf32>
    %83 = math.exp %82 : vector<8x256xf32>
    %cst_29 = arith.constant 1.000000e+00 : f32
    %84 = vector.broadcast %cst_29 : f32 to vector<8x256xf32>
    %85 = arith.addf %84, %83 : vector<8x256xf32>
    %86 = arith.divf %84, %85 : vector<8x256xf32>
    %87 = vector.extract_strided_slice %80 {offsets = [0, 256], sizes = [8, 256], strides = [1, 1]} : vector<8x1024xf32> to vector<8x256xf32>
    %88 = arith.negf %87 : vector<8x256xf32>
    %89 = math.exp %88 : vector<8x256xf32>
    %cst_30 = arith.constant 1.000000e+00 : f32
    %90 = vector.broadcast %cst_30 : f32 to vector<8x256xf32>
    %91 = arith.addf %90, %89 : vector<8x256xf32>
    %92 = arith.divf %90, %91 : vector<8x256xf32>
    %93 = vector.extract_strided_slice %80 {offsets = [0, 512], sizes = [8, 256], strides = [1, 1]} : vector<8x1024xf32> to vector<8x256xf32>
    %94 = math.tanh %93 : vector<8x256xf32>
    %95 = vector.extract_strided_slice %80 {offsets = [0, 768], sizes = [8, 256], strides = [1, 1]} : vector<8x1024xf32> to vector<8x256xf32>
    %96 = arith.negf %95 : vector<8x256xf32>
    %97 = math.exp %96 : vector<8x256xf32>
    %cst_31 = arith.constant 1.000000e+00 : f32
    %98 = vector.broadcast %cst_31 : f32 to vector<8x256xf32>
    %99 = arith.addf %98, %97 : vector<8x256xf32>
    %100 = arith.divf %98, %99 : vector<8x256xf32>
    %101 = arith.mulf %92, %73 : vector<8x256xf32>
    %102 = arith.mulf %86, %94 : vector<8x256xf32>
    %103 = arith.addf %101, %102 : vector<8x256xf32>
    %104 = math.tanh %103 : vector<8x256xf32>
    %105 = arith.mulf %100, %104 : vector<8x256xf32>
    %c24 = arith.constant 24 : index
    %c0_32 = arith.constant 0 : index
    %106 = vector.load %arg12[%c24, %c0_32] : memref<64x2048xf32, #tpu.memory_space<vmem>>, vector<8x1024xf32>
    %107 = arith.truncf %105 : vector<8x256xf32> to vector<8x256xbf16>
    %c0_33 = arith.constant 0 : index
    %c0_34 = arith.constant 0 : index
    %108 = vector.load %arg4[%c0_33, %c0_34] : memref<256x1024xbf16, #tpu.memory_space<vmem>>, vector<256x1024xbf16>
    %cst_35 = arith.constant dense<0.000000e+00> : vector<8x1024xf32>
    %109 = tpu.matmul %107, %108, %cst_35 {dimension_numbers = #tpu.dot_dimension_numbers<[1], [0], [0], [1], [0, 0, 1, 1], [], []>} : vector<8x256xbf16>, vector<256x1024xbf16>, vector<8x1024xf32> -> vector<8x1024xf32>
    %110 = arith.addf %106, %109 : vector<8x1024xf32>
    %111 = vector.extract_strided_slice %110 {offsets = [0, 0], sizes = [8, 256], strides = [1, 1]} : vector<8x1024xf32> to vector<8x256xf32>
    %112 = arith.negf %111 : vector<8x256xf32>
    %113 = math.exp %112 : vector<8x256xf32>
    %cst_36 = arith.constant 1.000000e+00 : f32
    %114 = vector.broadcast %cst_36 : f32 to vector<8x256xf32>
    %115 = arith.addf %114, %113 : vector<8x256xf32>
    %116 = arith.divf %114, %115 : vector<8x256xf32>
    %117 = vector.extract_strided_slice %110 {offsets = [0, 256], sizes = [8, 256], strides = [1, 1]} : vector<8x1024xf32> to vector<8x256xf32>
    %118 = arith.negf %117 : vector<8x256xf32>
    %119 = math.exp %118 : vector<8x256xf32>
    %cst_37 = arith.constant 1.000000e+00 : f32
    %120 = vector.broadcast %cst_37 : f32 to vector<8x256xf32>
    %121 = arith.addf %120, %119 : vector<8x256xf32>
    %122 = arith.divf %120, %121 : vector<8x256xf32>
    %123 = vector.extract_strided_slice %110 {offsets = [0, 512], sizes = [8, 256], strides = [1, 1]} : vector<8x1024xf32> to vector<8x256xf32>
    %124 = math.tanh %123 : vector<8x256xf32>
    %125 = vector.extract_strided_slice %110 {offsets = [0, 768], sizes = [8, 256], strides = [1, 1]} : vector<8x1024xf32> to vector<8x256xf32>
    %126 = arith.negf %125 : vector<8x256xf32>
    %127 = math.exp %126 : vector<8x256xf32>
    %cst_38 = arith.constant 1.000000e+00 : f32
    %128 = vector.broadcast %cst_38 : f32 to vector<8x256xf32>
    %129 = arith.addf %128, %127 : vector<8x256xf32>
    %130 = arith.divf %128, %129 : vector<8x256xf32>
    %131 = arith.mulf %122, %103 : vector<8x256xf32>
    %132 = arith.mulf %116, %124 : vector<8x256xf32>
    %133 = arith.addf %131, %132 : vector<8x256xf32>
    %134 = math.tanh %133 : vector<8x256xf32>
    %135 = arith.mulf %130, %134 : vector<8x256xf32>
    %c32 = arith.constant 32 : index
    %c0_39 = arith.constant 0 : index
    %136 = vector.load %arg12[%c32, %c0_39] : memref<64x2048xf32, #tpu.memory_space<vmem>>, vector<8x1024xf32>
    %137 = arith.truncf %135 : vector<8x256xf32> to vector<8x256xbf16>
    %c0_40 = arith.constant 0 : index
    %c0_41 = arith.constant 0 : index
    %138 = vector.load %arg4[%c0_40, %c0_41] : memref<256x1024xbf16, #tpu.memory_space<vmem>>, vector<256x1024xbf16>
    %cst_42 = arith.constant dense<0.000000e+00> : vector<8x1024xf32>
    %139 = tpu.matmul %137, %138, %cst_42 {dimension_numbers = #tpu.dot_dimension_numbers<[1], [0], [0], [1], [0, 0, 1, 1], [], []>} : vector<8x256xbf16>, vector<256x1024xbf16>, vector<8x1024xf32> -> vector<8x1024xf32>
    %140 = arith.addf %136, %139 : vector<8x1024xf32>
    %141 = vector.extract_strided_slice %140 {offsets = [0, 0], sizes = [8, 256], strides = [1, 1]} : vector<8x1024xf32> to vector<8x256xf32>
    %142 = arith.negf %141 : vector<8x256xf32>
    %143 = math.exp %142 : vector<8x256xf32>
    %cst_43 = arith.constant 1.000000e+00 : f32
    %144 = vector.broadcast %cst_43 : f32 to vector<8x256xf32>
    %145 = arith.addf %144, %143 : vector<8x256xf32>
    %146 = arith.divf %144, %145 : vector<8x256xf32>
    %147 = vector.extract_strided_slice %140 {offsets = [0, 256], sizes = [8, 256], strides = [1, 1]} : vector<8x1024xf32> to vector<8x256xf32>
    %148 = arith.negf %147 : vector<8x256xf32>
    %149 = math.exp %148 : vector<8x256xf32>
    %cst_44 = arith.constant 1.000000e+00 : f32
    %150 = vector.broadcast %cst_44 : f32 to vector<8x256xf32>
    %151 = arith.addf %150, %149 : vector<8x256xf32>
    %152 = arith.divf %150, %151 : vector<8x256xf32>
    %153 = vector.extract_strided_slice %140 {offsets = [0, 512], sizes = [8, 256], strides = [1, 1]} : vector<8x1024xf32> to vector<8x256xf32>
    %154 = math.tanh %153 : vector<8x256xf32>
    %155 = vector.extract_strided_slice %140 {offsets = [0, 768], sizes = [8, 256], strides = [1, 1]} : vector<8x1024xf32> to vector<8x256xf32>
    %156 = arith.negf %155 : vector<8x256xf32>
    %157 = math.exp %156 : vector<8x256xf32>
    %cst_45 = arith.constant 1.000000e+00 : f32
    %158 = vector.broadcast %cst_45 : f32 to vector<8x256xf32>
    %159 = arith.addf %158, %157 : vector<8x256xf32>
    %160 = arith.divf %158, %159 : vector<8x256xf32>
    %161 = arith.mulf %152, %133 : vector<8x256xf32>
    %162 = arith.mulf %146, %154 : vector<8x256xf32>
    %163 = arith.addf %161, %162 : vector<8x256xf32>
    %164 = math.tanh %163 : vector<8x256xf32>
    %165 = arith.mulf %160, %164 : vector<8x256xf32>
    %c40 = arith.constant 40 : index
    %c0_46 = arith.constant 0 : index
    %166 = vector.load %arg12[%c40, %c0_46] : memref<64x2048xf32, #tpu.memory_space<vmem>>, vector<8x1024xf32>
    %167 = arith.truncf %165 : vector<8x256xf32> to vector<8x256xbf16>
    %c0_47 = arith.constant 0 : index
    %c0_48 = arith.constant 0 : index
    %168 = vector.load %arg4[%c0_47, %c0_48] : memref<256x1024xbf16, #tpu.memory_space<vmem>>, vector<256x1024xbf16>
    %cst_49 = arith.constant dense<0.000000e+00> : vector<8x1024xf32>
    %169 = tpu.matmul %167, %168, %cst_49 {dimension_numbers = #tpu.dot_dimension_numbers<[1], [0], [0], [1], [0, 0, 1, 1], [], []>} : vector<8x256xbf16>, vector<256x1024xbf16>, vector<8x1024xf32> -> vector<8x1024xf32>
    %170 = arith.addf %166, %169 : vector<8x1024xf32>
    %171 = vector.extract_strided_slice %170 {offsets = [0, 0], sizes = [8, 256], strides = [1, 1]} : vector<8x1024xf32> to vector<8x256xf32>
    %172 = arith.negf %171 : vector<8x256xf32>
    %173 = math.exp %172 : vector<8x256xf32>
    %cst_50 = arith.constant 1.000000e+00 : f32
    %174 = vector.broadcast %cst_50 : f32 to vector<8x256xf32>
    %175 = arith.addf %174, %173 : vector<8x256xf32>
    %176 = arith.divf %174, %175 : vector<8x256xf32>
    %177 = vector.extract_strided_slice %170 {offsets = [0, 256], sizes = [8, 256], strides = [1, 1]} : vector<8x1024xf32> to vector<8x256xf32>
    %178 = arith.negf %177 : vector<8x256xf32>
    %179 = math.exp %178 : vector<8x256xf32>
    %cst_51 = arith.constant 1.000000e+00 : f32
    %180 = vector.broadcast %cst_51 : f32 to vector<8x256xf32>
    %181 = arith.addf %180, %179 : vector<8x256xf32>
    %182 = arith.divf %180, %181 : vector<8x256xf32>
    %183 = vector.extract_strided_slice %170 {offsets = [0, 512], sizes = [8, 256], strides = [1, 1]} : vector<8x1024xf32> to vector<8x256xf32>
    %184 = math.tanh %183 : vector<8x256xf32>
    %185 = vector.extract_strided_slice %170 {offsets = [0, 768], sizes = [8, 256], strides = [1, 1]} : vector<8x1024xf32> to vector<8x256xf32>
    %186 = arith.negf %185 : vector<8x256xf32>
    %187 = math.exp %186 : vector<8x256xf32>
    %cst_52 = arith.constant 1.000000e+00 : f32
    %188 = vector.broadcast %cst_52 : f32 to vector<8x256xf32>
    %189 = arith.addf %188, %187 : vector<8x256xf32>
    %190 = arith.divf %188, %189 : vector<8x256xf32>
    %191 = arith.mulf %182, %163 : vector<8x256xf32>
    %192 = arith.mulf %176, %184 : vector<8x256xf32>
    %193 = arith.addf %191, %192 : vector<8x256xf32>
    %194 = math.tanh %193 : vector<8x256xf32>
    %195 = arith.mulf %190, %194 : vector<8x256xf32>
    %c48 = arith.constant 48 : index
    %c0_53 = arith.constant 0 : index
    %196 = vector.load %arg12[%c48, %c0_53] : memref<64x2048xf32, #tpu.memory_space<vmem>>, vector<8x1024xf32>
    %197 = arith.truncf %195 : vector<8x256xf32> to vector<8x256xbf16>
    %c0_54 = arith.constant 0 : index
    %c0_55 = arith.constant 0 : index
    %198 = vector.load %arg4[%c0_54, %c0_55] : memref<256x1024xbf16, #tpu.memory_space<vmem>>, vector<256x1024xbf16>
    %cst_56 = arith.constant dense<0.000000e+00> : vector<8x1024xf32>
    %199 = tpu.matmul %197, %198, %cst_56 {dimension_numbers = #tpu.dot_dimension_numbers<[1], [0], [0], [1], [0, 0, 1, 1], [], []>} : vector<8x256xbf16>, vector<256x1024xbf16>, vector<8x1024xf32> -> vector<8x1024xf32>
    %200 = arith.addf %196, %199 : vector<8x1024xf32>
    %201 = vector.extract_strided_slice %200 {offsets = [0, 0], sizes = [8, 256], strides = [1, 1]} : vector<8x1024xf32> to vector<8x256xf32>
    %202 = arith.negf %201 : vector<8x256xf32>
    %203 = math.exp %202 : vector<8x256xf32>
    %cst_57 = arith.constant 1.000000e+00 : f32
    %204 = vector.broadcast %cst_57 : f32 to vector<8x256xf32>
    %205 = arith.addf %204, %203 : vector<8x256xf32>
    %206 = arith.divf %204, %205 : vector<8x256xf32>
    %207 = vector.extract_strided_slice %200 {offsets = [0, 256], sizes = [8, 256], strides = [1, 1]} : vector<8x1024xf32> to vector<8x256xf32>
    %208 = arith.negf %207 : vector<8x256xf32>
    %209 = math.exp %208 : vector<8x256xf32>
    %cst_58 = arith.constant 1.000000e+00 : f32
    %210 = vector.broadcast %cst_58 : f32 to vector<8x256xf32>
    %211 = arith.addf %210, %209 : vector<8x256xf32>
    %212 = arith.divf %210, %211 : vector<8x256xf32>
    %213 = vector.extract_strided_slice %200 {offsets = [0, 512], sizes = [8, 256], strides = [1, 1]} : vector<8x1024xf32> to vector<8x256xf32>
    %214 = math.tanh %213 : vector<8x256xf32>
    %215 = vector.extract_strided_slice %200 {offsets = [0, 768], sizes = [8, 256], strides = [1, 1]} : vector<8x1024xf32> to vector<8x256xf32>
    %216 = arith.negf %215 : vector<8x256xf32>
    %217 = math.exp %216 : vector<8x256xf32>
    %cst_59 = arith.constant 1.000000e+00 : f32
    %218 = vector.broadcast %cst_59 : f32 to vector<8x256xf32>
    %219 = arith.addf %218, %217 : vector<8x256xf32>
    %220 = arith.divf %218, %219 : vector<8x256xf32>
    %221 = arith.mulf %212, %193 : vector<8x256xf32>
    %222 = arith.mulf %206, %214 : vector<8x256xf32>
    %223 = arith.addf %221, %222 : vector<8x256xf32>
    %224 = math.tanh %223 : vector<8x256xf32>
    %225 = arith.mulf %220, %224 : vector<8x256xf32>
    %c56 = arith.constant 56 : index
    %c0_60 = arith.constant 0 : index
    %226 = vector.load %arg12[%c56, %c0_60] : memref<64x2048xf32, #tpu.memory_space<vmem>>, vector<8x1024xf32>
    %227 = arith.truncf %225 : vector<8x256xf32> to vector<8x256xbf16>
    %c0_61 = arith.constant 0 : index
    %c0_62 = arith.constant 0 : index
    %228 = vector.load %arg4[%c0_61, %c0_62] : memref<256x1024xbf16, #tpu.memory_space<vmem>>, vector<256x1024xbf16>
    %cst_63 = arith.constant dense<0.000000e+00> : vector<8x1024xf32>
    %229 = tpu.matmul %227, %228, %cst_63 {dimension_numbers = #tpu.dot_dimension_numbers<[1], [0], [0], [1], [0, 0, 1, 1], [], []>} : vector<8x256xbf16>, vector<256x1024xbf16>, vector<8x1024xf32> -> vector<8x1024xf32>
    %230 = arith.addf %226, %229 : vector<8x1024xf32>
    %231 = vector.extract_strided_slice %230 {offsets = [0, 0], sizes = [8, 256], strides = [1, 1]} : vector<8x1024xf32> to vector<8x256xf32>
    %232 = arith.negf %231 : vector<8x256xf32>
    %233 = math.exp %232 : vector<8x256xf32>
    %cst_64 = arith.constant 1.000000e+00 : f32
    %234 = vector.broadcast %cst_64 : f32 to vector<8x256xf32>
    %235 = arith.addf %234, %233 : vector<8x256xf32>
    %236 = arith.divf %234, %235 : vector<8x256xf32>
    %237 = vector.extract_strided_slice %230 {offsets = [0, 256], sizes = [8, 256], strides = [1, 1]} : vector<8x1024xf32> to vector<8x256xf32>
    %238 = arith.negf %237 : vector<8x256xf32>
    %239 = math.exp %238 : vector<8x256xf32>
    %cst_65 = arith.constant 1.000000e+00 : f32
    %240 = vector.broadcast %cst_65 : f32 to vector<8x256xf32>
    %241 = arith.addf %240, %239 : vector<8x256xf32>
    %242 = arith.divf %240, %241 : vector<8x256xf32>
    %243 = vector.extract_strided_slice %230 {offsets = [0, 512], sizes = [8, 256], strides = [1, 1]} : vector<8x1024xf32> to vector<8x256xf32>
    %244 = math.tanh %243 : vector<8x256xf32>
    %245 = vector.extract_strided_slice %230 {offsets = [0, 768], sizes = [8, 256], strides = [1, 1]} : vector<8x1024xf32> to vector<8x256xf32>
    %246 = arith.negf %245 : vector<8x256xf32>
    %247 = math.exp %246 : vector<8x256xf32>
    %cst_66 = arith.constant 1.000000e+00 : f32
    %248 = vector.broadcast %cst_66 : f32 to vector<8x256xf32>
    %249 = arith.addf %248, %247 : vector<8x256xf32>
    %250 = arith.divf %248, %249 : vector<8x256xf32>
    %251 = arith.mulf %242, %223 : vector<8x256xf32>
    %252 = arith.mulf %236, %244 : vector<8x256xf32>
    %253 = arith.addf %251, %252 : vector<8x256xf32>
    %254 = math.tanh %253 : vector<8x256xf32>
    %255 = arith.mulf %250, %254 : vector<8x256xf32>
    %c56_67 = arith.constant 56 : index
    %c1024 = arith.constant 1024 : index
    %256 = vector.load %arg12[%c56_67, %c1024] : memref<64x2048xf32, #tpu.memory_space<vmem>>, vector<8x1024xf32>
    %257 = vector.extract_strided_slice %256 {offsets = [0, 0], sizes = [8, 256], strides = [1, 1]} : vector<8x1024xf32> to vector<8x256xf32>
    %258 = arith.negf %257 : vector<8x256xf32>
    %259 = math.exp %258 : vector<8x256xf32>
    %cst_68 = arith.constant 1.000000e+00 : f32
    %260 = vector.broadcast %cst_68 : f32 to vector<8x256xf32>
    %261 = arith.addf %260, %259 : vector<8x256xf32>
    %262 = arith.divf %260, %261 : vector<8x256xf32>
    %263 = vector.extract_strided_slice %256 {offsets = [0, 512], sizes = [8, 256], strides = [1, 1]} : vector<8x1024xf32> to vector<8x256xf32>
    %264 = math.tanh %263 : vector<8x256xf32>
    %265 = vector.extract_strided_slice %256 {offsets = [0, 768], sizes = [8, 256], strides = [1, 1]} : vector<8x1024xf32> to vector<8x256xf32>
    %266 = arith.negf %265 : vector<8x256xf32>
    %267 = math.exp %266 : vector<8x256xf32>
    %cst_69 = arith.constant 1.000000e+00 : f32
    %268 = vector.broadcast %cst_69 : f32 to vector<8x256xf32>
    %269 = arith.addf %268, %267 : vector<8x256xf32>
    %270 = arith.divf %268, %269 : vector<8x256xf32>
    %271 = arith.mulf %262, %264 : vector<8x256xf32>
    %272 = math.tanh %271 : vector<8x256xf32>
    %273 = arith.mulf %270, %272 : vector<8x256xf32>
    %274 = tpu.concatenate %255, %273 in 1 : vector<8x256xf32>, vector<8x256xf32> -> vector<8x512xf32>
    %275 = arith.truncf %274 : vector<8x512xf32> to vector<8x512xbf16>
    %c0_70 = arith.constant 0 : index
    %c0_71 = arith.constant 0 : index
    %276 = vector.load %arg5[%c0_70, %c0_71] : memref<512x128xbf16, #tpu.memory_space<vmem>>, vector<512x128xbf16>
    %cst_72 = arith.constant dense<0.000000e+00> : vector<8x128xf32>
    %277 = tpu.matmul %275, %276, %cst_72 {dimension_numbers = #tpu.dot_dimension_numbers<[1], [0], [0], [1], [0, 0, 1, 1], [], []>} : vector<8x512xbf16>, vector<512x128xbf16>, vector<8x128xf32> -> vector<8x128xf32>
    %c0_73 = arith.constant 0 : index
    %c0_74 = arith.constant 0 : index
    %278 = vector.load %arg6[%c0_73, %c0_74] : memref<1x128xf32, #tpu.memory_space<vmem>>, vector<1x128xf32>
    %279 = vector.broadcast %278 : vector<1x128xf32> to vector<8x128xf32>
    %280 = arith.addf %277, %279 : vector<8x128xf32>
    %cst_75 = arith.constant 0.000000e+00 : f32
    %281 = vector.broadcast %cst_75 : f32 to vector<8x128xf32>
    %282 = arith.maximumf %280, %281 : vector<8x128xf32>
    %283 = arith.truncf %282 : vector<8x128xf32> to vector<8x128xbf16>
    %c0_76 = arith.constant 0 : index
    %c0_77 = arith.constant 0 : index
    %284 = vector.load %arg7[%c0_76, %c0_77] : memref<128x128xbf16, #tpu.memory_space<vmem>>, vector<128x128xbf16>
    %cst_78 = arith.constant dense<0.000000e+00> : vector<8x128xf32>
    %285 = tpu.matmul %283, %284, %cst_78 {dimension_numbers = #tpu.dot_dimension_numbers<[1], [0], [0], [1], [0, 0, 1, 1], [], []>} : vector<8x128xbf16>, vector<128x128xbf16>, vector<8x128xf32> -> vector<8x128xf32>
    %c0_79 = arith.constant 0 : index
    %c0_80 = arith.constant 0 : index
    %286 = vector.load %arg8[%c0_79, %c0_80] : memref<1x128xf32, #tpu.memory_space<vmem>>, vector<1x128xf32>
    %287 = vector.broadcast %286 : vector<1x128xf32> to vector<8x128xf32>
    %288 = arith.addf %285, %287 : vector<8x128xf32>
    %cst_81 = arith.constant 0.000000e+00 : f32
    %289 = vector.broadcast %cst_81 : f32 to vector<8x128xf32>
    %290 = arith.maximumf %288, %289 : vector<8x128xf32>
    %291 = arith.truncf %290 : vector<8x128xf32> to vector<8x128xbf16>
    %c0_82 = arith.constant 0 : index
    %c0_83 = arith.constant 0 : index
    %292 = vector.load %arg9[%c0_82, %c0_83] : memref<128x128xbf16, #tpu.memory_space<vmem>>, vector<128x128xbf16>
    %cst_84 = arith.constant dense<0.000000e+00> : vector<8x128xf32>
    %293 = tpu.matmul %291, %292, %cst_84 {dimension_numbers = #tpu.dot_dimension_numbers<[1], [0], [0], [1], [0, 0, 1, 1], [], []>} : vector<8x128xbf16>, vector<128x128xbf16>, vector<8x128xf32> -> vector<8x128xf32>
    %c0_85 = arith.constant 0 : index
    %c0_86 = arith.constant 0 : index
    %294 = vector.load %arg10[%c0_85, %c0_86] : memref<1x128xf32, #tpu.memory_space<vmem>>, vector<1x128xf32>
    %295 = vector.broadcast %294 : vector<1x128xf32> to vector<8x128xf32>
    %296 = arith.addf %293, %295 : vector<8x128xf32>
    %c0_87 = arith.constant 0 : index
    %c0_88 = arith.constant 0 : index
    %297 = vector.load %arg11[%c0_87, %c0_88] : memref<8x128xf32, #tpu.memory_space<vmem>>, vector<8x128xf32>
    tpu.vector_store %arg11[%c0_87, %c0_88], %296 {strides = array<i32>} : memref<8x128xf32, #tpu.memory_space<vmem>>, vector<8x128xf32>,
    return
  }
  func.func @transform_0(%arg0: i32) -> (i32, i32, i32) {
    %c0_i32 = arith.constant 0 : i32
    %c0_i32_0 = arith.constant 0 : i32
    %c0_i32_1 = arith.constant 0 : i32
    return %arg0, %c0_i32, %c0_i32_0 : i32, i32, i32
  }
  func.func @transform_1(%arg0: i32) -> (i32, i32) {
    %c0_i32 = arith.constant 0 : i32
    %c0_i32_0 = arith.constant 0 : i32
    %c0_i32_1 = arith.constant 0 : i32
    return %c0_i32, %c0_i32_0 : i32, i32
  }
  func.func @transform_2(%arg0: i32) -> (i32, i32) {
    %c0_i32 = arith.constant 0 : i32
    %c0_i32_0 = arith.constant 0 : i32
    %c0_i32_1 = arith.constant 0 : i32
    return %c0_i32, %c0_i32_0 : i32, i32
  }
  func.func @transform_3(%arg0: i32) -> (i32, i32) {
    %c0_i32 = arith.constant 0 : i32
    %c0_i32_0 = arith.constant 0 : i32
    %c0_i32_1 = arith.constant 0 : i32
    return %c0_i32, %c0_i32_0 : i32, i32
  }
  func.func @transform_4(%arg0: i32) -> (i32, i32) {
    %c0_i32 = arith.constant 0 : i32
    %c0_i32_0 = arith.constant 0 : i32
    %c0_i32_1 = arith.constant 0 : i32
    return %c0_i32, %c0_i32_0 : i32, i32
  }
  func.func @transform_5(%arg0: i32) -> (i32, i32) {
    %c0_i32 = arith.constant 0 : i32
    %c0_i32_0 = arith.constant 0 : i32
    %c0_i32_1 = arith.constant 0 : i32
    return %c0_i32, %c0_i32_0 : i32, i32
  }
  func.func @transform_6(%arg0: i32) -> (i32, i32) {
    %c0_i32 = arith.constant 0 : i32
    %c0_i32_0 = arith.constant 0 : i32
    %c0_i32_1 = arith.constant 0 : i32
    return %c0_i32, %c0_i32_0 : i32, i32
  }
  func.func @transform_7(%arg0: i32) -> (i32, i32) {
    %c0_i32 = arith.constant 0 : i32
    %c0_i32_0 = arith.constant 0 : i32
    %c0_i32_1 = arith.constant 0 : i32
    return %c0_i32, %c0_i32_0 : i32, i32
  }
  func.func @transform_8(%arg0: i32) -> (i32, i32) {
    %c0_i32 = arith.constant 0 : i32
    %c0_i32_0 = arith.constant 0 : i32
    %c0_i32_1 = arith.constant 0 : i32
    return %c0_i32, %c0_i32_0 : i32, i32
  }
  func.func @transform_9(%arg0: i32) -> (i32, i32) {
    %c0_i32 = arith.constant 0 : i32
    %c0_i32_0 = arith.constant 0 : i32
    %c0_i32_1 = arith.constant 0 : i32
    return %c0_i32, %c0_i32_0 : i32, i32
  }
  func.func @transform_10(%arg0: i32) -> (i32, i32) {
    %c0_i32 = arith.constant 0 : i32
    %c0_i32_0 = arith.constant 0 : i32
    return %arg0, %c0_i32 : i32, i32
  }
}

</mosaic_0001>

<llo_original>
// kernel: code_analysis_forward.1
$region0: #{code_analysis_forward.1}
  #allocation0 [shape = 'u32[]', space=smem, size = 0x4, offset = 0x4, fixed_abs, tag = 'smem constant byte address 0x4 - core index']
  #allocation1 [shape = 'u32[72,128]{1,0:T(1,128)}', space=vmem, size = 0x9000, scoped, tag = 'internal scratch']
  #allocation2 [shape = 'f32[64,2048]{1,0:T(8,128)}', space=vmem, size = 0x80000, scoped, tag = 'scratch operand']
  %s0 = inlined_call_operand.vmem [shape: s32[1,64,1], index: 0, kind: input, shape index: {}]
  %s1 = inlined_call_operand.hbm [shape: bf16[128,2048], index: 1, kind: input, shape index: {}]
  %s2 = inlined_call_operand.vmem [shape: f32[1,2048], index: 2, kind: input, shape index: {}]
  %s3 = inlined_call_operand.hbm [shape: bf16[256,1024], index: 3, kind: input, shape index: {}]
  %s4 = inlined_call_operand.hbm [shape: bf16[512,128], index: 4, kind: input, shape index: {}]
  %s5 = inlined_call_operand.vmem [shape: f32[1,128], index: 5, kind: input, shape index: {}]
  %s6 = inlined_call_operand.vmem [shape: bf16[128,128], index: 6, kind: input, shape index: {}]
  %s7 = inlined_call_operand.vmem [shape: f32[1,128], index: 7, kind: input, shape index: {}]
  %s8 = inlined_call_operand.hbm [shape: bf16[128,128], index: 8, kind: input, shape index: {}]
  %s9 = inlined_call_operand.vmem [shape: f32[1,128], index: 9, kind: input, shape index: {}]
  %s10 = inlined_call_operand.vmem [shape: f32[8,128], index: 10, kind: output, shape index: {}]
  %s11 = sld [smem:[#allocation0]]
  $region66: #{code_analysis_forward.1} parent=0
    _
  %s13 = ssub.s32 1, %s11
  %s14 = scalar_select 0, %s13, %s11
  $region1: #{code_analysis_forward.1} parent=0
    #allocation3 [shape = 'u8[524288]{0}', space=vmem, size = 0x80000, scoped, tag = 'input window, operand 1, single buffered']
    #allocation4 [shape = 's32[1]{0}', space=sflag, size = 0x4, scoped, tag = 'scoped memory for code_analysis_forward.1']
    #allocation5 [shape = 'u8[524288]{0}', space=vmem, size = 0x80000, scoped, tag = 'input window, operand 3, single buffered']
    #allocation6 [shape = 's32[1]{0}', space=sflag, size = 0x4, scoped, tag = 'scoped memory for code_analysis_forward.1']
    #allocation7 [shape = 'u8[131072]{0}', space=vmem, size = 0x20000, scoped, tag = 'input window, operand 4, single buffered']
    #allocation8 [shape = 'u8[32768]{0}', space=vmem, size = 0x8000, scoped, tag = 'input window, operand 8, single buffered']
    #allocation9 [shape = 's32[1]{0}', space=sflag, size = 0x4, scoped, tag = 'scoped memory for code_analysis_forward.1']
    %15 = vsyncpa [#allocation4], 0
    %16 = vsyncpa [#allocation6], 0
    %17 = vsyncpa [#allocation9], 0
    // Predicated region
    $region2: #{code_analysis_forward.1} parent=1 // pred_check
      _
    $region3: #{code_analysis_forward.1} parent=1 // pred_check_branch
      %19 = sbr.rel (0) target = $region5
    $region4: #{code_analysis_forward.1} parent=1 // pred_region
      _
    $region5: #{code_analysis_forward.1} parent=1 // pred_fallthru
      _
    // Predicated region
    $region6: #{code_analysis_forward.1} parent=1 // pred_check
      _
    $region7: #{code_analysis_forward.1} parent=1 // pred_check_branch
      %21 = sbr.rel (0) target = $region9
    $region8: #{code_analysis_forward.1} parent=1 // pred_region
      %23 = vsyncadd [#allocation4], 0
      %s24 = sshll.u32 %s1, 4
      %s25 = int_to_ptr.hbm [resolvable:$true] %s24
      %s26 = sshll.u32 [#allocation3], 4
      %s27 = int_to_ptr.vmem [resolvable:$true] %s26
      %32 = dma.hbm_to_vmem [thread:$0]  %s25, 16384, %s27, [#allocation4], 1024, 1024, 64
    $region9: #{code_analysis_forward.1} parent=1 // pred_fallthru
      _
    // Predicated region
    $region10: #{code_analysis_forward.1} parent=1 // pred_check
      _
    $region11: #{code_analysis_forward.1} parent=1 // pred_check_branch
      %34 = sbr.rel (0) target = $region13
    $region12: #{code_analysis_forward.1} parent=1 // pred_region
      _
    $region13: #{code_analysis_forward.1} parent=1 // pred_fallthru
      _
    // Predicated region
    $region14: #{code_analysis_forward.1} parent=1 // pred_check
      _
    $region15: #{code_analysis_forward.1} parent=1 // pred_check_branch
      %36 = sbr.rel (0) target = $region17
    $region16: #{code_analysis_forward.1} parent=1 // pred_region
      %38 = vsyncadd [#allocation6], 0
      %s39 = sshll.u32 %s3, 4
      %s40 = int_to_ptr.hbm [resolvable:$true] %s39
      %s41 = sshll.u32 [#allocation5], 4
      %s42 = int_to_ptr.vmem [resolvable:$true] %s41
      %47 = dma.hbm_to_vmem [thread:$0]  %s40, 16384, %s42, [#allocation6], 512, 512, 32
    $region17: #{code_analysis_forward.1} parent=1 // pred_fallthru
      _
    // Predicated region
    $region18: #{code_analysis_forward.1} parent=1 // pred_check
      _
    $region19: #{code_analysis_forward.1} parent=1 // pred_check_branch
      %49 = sbr.rel (0) target = $region21
    $region20: #{code_analysis_forward.1} parent=1 // pred_region
      %51 = vsyncadd [#allocation6], 0
      %s52 = sshll.u32 %s4, 4
      %s53 = int_to_ptr.hbm [resolvable:$true] %s52
      %s54 = sshll.u32 [#allocation7], 4
      %s55 = int_to_ptr.vmem [resolvable:$true] %s54
      %60 = dma.hbm_to_vmem [thread:$0]  %s53, 4096, %s55, [#allocation6], 64, 64, 4
    $region21: #{code_analysis_forward.1} parent=1 // pred_fallthru
      _
    // Predicated region
    $region22: #{code_analysis_forward.1} parent=1 // pred_check
      _
    $region23: #{code_analysis_forward.1} parent=1 // pred_check_branch
      %62 = sbr.rel (0) target = $region25
    $region24: #{code_analysis_forward.1} parent=1 // pred_region
      _
    $region25: #{code_analysis_forward.1} parent=1 // pred_fallthru
      _
    // Predicated region
    $region26: #{code_analysis_forward.1} parent=1 // pred_check
      _
    $region27: #{code_analysis_forward.1} parent=1 // pred_check_branch
      %64 = sbr.rel (0) target = $region29
    $region28: #{code_analysis_forward.1} parent=1 // pred_region
      _
    $region29: #{code_analysis_forward.1} parent=1 // pred_fallthru
      _
    // Predicated region
    $region30: #{code_analysis_forward.1} parent=1 // pred_check
      _
    $region31: #{code_analysis_forward.1} parent=1 // pred_check_branch
      %66 = sbr.rel (0) target = $region33
    $region32: #{code_analysis_forward.1} parent=1 // pred_region
      _
    $region33: #{code_analysis_forward.1} parent=1 // pred_fallthru
      _
    // Predicated region
    $region34: #{code_analysis_forward.1} parent=1 // pred_check
      _
    $region35: #{code_analysis_forward.1} parent=1 // pred_check_branch
      %68 = sbr.rel (0) target = $region37
    $region36: #{code_analysis_forward.1} parent=1 // pred_region
      %70 = vsyncadd [#allocation9], 0
      %s71 = sshll.u32 %s8, 4
      %s72 = int_to_ptr.hbm [resolvable:$true] %s71
      %s73 = sshll.u32 [#allocation8], 4
      %s74 = int_to_ptr.vmem [resolvable:$true] %s73
      %79 = dma.hbm_to_vmem [thread:$0]  %s72, 1024, %s74, [#allocation9], 64, 64, 4
    $region37: #{code_analysis_forward.1} parent=1 // pred_fallthru
      _
    // Predicated region
    $region38: #{code_analysis_forward.1} parent=1 // pred_check
      _
    $region39: #{code_analysis_forward.1} parent=1 // pred_check_branch
      %81 = sbr.rel (0) target = $region41
    $region40: #{code_analysis_forward.1} parent=1 // pred_region
      _
    $region41: #{code_analysis_forward.1} parent=1 // pred_fallthru
      _
    // Predicated region
    $region42: #{code_analysis_forward.1} parent=1 // pred_check
      _
    $region43: #{code_analysis_forward.1} parent=1 // pred_check_branch
      %83 = sbr.rel (0) target = $region45
    $region44: #{code_analysis_forward.1} parent=1 // pred_region
      %85 = dma.done [#allocation4], 16384
    $region45: #{code_analysis_forward.1} parent=1 // pred_fallthru
      _
    // Predicated region
    $region46: #{code_analysis_forward.1} parent=1 // pred_check
      _
    $region47: #{code_analysis_forward.1} parent=1 // pred_check_branch
      %87 = sbr.rel (0) target = $region49
    $region48: #{code_analysis_forward.1} parent=1 // pred_region
      %89 = dma.done [#allocation6], 16384
    $region49: #{code_analysis_forward.1} parent=1 // pred_fallthru
      _
    // Predicated region
    $region50: #{code_analysis_forward.1} parent=1 // pred_check
      _
    $region51: #{code_analysis_forward.1} parent=1 // pred_check_branch
      %91 = sbr.rel (0) target = $region53
    $region52: #{code_analysis_forward.1} parent=1 // pred_region
      %93 = dma.done [#allocation6], 4096
    $region53: #{code_analysis_forward.1} parent=1 // pred_fallthru
      _
    // Predicated region
    $region54: #{code_analysis_forward.1} parent=1 // pred_check
      _
    $region55: #{code_analysis_forward.1} parent=1 // pred_check_branch
      %95 = sbr.rel (0) target = $region57
    $region56: #{code_analysis_forward.1} parent=1 // pred_region
      %97 = dma.done [#allocation9], 1024
    $region57: #{code_analysis_forward.1} parent=1 // pred_fallthru
      _
    %v99 = vld [vmem:[%s0] sm:$0xff]
    %v100 = vld [vmem:[%s0 + $0x8] sm:$0xff]
    %v101 = vld [vmem:[%s0 + $0x10] sm:$0xff]
    %v102 = vld [vmem:[%s0 + $0x18] sm:$0xff]
    %v103 = vld [vmem:[%s0 + $0x20] sm:$0xff]
    %v104 = vld [vmem:[%s0 + $0x28] sm:$0xff]
    %v105 = vld [vmem:[%s0 + $0x30] sm:$0xff]
    %v106 = vld [vmem:[%s0 + $0x38] sm:$0xff]
    %v107 = vlaneseq
    %v108 = vand.u32 %v107, 127
    %109 = vset.pattern.permute.xlu0 0
    %110 = vperm.xlu0 %109, %v99
    %v111 = vpop.permute.xlu0 %110
    %112 = vset.pattern.permute.xlu0 0
    %113 = vperm.xlu0 %112, %v100
    %v114 = vpop.permute.xlu0 %113
    %115 = vset.pattern.permute.xlu0 0
    %116 = vperm.xlu0 %115, %v101
    %v117 = vpop.permute.xlu0 %116
    %118 = vset.pattern.permute.xlu0 0
    %119 = vperm.xlu0 %118, %v102
    %v120 = vpop.permute.xlu0 %119
    %121 = vset.pattern.permute.xlu0 0
    %122 = vperm.xlu0 %121, %v103
    %v123 = vpop.permute.xlu0 %122
    %124 = vset.pattern.permute.xlu0 0
    %125 = vperm.xlu0 %124, %v104
    %v126 = vpop.permute.xlu0 %125
    %127 = vset.pattern.permute.xlu0 0
    %128 = vperm.xlu0 %127, %v105
    %v129 = vpop.permute.xlu0 %128
    %130 = vset.pattern.permute.xlu0 0
    %131 = vperm.xlu0 %130, %v106
    %v132 = vpop.permute.xlu0 %131
    %vm133 = vcmp.eq.s32.totalorder %v108, %v111
    %vm134 = vcmp.eq.s32.totalorder %v108, %v114
    %vm135 = vcmp.eq.s32.totalorder %v108, %v117
    %vm136 = vcmp.eq.s32.totalorder %v108, %v120
    %vm137 = vcmp.eq.s32.totalorder %v108, %v123
    %vm138 = vcmp.eq.s32.totalorder %v108, %v126
    %vm139 = vcmp.eq.s32.totalorder %v108, %v129
    %vm140 = vcmp.eq.s32.totalorder %v108, %v132
    %v141 = vsel %vm133, 1, 0
    %v142 = vsel %vm134, 1, 0
    %v143 = vsel %vm135, 1, 0
    %v144 = vsel %vm136, 1, 0
    %v145 = vsel %vm137, 1, 0
    %v146 = vsel %vm138, 1, 0
    %v147 = vsel %vm139, 1, 0
    %v148 = vsel %vm140, 1, 0
    %v149 = vcvt.s32.f32 %v141
    %v150 = vcvt.s32.f32 %v142
    %v151 = vcvt.s32.f32 %v143
    %v152 = vcvt.s32.f32 %v144
    %v153 = vcvt.s32.f32 %v145
    %v154 = vcvt.s32.f32 %v146
    %v155 = vcvt.s32.f32 %v147
    %v156 = vcvt.s32.f32 %v148
    %v157 = vpack.c.bf16 %v150, %v149
    %v158 = vpack.c.bf16 %v152, %v151
    %v159 = vpack.c.bf16 %v154, %v153
    %v160 = vpack.c.bf16 %v156, %v155
    %v161 = vld [vmem:[#allocation3] sm:$0xff]
    %v162 = vld [vmem:[#allocation3 + $0x8] sm:$0xff]
    %v163 = vld [vmem:[#allocation3 + $0x10] sm:$0xff]
    %v164 = vld [vmem:[#allocation3 + $0x18] sm:$0xff]
    %v165 = vld [vmem:[#allocation3 + $0x20] sm:$0xff]
    %v166 = vld [vmem:[#allocation3 + $0x28] sm:$0xff]
    %v167 = vld [vmem:[#allocation3 + $0x30] sm:$0xff]
    %v168 = vld [vmem:[#allocation3 + $0x38] sm:$0xff]
    %v169 = vld [vmem:[#allocation3 + $0x40] sm:$0xff]
    %v170 = vld [vmem:[#allocation3 + $0x48] sm:$0xff]
    %v171 = vld [vmem:[#allocation3 + $0x50] sm:$0xff]
    %v172 = vld [vmem:[#allocation3 + $0x58] sm:$0xff]
    %v173 = vld [vmem:[#allocation3 + $0x60] sm:$0xff]
    %v174 = vld [vmem:[#allocation3 + $0x68] sm:$0xff]
    %v175 = vld [vmem:[#allocation3 + $0x70] sm:$0xff]
    %v176 = vld [vmem:[#allocation3 + $0x78] sm:$0xff]
    %v177 = vld [vmem:[#allocation3 + $0x80] sm:$0xff]
    %v178 = vld [vmem:[#allocation3 + $0x88] sm:$0xff]
    %v179 = vld [vmem:[#allocation3 + $0x90] sm:$0xff]
    %v180 = vld [vmem:[#allocation3 + $0x98] sm:$0xff]
    %v181 = vld [vmem:[#allocation3 + $0xa0] sm:$0xff]
    %v182 = vld [vmem:[#allocation3 + $0xa8] sm:$0xff]
    %v183 = vld [vmem:[#allocation3 + $0xb0] sm:$0xff]
    %v184 = vld [vmem:[#allocation3 + $0xb8] sm:$0xff]
    %v185 = vld [vmem:[#allocation3 + $0xc0] sm:$0xff]
    %v186 = vld [vmem:[#allocation3 + $0xc8] sm:$0xff]
    %v187 = vld [vmem:[#allocation3 + $0xd0] sm:$0xff]
    %v188 = vld [vmem:[#allocation3 + $0xd8] sm:$0xff]
    %v189 = vld [vmem:[#allocation3 + $0xe0] sm:$0xff]
    %v190 = vld [vmem:[#allocation3 + $0xe8] sm:$0xff]
    %v191 = vld [vmem:[#allocation3 + $0xf0] sm:$0xff]
    %v192 = vld [vmem:[#allocation3 + $0xf8] sm:$0xff]
    %v193 = vld [vmem:[#allocation3 + $0x100] sm:$0xff]
    %v194 = vld [vmem:[#allocation3 + $0x108] sm:$0xff]
    %v195 = vld [vmem:[#allocation3 + $0x110] sm:$0xff]
    %v196 = vld [vmem:[#allocation3 + $0x118] sm:$0xff]
    %v197 = vld [vmem:[#allocation3 + $0x120] sm:$0xff]
    %v198 = vld [vmem:[#allocation3 + $0x128] sm:$0xff]
    %v199 = vld [vmem:[#allocation3 + $0x130] sm:$0xff]
    %v200 = vld [vmem:[#allocation3 + $0x138] sm:$0xff]
    %v201 = vld [vmem:[#allocation3 + $0x140] sm:$0xff]
    %v202 = vld [vmem:[#allocation3 + $0x148] sm:$0xff]
    %v203 = vld [vmem:[#allocation3 + $0x150] sm:$0xff]
    %v204 = vld [vmem:[#allocation3 + $0x158] sm:$0xff]
    %v205 = vld [vmem:[#allocation3 + $0x160] sm:$0xff]
    %v206 = vld [vmem:[#allocation3 + $0x168] sm:$0xff]
    %v207 = vld [vmem:[#allocation3 + $0x170] sm:$0xff]
    %v208 = vld [vmem:[#allocation3 + $0x178] sm:$0xff]
    %v209 = vld [vmem:[#allocation3 + $0x180] sm:$0xff]
    %v210 = vld [vmem:[#allocation3 + $0x188] sm:$0xff]
    %v211 = vld [vmem:[#allocation3 + $0x190] sm:$0xff]
    %v212 = vld [vmem:[#allocation3 + $0x198] sm:$0xff]
    %v213 = vld [vmem:[#allocation3 + $0x1a0] sm:$0xff]
    %v214 = vld [vmem:[#allocation3 + $0x1a8] sm:$0xff]
    %v215 = vld [vmem:[#allocation3 + $0x1b0] sm:$0xff]
    %v216 = vld [vmem:[#allocation3 + $0x1b8] sm:$0xff]
    %v217 = vld [vmem:[#allocation3 + $0x1c0] sm:$0xff]
    %v218 = vld [vmem:[#allocation3 + $0x1c8] sm:$0xff]
    %v219 = vld [vmem:[#allocation3 + $0x1d0] sm:$0xff]
    %v220 = vld [vmem:[#allocation3 + $0x1d8] sm:$0xff]
    %v221 = vld [vmem:[#allocation3 + $0x1e0] sm:$0xff]
    %v222 = vld [vmem:[#allocation3 + $0x1e8] sm:$0xff]
    %v223 = vld [vmem:[#allocation3 + $0x1f0] sm:$0xff]
    %v224 = vld [vmem:[#allocation3 + $0x1f8] sm:$0xff]
    %v225 = vld [vmem:[#allocation3 + $0x200] sm:$0xff]
    %v226 = vld [vmem:[#allocation3 + $0x208] sm:$0xff]
    %v227 = vld [vmem:[#allocation3 + $0x210] sm:$0xff]
    %v228 = vld [vmem:[#allocation3 + $0x218] sm:$0xff]
    %v229 = vld [vmem:[#allocation3 + $0x220] sm:$0xff]
    %v230 = vld [vmem:[#allocation3 + $0x228] sm:$0xff]
    %v231 = vld [vmem:[#allocation3 + $0x230] sm:$0xff]
    %v232 = vld [vmem:[#allocation3 + $0x238] sm:$0xff]
    %v233 = vld [vmem:[#allocation3 + $0x240] sm:$0xff]
    %v234 = vld [vmem:[#allocation3 + $0x248] sm:$0xff]
    %v235 = vld [vmem:[#allocation3 + $0x250] sm:$0xff]
    %v236 = vld [vmem:[#allocation3 + $0x258] sm:$0xff]
    %v237 = vld [vmem:[#allocation3 + $0x260] sm:$0xff]
    %v238 = vld [vmem:[#allocation3 + $0x268] sm:$0xff]
    %v239 = vld [vmem:[#allocation3 + $0x270] sm:$0xff]
    %v240 = vld [vmem:[#allocation3 + $0x278] sm:$0xff]
    %v241 = vld [vmem:[#allocation3 + $0x280] sm:$0xff]
    %v242 = vld [vmem:[#allocation3 + $0x288] sm:$0xff]
    %v243 = vld [vmem:[#allocation3 + $0x290] sm:$0xff]
    %v244 = vld [vmem:[#allocation3 + $0x298] sm:$0xff]
    %v245 = vld [vmem:[#allocation3 + $0x2a0] sm:$0xff]
    %v246 = vld [vmem:[#allocation3 + $0x2a8] sm:$0xff]
    %v247 = vld [vmem:[#allocation3 + $0x2b0] sm:$0xff]
    %v248 = vld [vmem:[#allocation3 + $0x2b8] sm:$0xff]
    %v249 = vld [vmem:[#allocation3 + $0x2c0] sm:$0xff]
    %v250 = vld [vmem:[#allocation3 + $0x2c8] sm:$0xff]
    %v251 = vld [vmem:[#allocation3 + $0x2d0] sm:$0xff]
    %v252 = vld [vmem:[#allocation3 + $0x2d8] sm:$0xff]
    %v253 = vld [vmem:[#allocation3 + $0x2e0] sm:$0xff]
    %v254 = vld [vmem:[#allocation3 + $0x2e8] sm:$0xff]
    %v255 = vld [vmem:[#allocation3 + $0x2f0] sm:$0xff]
    %v256 = vld [vmem:[#allocation3 + $0x2f8] sm:$0xff]
    %v257 = vld [vmem:[#allocation3 + $0x300] sm:$0xff]
    %v258 = vld [vmem:[#allocation3 + $0x308] sm:$0xff]
    %v259 = vld [vmem:[#allocation3 + $0x310] sm:$0xff]
    %v260 = vld [vmem:[#allocation3 + $0x318] sm:$0xff]
    %v261 = vld [vmem:[#allocation3 + $0x320] sm:$0xff]
    %v262 = vld [vmem:[#allocation3 + $0x328] sm:$0xff]
    %v263 = vld [vmem:[#allocation3 + $0x330] sm:$0xff]
    %v264 = vld [vmem:[#allocation3 + $0x338] sm:$0xff]
    %v265 = vld [vmem:[#allocation3 + $0x340] sm:$0xff]
    %v266 = vld [vmem:[#allocation3 + $0x348] sm:$0xff]
    %v267 = vld [vmem:[#allocation3 + $0x350] sm:$0xff]
    %v268 = vld [vmem:[#allocation3 + $0x358] sm:$0xff]
    %v269 = vld [vmem:[#allocation3 + $0x360] sm:$0xff]
    %v270 = vld [vmem:[#allocation3 + $0x368] sm:$0xff]
    %v271 = vld [vmem:[#allocation3 + $0x370] sm:$0xff]
    %v272 = vld [vmem:[#allocation3 + $0x378] sm:$0xff]
    %v273 = vld [vmem:[#allocation3 + $0x380] sm:$0xff]
    %v274 = vld [vmem:[#allocation3 + $0x388] sm:$0xff]
    %v275 = vld [vmem:[#allocation3 + $0x390] sm:$0xff]
    %v276 = vld [vmem:[#allocation3 + $0x398] sm:$0xff]
    %v277 = vld [vmem:[#allocation3 + $0x3a0] sm:$0xff]
    %v278 = vld [vmem:[#allocation3 + $0x3a8] sm:$0xff]
    %v279 = vld [vmem:[#allocation3 + $0x3b0] sm:$0xff]
    %v280 = vld [vmem:[#allocation3 + $0x3b8] sm:$0xff]
    %v281 = vld [vmem:[#allocation3 + $0x3c0] sm:$0xff]
    %v282 = vld [vmem:[#allocation3 + $0x3c8] sm:$0xff]
    %v283 = vld [vmem:[#allocation3 + $0x3d0] sm:$0xff]
    %v284 = vld [vmem:[#allocation3 + $0x3d8] sm:$0xff]
    %v285 = vld [vmem:[#allocation3 + $0x3e0] sm:$0xff]
    %v286 = vld [vmem:[#allocation3 + $0x3e8] sm:$0xff]
    %v287 = vld [vmem:[#allocation3 + $0x3f0] sm:$0xff]
    %v288 = vld [vmem:[#allocation3 + $0x3f8] sm:$0xff]
    %v289 = vld [vmem:[%s2] sm:$0xff]
    %v290 = vld [vmem:[%s2 + $0x8] sm:$0xff]
    %v293 = vperm.slane %v289, 0
    %v294 = vperm.slane %v289, 1
    %v295 = vperm.slane %v289, 2
    %v296 = vperm.slane %v289, 3
    %v297 = vperm.slane %v289, 4
    %v298 = vperm.slane %v289, 5
    %v299 = vperm.slane %v289, 6
    %v300 = vperm.slane %v289, 7
    %v301 = vperm.slane %v290, 0
    %v302 = vperm.slane %v290, 1
    %v303 = vperm.slane %v290, 2
    %v304 = vperm.slane %v290, 3
    %v305 = vperm.slane %v290, 4
    %v306 = vperm.slane %v290, 5
    %v307 = vperm.slane %v290, 6
    %v308 = vperm.slane %v290, 7
    %v453 = vunpack.c.l.b16 %v161
    %v454 = vunpack.c.h.b16 %v161
    %v455 = vunpack.c.l.b16 %v162
    %v456 = vunpack.c.h.b16 %v162
    %v457 = vunpack.c.l.b16 %v163
    %v458 = vunpack.c.h.b16 %v163
    %v459 = vunpack.c.l.b16 %v164
    %v460 = vunpack.c.h.b16 %v164
    %v461 = vunpack.c.l.b16 %v165
    %v462 = vunpack.c.h.b16 %v165
    %v463 = vunpack.c.l.b16 %v166
    %v464 = vunpack.c.h.b16 %v166
    %v465 = vunpack.c.l.b16 %v167
    %v466 = vunpack.c.h.b16 %v167
    %v467 = vunpack.c.l.b16 %v168
    %v468 = vunpack.c.h.b16 %v168
    %v469 = vunpack.c.l.b16 %v169
    %v470 = vunpack.c.h.b16 %v169
    %v471 = vunpack.c.l.b16 %v170
    %v472 = vunpack.c.h.b16 %v170
    %v473 = vunpack.c.l.b16 %v171
    %v474 = vunpack.c.h.b16 %v171
    %v475 = vunpack.c.l.b16 %v172
    %v476 = vunpack.c.h.b16 %v172
    %v477 = vunpack.c.l.b16 %v173
    %v478 = vunpack.c.h.b16 %v173
    %v479 = vunpack.c.l.b16 %v174
    %v480 = vunpack.c.h.b16 %v174
    %v481 = vunpack.c.l.b16 %v175
    %v482 = vunpack.c.h.b16 %v175
    %v483 = vunpack.c.l.b16 %v176
    %v484 = vunpack.c.h.b16 %v176
    %v485 = vunpack.c.l.b16 %v177
    %v486 = vunpack.c.h.b16 %v177
    %v487 = vunpack.c.l.b16 %v178
    %v488 = vunpack.c.h.b16 %v178
    %v489 = vunpack.c.l.b16 %v179
    %v490 = vunpack.c.h.b16 %v179
    %v491 = vunpack.c.l.b16 %v180
    %v492 = vunpack.c.h.b16 %v180
    %v493 = vunpack.c.l.b16 %v181
    %v494 = vunpack.c.h.b16 %v181
    %v495 = vunpack.c.l.b16 %v182
    %v496 = vunpack.c.h.b16 %v182
    %v497 = vunpack.c.l.b16 %v183
    %v498 = vunpack.c.h.b16 %v183
    %v499 = vunpack.c.l.b16 %v184
    %v500 = vunpack.c.h.b16 %v184
    %v501 = vunpack.c.l.b16 %v185
    %v502 = vunpack.c.h.b16 %v185
    %v503 = vunpack.c.l.b16 %v186
    %v504 = vunpack.c.h.b16 %v186
    %v505 = vunpack.c.l.b16 %v187
    %v506 = vunpack.c.h.b16 %v187
    %v507 = vunpack.c.l.b16 %v188
    %v508 = vunpack.c.h.b16 %v188
    %v509 = vunpack.c.l.b16 %v189
    %v510 = vunpack.c.h.b16 %v189
    %v511 = vunpack.c.l.b16 %v190
    %v512 = vunpack.c.h.b16 %v190
    %v513 = vunpack.c.l.b16 %v191
    %v514 = vunpack.c.h.b16 %v191
    %v515 = vunpack.c.l.b16 %v192
    %v516 = vunpack.c.h.b16 %v192
    %v517 = vunpack.c.l.b16 %v193
    %v518 = vunpack.c.h.b16 %v193
    %v519 = vunpack.c.l.b16 %v194
    %v520 = vunpack.c.h.b16 %v194
    %v521 = vunpack.c.l.b16 %v195
    %v522 = vunpack.c.h.b16 %v195
    %v523 = vunpack.c.l.b16 %v196
    %v524 = vunpack.c.h.b16 %v196
    %v525 = vunpack.c.l.b16 %v197
    %v526 = vunpack.c.h.b16 %v197
    %v527 = vunpack.c.l.b16 %v198
    %v528 = vunpack.c.h.b16 %v198
    %v529 = vunpack.c.l.b16 %v199
    %v530 = vunpack.c.h.b16 %v199
    %v531 = vunpack.c.l.b16 %v200
    %v532 = vunpack.c.h.b16 %v200
    %v533 = vunpack.c.l.b16 %v201
    %v534 = vunpack.c.h.b16 %v201
    %v535 = vunpack.c.l.b16 %v202
    %v536 = vunpack.c.h.b16 %v202
    %v537 = vunpack.c.l.b16 %v203
    %v538 = vunpack.c.h.b16 %v203
    %v539 = vunpack.c.l.b16 %v204
    %v540 = vunpack.c.h.b16 %v204
    %v541 = vunpack.c.l.b16 %v205
    %v542 = vunpack.c.h.b16 %v205
    %v543 = vunpack.c.l.b16 %v206
    %v544 = vunpack.c.h.b16 %v206
    %v545 = vunpack.c.l.b16 %v207
    %v546 = vunpack.c.h.b16 %v207
    %v547 = vunpack.c.l.b16 %v208
    %v548 = vunpack.c.h.b16 %v208
    %v549 = vunpack.c.l.b16 %v209
    %v550 = vunpack.c.h.b16 %v209
    %v551 = vunpack.c.l.b16 %v210
    %v552 = vunpack.c.h.b16 %v210
    %v553 = vunpack.c.l.b16 %v211
    %v554 = vunpack.c.h.b16 %v211
    %v555 = vunpack.c.l.b16 %v212
    %v556 = vunpack.c.h.b16 %v212
    %v557 = vunpack.c.l.b16 %v213
    %v558 = vunpack.c.h.b16 %v213
    %v559 = vunpack.c.l.b16 %v214
    %v560 = vunpack.c.h.b16 %v214
    %v561 = vunpack.c.l.b16 %v215
    %v562 = vunpack.c.h.b16 %v215
    %v563 = vunpack.c.l.b16 %v216
    %v564 = vunpack.c.h.b16 %v216
    %v565 = vunpack.c.l.b16 %v217
    %v566 = vunpack.c.h.b16 %v217
    %v567 = vunpack.c.l.b16 %v218
    %v568 = vunpack.c.h.b16 %v218
    %v569 = vunpack.c.l.b16 %v219
    %v570 = vunpack.c.h.b16 %v219
    %v571 = vunpack.c.l.b16 %v220
    %v572 = vunpack.c.h.b16 %v220
    %v573 = vunpack.c.l.b16 %v221
    %v574 = vunpack.c.h.b16 %v221
    %v575 = vunpack.c.l.b16 %v222
    %v576 = vunpack.c.h.b16 %v222
    %v577 = vunpack.c.l.b16 %v223
    %v578 = vunpack.c.h.b16 %v223
    %v579 = vunpack.c.l.b16 %v224
    %v580 = vunpack.c.h.b16 %v224
    %v581 = vunpack.c.l.b16 %v225
    %v582 = vunpack.c.h.b16 %v225
    %v583 = vunpack.c.l.b16 %v226
    %v584 = vunpack.c.h.b16 %v226
    %v585 = vunpack.c.l.b16 %v227
    %v586 = vunpack.c.h.b16 %v227
    %v587 = vunpack.c.l.b16 %v228
    %v588 = vunpack.c.h.b16 %v228
    %v589 = vunpack.c.l.b16 %v229
    %v590 = vunpack.c.h.b16 %v229
    %v591 = vunpack.c.l.b16 %v230
    %v592 = vunpack.c.h.b16 %v230
    %v593 = vunpack.c.l.b16 %v231
    %v594 = vunpack.c.h.b16 %v231
    %v595 = vunpack.c.l.b16 %v232
    %v596 = vunpack.c.h.b16 %v232
    %v597 = vunpack.c.l.b16 %v233
    %v598 = vunpack.c.h.b16 %v233
    %v599 = vunpack.c.l.b16 %v234
    %v600 = vunpack.c.h.b16 %v234
    %v601 = vunpack.c.l.b16 %v235
    %v602 = vunpack.c.h.b16 %v235
    %v603 = vunpack.c.l.b16 %v236
    %v604 = vunpack.c.h.b16 %v236
    %v605 = vunpack.c.l.b16 %v237
    %v606 = vunpack.c.h.b16 %v237
    %v607 = vunpack.c.l.b16 %v238
    %v608 = vunpack.c.h.b16 %v238
    %v609 = vunpack.c.l.b16 %v239
    %v610 = vunpack.c.h.b16 %v239
    %v611 = vunpack.c.l.b16 %v240
    %v612 = vunpack.c.h.b16 %v240
    %v613 = vunpack.c.l.b16 %v241
    %v614 = vunpack.c.h.b16 %v241
    %v615 = vunpack.c.l.b16 %v242
    %v616 = vunpack.c.h.b16 %v242
    %v617 = vunpack.c.l.b16 %v243
    %v618 = vunpack.c.h.b16 %v243
    %v619 = vunpack.c.l.b16 %v244
    %v620 = vunpack.c.h.b16 %v244
    %v621 = vunpack.c.l.b16 %v245
    %v622 = vunpack.c.h.b16 %v245
    %v623 = vunpack.c.l.b16 %v246
    %v624 = vunpack.c.h.b16 %v246
    %v625 = vunpack.c.l.b16 %v247
    %v626 = vunpack.c.h.b16 %v247
    %v627 = vunpack.c.l.b16 %v248
    %v628 = vunpack.c.h.b16 %v248
    %v629 = vunpack.c.l.b16 %v249
    %v630 = vunpack.c.h.b16 %v249
    %v631 = vunpack.c.l.b16 %v250
    %v632 = vunpack.c.h.b16 %v250
    %v633 = vunpack.c.l.b16 %v251
    %v634 = vunpack.c.h.b16 %v251
    %v635 = vunpack.c.l.b16 %v252
    %v636 = vunpack.c.h.b16 %v252
    %v637 = vunpack.c.l.b16 %v253
    %v638 = vunpack.c.h.b16 %v253
    %v639 = vunpack.c.l.b16 %v254
    %v640 = vunpack.c.h.b16 %v254
    %v641 = vunpack.c.l.b16 %v255
    %v642 = vunpack.c.h.b16 %v255
    %v643 = vunpack.c.l.b16 %v256
    %v644 = vunpack.c.h.b16 %v256
    %v645 = vunpack.c.l.b16 %v257
    %v646 = vunpack.c.h.b16 %v257
    %v647 = vunpack.c.l.b16 %v258
    %v648 = vunpack.c.h.b16 %v258
    %v649 = vunpack.c.l.b16 %v259
    %v650 = vunpack.c.h.b16 %v259
    %v651 = vunpack.c.l.b16 %v260
    %v652 = vunpack.c.h.b16 %v260
    %v653 = vunpack.c.l.b16 %v261
    %v654 = vunpack.c.h.b16 %v261
    %v655 = vunpack.c.l.b16 %v262
    %v656 = vunpack.c.h.b16 %v262
    %v657 = vunpack.c.l.b16 %v263
    %v658 = vunpack.c.h.b16 %v263
    %v659 = vunpack.c.l.b16 %v264
    %v660 = vunpack.c.h.b16 %v264
    %v661 = vunpack.c.l.b16 %v265
    %v662 = vunpack.c.h.b16 %v265
    %v663 = vunpack.c.l.b16 %v266
    %v664 = vunpack.c.h.b16 %v266
    %v665 = vunpack.c.l.b16 %v267
    %v666 = vunpack.c.h.b16 %v267
    %v667 = vunpack.c.l.b16 %v268
    %v668 = vunpack.c.h.b16 %v268
    %v669 = vunpack.c.l.b16 %v269
    %v670 = vunpack.c.h.b16 %v269
    %v671 = vunpack.c.l.b16 %v270
    %v672 = vunpack.c.h.b16 %v270
    %v673 = vunpack.c.l.b16 %v271
    %v674 = vunpack.c.h.b16 %v271
    %v675 = vunpack.c.l.b16 %v272
    %v676 = vunpack.c.h.b16 %v272
    %v677 = vunpack.c.l.b16 %v273
    %v678 = vunpack.c.h.b16 %v273
    %v679 = vunpack.c.l.b16 %v274
    %v680 = vunpack.c.h.b16 %v274
    %v681 = vunpack.c.l.b16 %v275
    %v682 = vunpack.c.h.b16 %v275
    %v683 = vunpack.c.l.b16 %v276
    %v684 = vunpack.c.h.b16 %v276
    %v685 = vunpack.c.l.b16 %v277
    %v686 = vunpack.c.h.b16 %v277
    %v687 = vunpack.c.l.b16 %v278
    %v688 = vunpack.c.h.b16 %v278
    %v689 = vunpack.c.l.b16 %v279
    %v690 = vunpack.c.h.b16 %v279
    %v691 = vunpack.c.l.b16 %v280
    %v692 = vunpack.c.h.b16 %v280
    %v693 = vunpack.c.l.b16 %v281
    %v694 = vunpack.c.h.b16 %v281
    %v695 = vunpack.c.l.b16 %v282
    %v696 = vunpack.c.h.b16 %v282
    %v697 = vunpack.c.l.b16 %v283
    %v698 = vunpack.c.h.b16 %v283
    %v699 = vunpack.c.l.b16 %v284
    %v700 = vunpack.c.h.b16 %v284
    %v701 = vunpack.c.l.b16 %v285
    %v702 = vunpack.c.h.b16 %v285
    %v703 = vunpack.c.l.b16 %v286
    %v704 = vunpack.c.h.b16 %v286
    %v705 = vunpack.c.l.b16 %v287
    %v706 = vunpack.c.h.b16 %v287
    %v707 = vunpack.c.l.b16 %v288
    %v708 = vunpack.c.h.b16 %v288
    %v709 = vpack.c.b16 %v469, %v453
    %v710 = vpack.c.b16 %v470, %v454
    %v711 = vpack.c.b16 %v471, %v455
    %v712 = vpack.c.b16 %v472, %v456
    %v713 = vpack.c.b16 %v473, %v457
    %v714 = vpack.c.b16 %v474, %v458
    %v715 = vpack.c.b16 %v475, %v459
    %v716 = vpack.c.b16 %v476, %v460
    %v717 = vpack.c.b16 %v477, %v461
    %v718 = vpack.c.b16 %v478, %v462
    %v719 = vpack.c.b16 %v479, %v463
    %v720 = vpack.c.b16 %v480, %v464
    %v721 = vpack.c.b16 %v481, %v465
    %v722 = vpack.c.b16 %v482, %v466
    %v723 = vpack.c.b16 %v483, %v467
    %v724 = vpack.c.b16 %v484, %v468
    %v725 = vpack.c.b16 %v501, %v485
    %v726 = vpack.c.b16 %v502, %v486
    %v727 = vpack.c.b16 %v503, %v487
    %v728 = vpack.c.b16 %v504, %v488
    %v729 = vpack.c.b16 %v505, %v489
    %v730 = vpack.c.b16 %v506, %v490
    %v731 = vpack.c.b16 %v507, %v491
    %v732 = vpack.c.b16 %v508, %v492
    %v733 = vpack.c.b16 %v509, %v493
    %v734 = vpack.c.b16 %v510, %v494
    %v735 = vpack.c.b16 %v511, %v495
    %v736 = vpack.c.b16 %v512, %v496
    %v737 = vpack.c.b16 %v513, %v497
    %v738 = vpack.c.b16 %v514, %v498
    %v739 = vpack.c.b16 %v515, %v499
    %v740 = vpack.c.b16 %v516, %v500
    %v741 = vpack.c.b16 %v533, %v517
    %v742 = vpack.c.b16 %v534, %v518
    %v743 = vpack.c.b16 %v535, %v519
    %v744 = vpack.c.b16 %v536, %v520
    %v745 = vpack.c.b16 %v537, %v521
    %v746 = vpack.c.b16 %v538, %v522
    %v747 = vpack.c.b16 %v539, %v523
    %v748 = vpack.c.b16 %v540, %v524
    %v749 = vpack.c.b16 %v541, %v525
    %v750 = vpack.c.b16 %v542, %v526
    %v751 = vpack.c.b16 %v543, %v527
    %v752 = vpack.c.b16 %v544, %v528
    %v753 = vpack.c.b16 %v545, %v529
    %v754 = vpack.c.b16 %v546, %v530
    %v755 = vpack.c.b16 %v547, %v531
    %v756 = vpack.c.b16 %v548, %v532
    %v757 = vpack.c.b16 %v565, %v549
    %v758 = vpack.c.b16 %v566, %v550
    %v759 = vpack.c.b16 %v567, %v551
    %v760 = vpack.c.b16 %v568, %v552
    %v761 = vpack.c.b16 %v569, %v553
    %v762 = vpack.c.b16 %v570, %v554
    %v763 = vpack.c.b16 %v571, %v555
    %v764 = vpack.c.b16 %v572, %v556
    %v765 = vpack.c.b16 %v573, %v557
    %v766 = vpack.c.b16 %v574, %v558
    %v767 = vpack.c.b16 %v575, %v559
    %v768 = vpack.c.b16 %v576, %v560
    %v769 = vpack.c.b16 %v577, %v561
    %v770 = vpack.c.b16 %v578, %v562
    %v771 = vpack.c.b16 %v579, %v563
    %v772 = vpack.c.b16 %v580, %v564
    %v773 = vpack.c.b16 %v597, %v581
    %v774 = vpack.c.b16 %v598, %v582
    %v775 = vpack.c.b16 %v599, %v583
    %v776 = vpack.c.b16 %v600, %v584
    %v777 = vpack.c.b16 %v601, %v585
    %v778 = vpack.c.b16 %v602, %v586
    %v779 = vpack.c.b16 %v603, %v587
    %v780 = vpack.c.b16 %v604, %v588
    %v781 = vpack.c.b16 %v605, %v589
    %v782 = vpack.c.b16 %v606, %v590
    %v783 = vpack.c.b16 %v607, %v591
    %v784 = vpack.c.b16 %v608, %v592
    %v785 = vpack.c.b16 %v609, %v593
    %v786 = vpack.c.b16 %v610, %v594
    %v787 = vpack.c.b16 %v611, %v595
    %v788 = vpack.c.b16 %v612, %v596
    %v789 = vpack.c.b16 %v629, %v613
    %v790 = vpack.c.b16 %v630, %v614
    %v791 = vpack.c.b16 %v631, %v615
    %v792 = vpack.c.b16 %v632, %v616
    %v793 = vpack.c.b16 %v633, %v617
    %v794 = vpack.c.b16 %v634, %v618
    %v795 = vpack.c.b16 %v635, %v619
    %v796 = vpack.c.b16 %v636, %v620
    %v797 = vpack.c.b16 %v637, %v621
    %v798 = vpack.c.b16 %v638, %v622
    %v799 = vpack.c.b16 %v639, %v623
    %v800 = vpack.c.b16 %v640, %v624
    %v801 = vpack.c.b16 %v641, %v625
    %v802 = vpack.c.b16 %v642, %v626
    %v803 = vpack.c.b16 %v643, %v627
    %v804 = vpack.c.b16 %v644, %v628
    %v805 = vpack.c.b16 %v661, %v645
    %v806 = vpack.c.b16 %v662, %v646
    %v807 = vpack.c.b16 %v663, %v647
    %v808 = vpack.c.b16 %v664, %v648
    %v809 = vpack.c.b16 %v665, %v649
    %v810 = vpack.c.b16 %v666, %v650
    %v811 = vpack.c.b16 %v667, %v651
    %v812 = vpack.c.b16 %v668, %v652
    %v813 = vpack.c.b16 %v669, %v653
    %v814 = vpack.c.b16 %v670, %v654
    %v815 = vpack.c.b16 %v671, %v655
    %v816 = vpack.c.b16 %v672, %v656
    %v817 = vpack.c.b16 %v673, %v657
    %v818 = vpack.c.b16 %v674, %v658
    %v819 = vpack.c.b16 %v675, %v659
    %v820 = vpack.c.b16 %v676, %v660
    %v821 = vpack.c.b16 %v693, %v677
    %v822 = vpack.c.b16 %v694, %v678
    %v823 = vpack.c.b16 %v695, %v679
    %v824 = vpack.c.b16 %v696, %v680
    %v825 = vpack.c.b16 %v697, %v681
    %v826 = vpack.c.b16 %v698, %v682
    %v827 = vpack.c.b16 %v699, %v683
    %v828 = vpack.c.b16 %v700, %v684
    %v829 = vpack.c.b16 %v701, %v685
    %v830 = vpack.c.b16 %v702, %v686
    %v831 = vpack.c.b16 %v703, %v687
    %v832 = vpack.c.b16 %v704, %v688
    %v833 = vpack.c.b16 %v705, %v689
    %v834 = vpack.c.b16 %v706, %v690
    %v835 = vpack.c.b16 %v707, %v691
    %v836 = vpack.c.b16 %v708, %v692
    %965 = vmatpush.bf16.msra.mxu0 %v821
    %966 = vmatpush.bf16.msra.mxu0 %v805
    %967 = vmatpush.bf16.msra.mxu0 %v789
    %968 = vmatpush.bf16.msra.mxu0 %v773
    %969 = vmatpush.bf16.msra.mxu0 %v757
    %970 = vmatpush.bf16.msra.mxu0 %v741
    %971 = vmatpush.bf16.msra.mxu0 %v725
    %972 = vmatpush.bf16.msra.mxu0 %v709
    %973 = vmatmul.bf16.gmra.mxu0 %v157
    %v974 = vpop.f32.mrf.mxu0
    %v975 = vadd.f32 %v293, %v974
    %v976 = vpop.f32.mrf.mxu0
    %v977 = vadd.f32 %v293, %v976
    %978 = vmatmul.bf16.gmra.mxu0 %v158
    %v979 = vpop.f32.mrf.mxu0
    %v980 = vadd.f32 %v293, %v979
    %v981 = vpop.f32.mrf.mxu0
    %v982 = vadd.f32 %v293, %v981
    %983 = vmatmul.bf16.gmra.mxu0 %v159
    %v984 = vpop.f32.mrf.mxu0
    %v985 = vadd.f32 %v293, %v984
    %v986 = vpop.f32.mrf.mxu0
    %v987 = vadd.f32 %v293, %v986
    %988 = vmatmul.bf16.gmra.mxu0 %v160
    %v989 = vpop.f32.mrf.mxu0
    %v990 = vadd.f32 %v293, %v989
    %v991 = vpop.f32.mrf.mxu0
    %v992 = vadd.f32 %v293, %v991
    %993 = vdwg.mxu0
    %994 = vmatpush.bf16.msra.mxu0 %v822
    %995 = vmatpush.bf16.msra.mxu0 %v806
    %996 = vmatpush.bf16.msra.mxu0 %v790
    %997 = vmatpush.bf16.msra.mxu0 %v774
    %998 = vmatpush.bf16.msra.mxu0 %v758
    %999 = vmatpush.bf16.msra.mxu0 %v742
    %1000 = vmatpush.bf16.msra.mxu0 %v726
    %1001 = vmatpush.bf16.msra.mxu0 %v710
    %1002 = vmatmul.bf16.gmra.mxu0 %v157
    %v1003 = vpop.f32.mrf.mxu0
    %v1004 = vadd.f32 %v294, %v1003
    %v1005 = vpop.f32.mrf.mxu0
    %v1006 = vadd.f32 %v294, %v1005
    %1007 = vmatmul.bf16.gmra.mxu0 %v158
    %v1008 = vpop.f32.mrf.mxu0
    %v1009 = vadd.f32 %v294, %v1008
    %v1010 = vpop.f32.mrf.mxu0
    %v1011 = vadd.f32 %v294, %v1010
    %1012 = vmatmul.bf16.gmra.mxu0 %v159
    %v1013 = vpop.f32.mrf.mxu0
    %v1014 = vadd.f32 %v294, %v1013
    %v1015 = vpop.f32.mrf.mxu0
    %v1016 = vadd.f32 %v294, %v1015
    %1017 = vmatmul.bf16.gmra.mxu0 %v160
    %v1018 = vpop.f32.mrf.mxu0
    %v1019 = vadd.f32 %v294, %v1018
    %v1020 = vpop.f32.mrf.mxu0
    %v1021 = vadd.f32 %v294, %v1020
    %1022 = vdwg.mxu0
    %1023 = vmatpush.bf16.msra.mxu0 %v823
    %1024 = vmatpush.bf16.msra.mxu0 %v807
    %1025 = vmatpush.bf16.msra.mxu0 %v791
    %1026 = vmatpush.bf16.msra.mxu0 %v775
    %1027 = vmatpush.bf16.msra.mxu0 %v759
    %1028 = vmatpush.bf16.msra.mxu0 %v743
    %1029 = vmatpush.bf16.msra.mxu0 %v727
    %1030 = vmatpush.bf16.msra.mxu0 %v711
    %1031 = vmatmul.bf16.gmra.mxu0 %v157
    %v1032 = vpop.f32.mrf.mxu0
    %v1033 = vadd.f32 %v295, %v1032
    %v1034 = vpop.f32.mrf.mxu0
    %v1035 = vadd.f32 %v295, %v1034
    %1036 = vmatmul.bf16.gmra.mxu0 %v158
    %v1037 = vpop.f32.mrf.mxu0
    %v1038 = vadd.f32 %v295, %v1037
    %v1039 = vpop.f32.mrf.mxu0
    %v1040 = vadd.f32 %v295, %v1039
    %1041 = vmatmul.bf16.gmra.mxu0 %v159
    %v1042 = vpop.f32.mrf.mxu0
    %v1043 = vadd.f32 %v295, %v1042
    %v1044 = vpop.f32.mrf.mxu0
    %v1045 = vadd.f32 %v295, %v1044
    %1046 = vmatmul.bf16.gmra.mxu0 %v160
    %v1047 = vpop.f32.mrf.mxu0
    %v1048 = vadd.f32 %v295, %v1047
    %v1049 = vpop.f32.mrf.mxu0
    %v1050 = vadd.f32 %v295, %v1049
    %1051 = vdwg.mxu0
    %1052 = vmatpush.bf16.msra.mxu0 %v824
    %1053 = vmatpush.bf16.msra.mxu0 %v808
    %1054 = vmatpush.bf16.msra.mxu0 %v792
    %1055 = vmatpush.bf16.msra.mxu0 %v776
    %1056 = vmatpush.bf16.msra.mxu0 %v760
    %1057 = vmatpush.bf16.msra.mxu0 %v744
    %1058 = vmatpush.bf16.msra.mxu0 %v728
    %1059 = vmatpush.bf16.msra.mxu0 %v712
    %1060 = vmatmul.bf16.gmra.mxu0 %v157
    %v1061 = vpop.f32.mrf.mxu0
    %v1062 = vadd.f32 %v296, %v1061
    %v1063 = vpop.f32.mrf.mxu0
    %v1064 = vadd.f32 %v296, %v1063
    %1065 = vmatmul.bf16.gmra.mxu0 %v158
    %v1066 = vpop.f32.mrf.mxu0
    %v1067 = vadd.f32 %v296, %v1066
    %v1068 = vpop.f32.mrf.mxu0
    %v1069 = vadd.f32 %v296, %v1068
    %1070 = vmatmul.bf16.gmra.mxu0 %v159
    %v1071 = vpop.f32.mrf.mxu0
    %v1072 = vadd.f32 %v296, %v1071
    %v1073 = vpop.f32.mrf.mxu0
    %v1074 = vadd.f32 %v296, %v1073
    %1075 = vmatmul.bf16.gmra.mxu0 %v160
    %v1076 = vpop.f32.mrf.mxu0
    %v1077 = vadd.f32 %v296, %v1076
    %v1078 = vpop.f32.mrf.mxu0
    %v1079 = vadd.f32 %v296, %v1078
    %1080 = vdwg.mxu0
    %1081 = vmatpush.bf16.msra.mxu0 %v825
    %1082 = vmatpush.bf16.msra.mxu0 %v809
    %1083 = vmatpush.bf16.msra.mxu0 %v793
    %1084 = vmatpush.bf16.msra.mxu0 %v777
    %1085 = vmatpush.bf16.msra.mxu0 %v761
    %1086 = vmatpush.bf16.msra.mxu0 %v745
    %1087 = vmatpush.bf16.msra.mxu0 %v729
    %1088 = vmatpush.bf16.msra.mxu0 %v713
    %1089 = vmatmul.bf16.gmra.mxu0 %v157
    %v1090 = vpop.f32.mrf.mxu0
    %v1091 = vadd.f32 %v297, %v1090
    %v1092 = vpop.f32.mrf.mxu0
    %v1093 = vadd.f32 %v297, %v1092
    %1094 = vmatmul.bf16.gmra.mxu0 %v158
    %v1095 = vpop.f32.mrf.mxu0
    %v1096 = vadd.f32 %v297, %v1095
    %v1097 = vpop.f32.mrf.mxu0
    %v1098 = vadd.f32 %v297, %v1097
    %1099 = vmatmul.bf16.gmra.mxu0 %v159
    %v1100 = vpop.f32.mrf.mxu0
    %v1101 = vadd.f32 %v297, %v1100
    %v1102 = vpop.f32.mrf.mxu0
    %v1103 = vadd.f32 %v297, %v1102
    %1104 = vmatmul.bf16.gmra.mxu0 %v160
    %v1105 = vpop.f32.mrf.mxu0
    %v1106 = vadd.f32 %v297, %v1105
    %v1107 = vpop.f32.mrf.mxu0
    %v1108 = vadd.f32 %v297, %v1107
    %1109 = vdwg.mxu0
    %1110 = vmatpush.bf16.msra.mxu0 %v826
    %1111 = vmatpush.bf16.msra.mxu0 %v810
    %1112 = vmatpush.bf16.msra.mxu0 %v794
    %1113 = vmatpush.bf16.msra.mxu0 %v778
    %1114 = vmatpush.bf16.msra.mxu0 %v762
    %1115 = vmatpush.bf16.msra.mxu0 %v746
    %1116 = vmatpush.bf16.msra.mxu0 %v730
    %1117 = vmatpush.bf16.msra.mxu0 %v714
    %1118 = vmatmul.bf16.gmra.mxu0 %v157
    %v1119 = vpop.f32.mrf.mxu0
    %v1120 = vadd.f32 %v298, %v1119
    %v1121 = vpop.f32.mrf.mxu0
    %v1122 = vadd.f32 %v298, %v1121
    %1123 = vmatmul.bf16.gmra.mxu0 %v158
    %v1124 = vpop.f32.mrf.mxu0
    %v1125 = vadd.f32 %v298, %v1124
    %v1126 = vpop.f32.mrf.mxu0
    %v1127 = vadd.f32 %v298, %v1126
    %1128 = vmatmul.bf16.gmra.mxu0 %v159
    %v1129 = vpop.f32.mrf.mxu0
    %v1130 = vadd.f32 %v298, %v1129
    %v1131 = vpop.f32.mrf.mxu0
    %v1132 = vadd.f32 %v298, %v1131
    %1133 = vmatmul.bf16.gmra.mxu0 %v160
    %v1134 = vpop.f32.mrf.mxu0
    %v1135 = vadd.f32 %v298, %v1134
    %v1136 = vpop.f32.mrf.mxu0
    %v1137 = vadd.f32 %v298, %v1136
    %1138 = vdwg.mxu0
    %1139 = vmatpush.bf16.msra.mxu0 %v827
    %1140 = vmatpush.bf16.msra.mxu0 %v811
    %1141 = vmatpush.bf16.msra.mxu0 %v795
    %1142 = vmatpush.bf16.msra.mxu0 %v779
    %1143 = vmatpush.bf16.msra.mxu0 %v763
    %1144 = vmatpush.bf16.msra.mxu0 %v747
    %1145 = vmatpush.bf16.msra.mxu0 %v731
    %1146 = vmatpush.bf16.msra.mxu0 %v715
    %1147 = vmatmul.bf16.gmra.mxu0 %v157
    %v1148 = vpop.f32.mrf.mxu0
    %v1149 = vadd.f32 %v299, %v1148
    %v1150 = vpop.f32.mrf.mxu0
    %v1151 = vadd.f32 %v299, %v1150
    %1152 = vmatmul.bf16.gmra.mxu0 %v158
    %v1153 = vpop.f32.mrf.mxu0
    %v1154 = vadd.f32 %v299, %v1153
    %v1155 = vpop.f32.mrf.mxu0
    %v1156 = vadd.f32 %v299, %v1155
    %1157 = vmatmul.bf16.gmra.mxu0 %v159
    %v1158 = vpop.f32.mrf.mxu0
    %v1159 = vadd.f32 %v299, %v1158
    %v1160 = vpop.f32.mrf.mxu0
    %v1161 = vadd.f32 %v299, %v1160
    %1162 = vmatmul.bf16.gmra.mxu0 %v160
    %v1163 = vpop.f32.mrf.mxu0
    %v1164 = vadd.f32 %v299, %v1163
    %v1165 = vpop.f32.mrf.mxu0
    %v1166 = vadd.f32 %v299, %v1165
    %1167 = vdwg.mxu0
    %1168 = vmatpush.bf16.msra.mxu0 %v828
    %1169 = vmatpush.bf16.msra.mxu0 %v812
    %1170 = vmatpush.bf16.msra.mxu0 %v796
    %1171 = vmatpush.bf16.msra.mxu0 %v780
    %1172 = vmatpush.bf16.msra.mxu0 %v764
    %1173 = vmatpush.bf16.msra.mxu0 %v748
    %1174 = vmatpush.bf16.msra.mxu0 %v732
    %1175 = vmatpush.bf16.msra.mxu0 %v716
    %1176 = vmatmul.bf16.gmra.mxu0 %v157
    %v1177 = vpop.f32.mrf.mxu0
    %v1178 = vadd.f32 %v300, %v1177
    %v1179 = vpop.f32.mrf.mxu0
    %v1180 = vadd.f32 %v300, %v1179
    %1181 = vmatmul.bf16.gmra.mxu0 %v158
    %v1182 = vpop.f32.mrf.mxu0
    %v1183 = vadd.f32 %v300, %v1182
    %v1184 = vpop.f32.mrf.mxu0
    %v1185 = vadd.f32 %v300, %v1184
    %1186 = vmatmul.bf16.gmra.mxu0 %v159
    %v1187 = vpop.f32.mrf.mxu0
    %v1188 = vadd.f32 %v300, %v1187
    %v1189 = vpop.f32.mrf.mxu0
    %v1190 = vadd.f32 %v300, %v1189
    %1191 = vmatmul.bf16.gmra.mxu0 %v160
    %v1192 = vpop.f32.mrf.mxu0
    %v1193 = vadd.f32 %v300, %v1192
    %v1194 = vpop.f32.mrf.mxu0
    %v1195 = vadd.f32 %v300, %v1194
    %1196 = vdwg.mxu0
    %1197 = vmatpush.bf16.msra.mxu0 %v829
    %1198 = vmatpush.bf16.msra.mxu0 %v813
    %1199 = vmatpush.bf16.msra.mxu0 %v797
    %1200 = vmatpush.bf16.msra.mxu0 %v781
    %1201 = vmatpush.bf16.msra.mxu0 %v765
    %1202 = vmatpush.bf16.msra.mxu0 %v749
    %1203 = vmatpush.bf16.msra.mxu0 %v733
    %1204 = vmatpush.bf16.msra.mxu0 %v717
    %1205 = vmatmul.bf16.gmra.mxu0 %v157
    %v1206 = vpop.f32.mrf.mxu0
    %v1207 = vadd.f32 %v301, %v1206
    %v1208 = vpop.f32.mrf.mxu0
    %v1209 = vadd.f32 %v301, %v1208
    %1210 = vmatmul.bf16.gmra.mxu0 %v158
    %v1211 = vpop.f32.mrf.mxu0
    %v1212 = vadd.f32 %v301, %v1211
    %v1213 = vpop.f32.mrf.mxu0
    %v1214 = vadd.f32 %v301, %v1213
    %1215 = vmatmul.bf16.gmra.mxu0 %v159
    %v1216 = vpop.f32.mrf.mxu0
    %v1217 = vadd.f32 %v301, %v1216
    %v1218 = vpop.f32.mrf.mxu0
    %v1219 = vadd.f32 %v301, %v1218
    %1220 = vmatmul.bf16.gmra.mxu0 %v160
    %v1221 = vpop.f32.mrf.mxu0
    %v1222 = vadd.f32 %v301, %v1221
    %v1223 = vpop.f32.mrf.mxu0
    %v1224 = vadd.f32 %v301, %v1223
    %1225 = vdwg.mxu0
    %1226 = vmatpush.bf16.msra.mxu0 %v830
    %1227 = vmatpush.bf16.msra.mxu0 %v814
    %1228 = vmatpush.bf16.msra.mxu0 %v798
    %1229 = vmatpush.bf16.msra.mxu0 %v782
    %1230 = vmatpush.bf16.msra.mxu0 %v766
    %1231 = vmatpush.bf16.msra.mxu0 %v750
    %1232 = vmatpush.bf16.msra.mxu0 %v734
    %1233 = vmatpush.bf16.msra.mxu0 %v718
    %1234 = vmatmul.bf16.gmra.mxu0 %v157
    %v1235 = vpop.f32.mrf.mxu0
    %v1236 = vadd.f32 %v302, %v1235
    %v1237 = vpop.f32.mrf.mxu0
    %v1238 = vadd.f32 %v302, %v1237
    %1239 = vmatmul.bf16.gmra.mxu0 %v158
    %v1240 = vpop.f32.mrf.mxu0
    %v1241 = vadd.f32 %v302, %v1240
    %v1242 = vpop.f32.mrf.mxu0
    %v1243 = vadd.f32 %v302, %v1242
    %1244 = vmatmul.bf16.gmra.mxu0 %v159
    %v1245 = vpop.f32.mrf.mxu0
    %v1246 = vadd.f32 %v302, %v1245
    %v1247 = vpop.f32.mrf.mxu0
    %v1248 = vadd.f32 %v302, %v1247
    %1249 = vmatmul.bf16.gmra.mxu0 %v160
    %v1250 = vpop.f32.mrf.mxu0
    %v1251 = vadd.f32 %v302, %v1250
    %v1252 = vpop.f32.mrf.mxu0
    %v1253 = vadd.f32 %v302, %v1252
    %1254 = vdwg.mxu0
    %1255 = vmatpush.bf16.msra.mxu0 %v831
    %1256 = vmatpush.bf16.msra.mxu0 %v815
    %1257 = vmatpush.bf16.msra.mxu0 %v799
    %1258 = vmatpush.bf16.msra.mxu0 %v783
    %1259 = vmatpush.bf16.msra.mxu0 %v767
    %1260 = vmatpush.bf16.msra.mxu0 %v751
    %1261 = vmatpush.bf16.msra.mxu0 %v735
    %1262 = vmatpush.bf16.msra.mxu0 %v719
    %1263 = vmatmul.bf16.gmra.mxu0 %v157
    %v1264 = vpop.f32.mrf.mxu0
    %v1265 = vadd.f32 %v303, %v1264
    %v1266 = vpop.f32.mrf.mxu0
    %v1267 = vadd.f32 %v303, %v1266
    %1268 = vmatmul.bf16.gmra.mxu0 %v158
    %v1269 = vpop.f32.mrf.mxu0
    %v1270 = vadd.f32 %v303, %v1269
    %v1271 = vpop.f32.mrf.mxu0
    %v1272 = vadd.f32 %v303, %v1271
    %1273 = vmatmul.bf16.gmra.mxu0 %v159
    %v1274 = vpop.f32.mrf.mxu0
    %v1275 = vadd.f32 %v303, %v1274
    %v1276 = vpop.f32.mrf.mxu0
    %v1277 = vadd.f32 %v303, %v1276
    %1278 = vmatmul.bf16.gmra.mxu0 %v160
    %v1279 = vpop.f32.mrf.mxu0
    %v1280 = vadd.f32 %v303, %v1279
    %v1281 = vpop.f32.mrf.mxu0
    %v1282 = vadd.f32 %v303, %v1281
    %1283 = vdwg.mxu0
    %1284 = vmatpush.bf16.msra.mxu0 %v832
    %1285 = vmatpush.bf16.msra.mxu0 %v816
    %1286 = vmatpush.bf16.msra.mxu0 %v800
    %1287 = vmatpush.bf16.msra.mxu0 %v784
    %1288 = vmatpush.bf16.msra.mxu0 %v768
    %1289 = vmatpush.bf16.msra.mxu0 %v752
    %1290 = vmatpush.bf16.msra.mxu0 %v736
    %1291 = vmatpush.bf16.msra.mxu0 %v720
    %1292 = vmatmul.bf16.gmra.mxu0 %v157
    %v1293 = vpop.f32.mrf.mxu0
    %v1294 = vadd.f32 %v304, %v1293
    %v1295 = vpop.f32.mrf.mxu0
    %v1296 = vadd.f32 %v304, %v1295
    %1297 = vmatmul.bf16.gmra.mxu0 %v158
    %v1298 = vpop.f32.mrf.mxu0
    %v1299 = vadd.f32 %v304, %v1298
    %v1300 = vpop.f32.mrf.mxu0
    %v1301 = vadd.f32 %v304, %v1300
    %1302 = vmatmul.bf16.gmra.mxu0 %v159
    %v1303 = vpop.f32.mrf.mxu0
    %v1304 = vadd.f32 %v304, %v1303
    %v1305 = vpop.f32.mrf.mxu0
    %v1306 = vadd.f32 %v304, %v1305
    %1307 = vmatmul.bf16.gmra.mxu0 %v160
    %v1308 = vpop.f32.mrf.mxu0
    %v1309 = vadd.f32 %v304, %v1308
    %v1310 = vpop.f32.mrf.mxu0
    %v1311 = vadd.f32 %v304, %v1310
    %1312 = vdwg.mxu0
    %1313 = vmatpush.bf16.msra.mxu0 %v833
    %1314 = vmatpush.bf16.msra.mxu0 %v817
    %1315 = vmatpush.bf16.msra.mxu0 %v801
    %1316 = vmatpush.bf16.msra.mxu0 %v785
    %1317 = vmatpush.bf16.msra.mxu0 %v769
    %1318 = vmatpush.bf16.msra.mxu0 %v753
    %1319 = vmatpush.bf16.msra.mxu0 %v737
    %1320 = vmatpush.bf16.msra.mxu0 %v721
    %1321 = vmatmul.bf16.gmra.mxu0 %v157
    %v1322 = vpop.f32.mrf.mxu0
    %v1323 = vadd.f32 %v305, %v1322
    %v1324 = vpop.f32.mrf.mxu0
    %v1325 = vadd.f32 %v305, %v1324
    %1326 = vmatmul.bf16.gmra.mxu0 %v158
    %v1327 = vpop.f32.mrf.mxu0
    %v1328 = vadd.f32 %v305, %v1327
    %v1329 = vpop.f32.mrf.mxu0
    %v1330 = vadd.f32 %v305, %v1329
    %1331 = vmatmul.bf16.gmra.mxu0 %v159
    %v1332 = vpop.f32.mrf.mxu0
    %v1333 = vadd.f32 %v305, %v1332
    %v1334 = vpop.f32.mrf.mxu0
    %v1335 = vadd.f32 %v305, %v1334
    %1336 = vmatmul.bf16.gmra.mxu0 %v160
    %v1337 = vpop.f32.mrf.mxu0
    %v1338 = vadd.f32 %v305, %v1337
    %v1339 = vpop.f32.mrf.mxu0
    %v1340 = vadd.f32 %v305, %v1339
    %1341 = vdwg.mxu0
    %1342 = vmatpush.bf16.msra.mxu0 %v834
    %1343 = vmatpush.bf16.msra.mxu0 %v818
    %1344 = vmatpush.bf16.msra.mxu0 %v802
    %1345 = vmatpush.bf16.msra.mxu0 %v786
    %1346 = vmatpush.bf16.msra.mxu0 %v770
    %1347 = vmatpush.bf16.msra.mxu0 %v754
    %1348 = vmatpush.bf16.msra.mxu0 %v738
    %1349 = vmatpush.bf16.msra.mxu0 %v722
    %1350 = vmatmul.bf16.gmra.mxu0 %v157
    %v1351 = vpop.f32.mrf.mxu0
    %v1352 = vadd.f32 %v306, %v1351
    %v1353 = vpop.f32.mrf.mxu0
    %v1354 = vadd.f32 %v306, %v1353
    %1355 = vmatmul.bf16.gmra.mxu0 %v158
    %v1356 = vpop.f32.mrf.mxu0
    %v1357 = vadd.f32 %v306, %v1356
    %v1358 = vpop.f32.mrf.mxu0
    %v1359 = vadd.f32 %v306, %v1358
    %1360 = vmatmul.bf16.gmra.mxu0 %v159
    %v1361 = vpop.f32.mrf.mxu0
    %v1362 = vadd.f32 %v306, %v1361
    %v1363 = vpop.f32.mrf.mxu0
    %v1364 = vadd.f32 %v306, %v1363
    %1365 = vmatmul.bf16.gmra.mxu0 %v160
    %v1366 = vpop.f32.mrf.mxu0
    %v1367 = vadd.f32 %v306, %v1366
    %v1368 = vpop.f32.mrf.mxu0
    %v1369 = vadd.f32 %v306, %v1368
    %1370 = vdwg.mxu0
    %1371 = vmatpush.bf16.msra.mxu0 %v835
    %1372 = vmatpush.bf16.msra.mxu0 %v819
    %1373 = vmatpush.bf16.msra.mxu0 %v803
    %1374 = vmatpush.bf16.msra.mxu0 %v787
    %1375 = vmatpush.bf16.msra.mxu0 %v771
    %1376 = vmatpush.bf16.msra.mxu0 %v755
    %1377 = vmatpush.bf16.msra.mxu0 %v739
    %1378 = vmatpush.bf16.msra.mxu0 %v723
    %1379 = vmatmul.bf16.gmra.mxu0 %v157
    %v1380 = vpop.f32.mrf.mxu0
    %v1381 = vadd.f32 %v307, %v1380
    %v1382 = vpop.f32.mrf.mxu0
    %v1383 = vadd.f32 %v307, %v1382
    %1384 = vmatmul.bf16.gmra.mxu0 %v158
    %v1385 = vpop.f32.mrf.mxu0
    %v1386 = vadd.f32 %v307, %v1385
    %v1387 = vpop.f32.mrf.mxu0
    %v1388 = vadd.f32 %v307, %v1387
    %1389 = vmatmul.bf16.gmra.mxu0 %v159
    %v1390 = vpop.f32.mrf.mxu0
    %v1391 = vadd.f32 %v307, %v1390
    %v1392 = vpop.f32.mrf.mxu0
    %v1393 = vadd.f32 %v307, %v1392
    %1394 = vmatmul.bf16.gmra.mxu0 %v160
    %v1395 = vpop.f32.mrf.mxu0
    %v1396 = vadd.f32 %v307, %v1395
    %v1397 = vpop.f32.mrf.mxu0
    %v1398 = vadd.f32 %v307, %v1397
    %1399 = vdwg.mxu0
    %1400 = vmatpush.bf16.msra.mxu0 %v836
    %1401 = vmatpush.bf16.msra.mxu0 %v820
    %1402 = vmatpush.bf16.msra.mxu0 %v804
    %1403 = vmatpush.bf16.msra.mxu0 %v788
    %1404 = vmatpush.bf16.msra.mxu0 %v772
    %1405 = vmatpush.bf16.msra.mxu0 %v756
    %1406 = vmatpush.bf16.msra.mxu0 %v740
    %1407 = vmatpush.bf16.msra.mxu0 %v724
    %1408 = vmatmul.bf16.gmra.mxu0 %v157
    %v1409 = vpop.f32.mrf.mxu0
    %v1410 = vadd.f32 %v308, %v1409
    %v1411 = vpop.f32.mrf.mxu0
    %v1412 = vadd.f32 %v308, %v1411
    %1413 = vmatmul.bf16.gmra.mxu0 %v158
    %v1414 = vpop.f32.mrf.mxu0
    %v1415 = vadd.f32 %v308, %v1414
    %v1416 = vpop.f32.mrf.mxu0
    %v1417 = vadd.f32 %v308, %v1416
    %1418 = vmatmul.bf16.gmra.mxu0 %v159
    %v1419 = vpop.f32.mrf.mxu0
    %v1420 = vadd.f32 %v308, %v1419
    %v1421 = vpop.f32.mrf.mxu0
    %v1422 = vadd.f32 %v308, %v1421
    %1423 = vmatmul.bf16.gmra.mxu0 %v160
    %v1424 = vpop.f32.mrf.mxu0
    %v1425 = vadd.f32 %v308, %v1424
    %v1426 = vpop.f32.mrf.mxu0
    %v1427 = vadd.f32 %v308, %v1426
    %1428 = vdwg.mxu0
    %1429 = vst [vmem:[#allocation2] sm:$0xff] %v975
    %1430 = vst [vmem:[#allocation2 + $0x8] sm:$0xff] %v1004
    %1431 = vst [vmem:[#allocation2 + $0x10] sm:$0xff] %v1033
    %1432 = vst [vmem:[#allocation2 + $0x18] sm:$0xff] %v1062
    %1433 = vst [vmem:[#allocation2 + $0x20] sm:$0xff] %v1091
    %1434 = vst [vmem:[#allocation2 + $0x28] sm:$0xff] %v1120
    %1435 = vst [vmem:[#allocation2 + $0x30] sm:$0xff] %v1149
    %1436 = vst [vmem:[#allocation2 + $0x38] sm:$0xff] %v1178
    %1437 = vst [vmem:[#allocation2 + $0x40] sm:$0xff] %v1207
    %1438 = vst [vmem:[#allocation2 + $0x48] sm:$0xff] %v1236
    %1439 = vst [vmem:[#allocation2 + $0x50] sm:$0xff] %v1265
    %1440 = vst [vmem:[#allocation2 + $0x58] sm:$0xff] %v1294
    %1441 = vst [vmem:[#allocation2 + $0x60] sm:$0xff] %v1323
    %1442 = vst [vmem:[#allocation2 + $0x68] sm:$0xff] %v1352
    %1443 = vst [vmem:[#allocation2 + $0x70] sm:$0xff] %v1381
    %1444 = vst [vmem:[#allocation2 + $0x78] sm:$0xff] %v1410
    %1445 = vst [vmem:[#allocation2 + $0x80] sm:$0xff] %v977
    %1446 = vst [vmem:[#allocation2 + $0x88] sm:$0xff] %v1006
    %1447 = vst [vmem:[#allocation2 + $0x90] sm:$0xff] %v1035
    %1448 = vst [vmem:[#allocation2 + $0x98] sm:$0xff] %v1064
    %1449 = vst [vmem:[#allocation2 + $0xa0] sm:$0xff] %v1093
    %1450 = vst [vmem:[#allocation2 + $0xa8] sm:$0xff] %v1122
    %1451 = vst [vmem:[#allocation2 + $0xb0] sm:$0xff] %v1151
    %1452 = vst [vmem:[#allocation2 + $0xb8] sm:$0xff] %v1180
    %1453 = vst [vmem:[#allocation2 + $0xc0] sm:$0xff] %v1209
    %1454 = vst [vmem:[#allocation2 + $0xc8] sm:$0xff] %v1238
    %1455 = vst [vmem:[#allocation2 + $0xd0] sm:$0xff] %v1267
    %1456 = vst [vmem:[#allocation2 + $0xd8] sm:$0xff] %v1296
    %1457 = vst [vmem:[#allocation2 + $0xe0] sm:$0xff] %v1325
    %1458 = vst [vmem:[#allocation2 + $0xe8] sm:$0xff] %v1354
    %1459 = vst [vmem:[#allocation2 + $0xf0] sm:$0xff] %v1383
    %1460 = vst [vmem:[#allocation2 + $0xf8] sm:$0xff] %v1412
    %1461 = vst [vmem:[#allocation2 + $0x100] sm:$0xff] %v980
    %1462 = vst [vmem:[#allocation2 + $0x108] sm:$0xff] %v1009
    %1463 = vst [vmem:[#allocation2 + $0x110] sm:$0xff] %v1038
    %1464 = vst [vmem:[#allocation2 + $0x118] sm:$0xff] %v1067
    %1465 = vst [vmem:[#allocation2 + $0x120] sm:$0xff] %v1096
    %1466 = vst [vmem:[#allocation2 + $0x128] sm:$0xff] %v1125
    %1467 = vst [vmem:[#allocation2 + $0x130] sm:$0xff] %v1154
    %1468 = vst [vmem:[#allocation2 + $0x138] sm:$0xff] %v1183
    %1469 = vst [vmem:[#allocation2 + $0x140] sm:$0xff] %v1212
    %1470 = vst [vmem:[#allocation2 + $0x148] sm:$0xff] %v1241
    %1471 = vst [vmem:[#allocation2 + $0x150] sm:$0xff] %v1270
    %1472 = vst [vmem:[#allocation2 + $0x158] sm:$0xff] %v1299
    %1473 = vst [vmem:[#allocation2 + $0x160] sm:$0xff] %v1328
    %1474 = vst [vmem:[#allocation2 + $0x168] sm:$0xff] %v1357
    %1475 = vst [vmem:[#allocation2 + $0x170] sm:$0xff] %v1386
    %1476 = vst [vmem:[#allocation2 + $0x178] sm:$0xff] %v1415
    %1477 = vst [vmem:[#allocation2 + $0x180] sm:$0xff] %v982
    %1478 = vst [vmem:[#allocation2 + $0x188] sm:$0xff] %v1011
    %1479 = vst [vmem:[#allocation2 + $0x190] sm:$0xff] %v1040
    %1480 = vst [vmem:[#allocation2 + $0x198] sm:$0xff] %v1069
    %1481 = vst [vmem:[#allocation2 + $0x1a0] sm:$0xff] %v1098
    %1482 = vst [vmem:[#allocation2 + $0x1a8] sm:$0xff] %v1127
    %1483 = vst [vmem:[#allocation2 + $0x1b0] sm:$0xff] %v1156
    %1484 = vst [vmem:[#allocation2 + $0x1b8] sm:$0xff] %v1185
    %1485 = vst [vmem:[#allocation2 + $0x1c0] sm:$0xff] %v1214
    %1486 = vst [vmem:[#allocation2 + $0x1c8] sm:$0xff] %v1243
    %1487 = vst [vmem:[#allocation2 + $0x1d0] sm:$0xff] %v1272
    %1488 = vst [vmem:[#allocation2 + $0x1d8] sm:$0xff] %v1301
    %1489 = vst [vmem:[#allocation2 + $0x1e0] sm:$0xff] %v1330
    %1490 = vst [vmem:[#allocation2 + $0x1e8] sm:$0xff] %v1359
    %1491 = vst [vmem:[#allocation2 + $0x1f0] sm:$0xff] %v1388
    %1492 = vst [vmem:[#allocation2 + $0x1f8] sm:$0xff] %v1417
    %1493 = vst [vmem:[#allocation2 + $0x200] sm:$0xff] %v985
    %1494 = vst [vmem:[#allocation2 + $0x208] sm:$0xff] %v1014
    %1495 = vst [vmem:[#allocation2 + $0x210] sm:$0xff] %v1043
    %1496 = vst [vmem:[#allocation2 + $0x218] sm:$0xff] %v1072
    %1497 = vst [vmem:[#allocation2 + $0x220] sm:$0xff] %v1101
    %1498 = vst [vmem:[#allocation2 + $0x228] sm:$0xff] %v1130
    %1499 = vst [vmem:[#allocation2 + $0x230] sm:$0xff] %v1159
    %1500 = vst [vmem:[#allocation2 + $0x238] sm:$0xff] %v1188
    %1501 = vst [vmem:[#allocation2 + $0x240] sm:$0xff] %v1217
    %1502 = vst [vmem:[#allocation2 + $0x248] sm:$0xff] %v1246
    %1503 = vst [vmem:[#allocation2 + $0x250] sm:$0xff] %v1275
    %1504 = vst [vmem:[#allocation2 + $0x258] sm:$0xff] %v1304
    %1505 = vst [vmem:[#allocation2 + $0x260] sm:$0xff] %v1333
    %1506 = vst [vmem:[#allocation2 + $0x268] sm:$0xff] %v1362
    %1507 = vst [vmem:[#allocation2 + $0x270] sm:$0xff] %v1391
    %1508 = vst [vmem:[#allocation2 + $0x278] sm:$0xff] %v1420
    %1509 = vst [vmem:[#allocation2 + $0x280] sm:$0xff] %v987
    %1510 = vst [vmem:[#allocation2 + $0x288] sm:$0xff] %v1016
    %1511 = vst [vmem:[#allocation2 + $0x290] sm:$0xff] %v1045
    %1512 = vst [vmem:[#allocation2 + $0x298] sm:$0xff] %v1074
    %1513 = vst [vmem:[#allocation2 + $0x2a0] sm:$0xff] %v1103
    %1514 = vst [vmem:[#allocation2 + $0x2a8] sm:$0xff] %v1132
    %1515 = vst [vmem:[#allocation2 + $0x2b0] sm:$0xff] %v1161
    %1516 = vst [vmem:[#allocation2 + $0x2b8] sm:$0xff] %v1190
    %1517 = vst [vmem:[#allocation2 + $0x2c0] sm:$0xff] %v1219
    %1518 = vst [vmem:[#allocation2 + $0x2c8] sm:$0xff] %v1248
    %1519 = vst [vmem:[#allocation2 + $0x2d0] sm:$0xff] %v1277
    %1520 = vst [vmem:[#allocation2 + $0x2d8] sm:$0xff] %v1306
    %1521 = vst [vmem:[#allocation2 + $0x2e0] sm:$0xff] %v1335
    %1522 = vst [vmem:[#allocation2 + $0x2e8] sm:$0xff] %v1364
    %1523 = vst [vmem:[#allocation2 + $0x2f0] sm:$0xff] %v1393
    %1524 = vst [vmem:[#allocation2 + $0x2f8] sm:$0xff] %v1422
    %1525 = vst [vmem:[#allocation2 + $0x300] sm:$0xff] %v990
    %1526 = vst [vmem:[#allocation2 + $0x308] sm:$0xff] %v1019
    %1527 = vst [vmem:[#allocation2 + $0x310] sm:$0xff] %v1048
    %1528 = vst [vmem:[#allocation2 + $0x318] sm:$0xff] %v1077
    %1529 = vst [vmem:[#allocation2 + $0x320] sm:$0xff] %v1106
    %1530 = vst [vmem:[#allocation2 + $0x328] sm:$0xff] %v1135
    %1531 = vst [vmem:[#allocation2 + $0x330] sm:$0xff] %v1164
    %1532 = vst [vmem:[#allocation2 + $0x338] sm:$0xff] %v1193
    %1533 = vst [vmem:[#allocation2 + $0x340] sm:$0xff] %v1222
    %1534 = vst [vmem:[#allocation2 + $0x348] sm:$0xff] %v1251
    %1535 = vst [vmem:[#allocation2 + $0x350] sm:$0xff] %v1280
    %1536 = vst [vmem:[#allocation2 + $0x358] sm:$0xff] %v1309
    %1537 = vst [vmem:[#allocation2 + $0x360] sm:$0xff] %v1338
    %1538 = vst [vmem:[#allocation2 + $0x368] sm:$0xff] %v1367
    %1539 = vst [vmem:[#allocation2 + $0x370] sm:$0xff] %v1396
    %1540 = vst [vmem:[#allocation2 + $0x378] sm:$0xff] %v1425
    %1541 = vst [vmem:[#allocation2 + $0x380] sm:$0xff] %v992
    %1542 = vst [vmem:[#allocation2 + $0x388] sm:$0xff] %v1021
    %1543 = vst [vmem:[#allocation2 + $0x390] sm:$0xff] %v1050
    %1544 = vst [vmem:[#allocation2 + $0x398] sm:$0xff] %v1079
    %1545 = vst [vmem:[#allocation2 + $0x3a0] sm:$0xff] %v1108
    %1546 = vst [vmem:[#allocation2 + $0x3a8] sm:$0xff] %v1137
    %1547 = vst [vmem:[#allocation2 + $0x3b0] sm:$0xff] %v1166
    %1548 = vst [vmem:[#allocation2 + $0x3b8] sm:$0xff] %v1195
    %1549 = vst [vmem:[#allocation2 + $0x3c0] sm:$0xff] %v1224
    %1550 = vst [vmem:[#allocation2 + $0x3c8] sm:$0xff] %v1253
    %1551 = vst [vmem:[#allocation2 + $0x3d0] sm:$0xff] %v1282
    %1552 = vst [vmem:[#allocation2 + $0x3d8] sm:$0xff] %v1311
    %1553 = vst [vmem:[#allocation2 + $0x3e0] sm:$0xff] %v1340
    %1554 = vst [vmem:[#allocation2 + $0x3e8] sm:$0xff] %v1369
    %1555 = vst [vmem:[#allocation2 + $0x3f0] sm:$0xff] %v1398
    %1556 = vst [vmem:[#allocation2 + $0x3f8] sm:$0xff] %v1427
    %v1557 = vld [vmem:[#allocation2] sm:$0xff]
    %v1558 = vld [vmem:[#allocation2 + $0x8] sm:$0xff]
    %v1559 = vld [vmem:[#allocation2 + $0x10] sm:$0xff]
    %v1560 = vld [vmem:[#allocation2 + $0x18] sm:$0xff]
    %v1561 = vld [vmem:[#allocation2 + $0x20] sm:$0xff]
    %v1562 = vld [vmem:[#allocation2 + $0x28] sm:$0xff]
    %v1563 = vld [vmem:[#allocation2 + $0x30] sm:$0xff]
    %v1564 = vld [vmem:[#allocation2 + $0x38] sm:$0xff]
    %v1565 = vld [vmem:[#allocation5] sm:$0xff]
    %v1566 = vld [vmem:[#allocation5 + $0x8] sm:$0xff]
    %v1567 = vld [vmem:[#allocation5 + $0x10] sm:$0xff]
    %v1568 = vld [vmem:[#allocation5 + $0x18] sm:$0xff]
    %v1569 = vld [vmem:[#allocation5 + $0x20] sm:$0xff]
    %v1570 = vld [vmem:[#allocation5 + $0x28] sm:$0xff]
    %v1571 = vld [vmem:[#allocation5 + $0x30] sm:$0xff]
    %v1572 = vld [vmem:[#allocation5 + $0x38] sm:$0xff]
    %v1573 = vld [vmem:[#allocation5 + $0x40] sm:$0xff]
    %v1574 = vld [vmem:[#allocation5 + $0x48] sm:$0xff]
    %v1575 = vld [vmem:[#allocation5 + $0x50] sm:$0xff]
    %v1576 = vld [vmem:[#allocation5 + $0x58] sm:$0xff]
    %v1577 = vld [vmem:[#allocation5 + $0x60] sm:$0xff]
    %v1578 = vld [vmem:[#allocation5 + $0x68] sm:$0xff]
    %v1579 = vld [vmem:[#allocation5 + $0x70] sm:$0xff]
    %v1580 = vld [vmem:[#allocation5 + $0x78] sm:$0xff]
    %v1581 = vld [vmem:[#allocation5 + $0x80] sm:$0xff]
    %v1582 = vld [vmem:[#allocation5 + $0x88] sm:$0xff]
    %v1583 = vld [vmem:[#allocation5 + $0x90] sm:$0xff]
    %v1584 = vld [vmem:[#allocation5 + $0x98] sm:$0xff]
    %v1585 = vld [vmem:[#allocation5 + $0xa0] sm:$0xff]
    %v1586 = vld [vmem:[#allocation5 + $0xa8] sm:$0xff]
    %v1587 = vld [vmem:[#allocation5 + $0xb0] sm:$0xff]
    %v1588 = vld [vmem:[#allocation5 + $0xb8] sm:$0xff]
    %v1589 = vld [vmem:[#allocation5 + $0xc0] sm:$0xff]
    %v1590 = vld [vmem:[#allocation5 + $0xc8] sm:$0xff]
    %v1591 = vld [vmem:[#allocation5 + $0xd0] sm:$0xff]
    %v1592 = vld [vmem:[#allocation5 + $0xd8] sm:$0xff]
    %v1593 = vld [vmem:[#allocation5 + $0xe0] sm:$0xff]
    %v1594 = vld [vmem:[#allocation5 + $0xe8] sm:$0xff]
    %v1595 = vld [vmem:[#allocation5 + $0xf0] sm:$0xff]
    %v1596 = vld [vmem:[#allocation5 + $0xf8] sm:$0xff]
    %v1597 = vld [vmem:[#allocation5 + $0x100] sm:$0xff]
    %v1598 = vld [vmem:[#allocation5 + $0x108] sm:$0xff]
    %v1599 = vld [vmem:[#allocation5 + $0x110] sm:$0xff]
    %v1600 = vld [vmem:[#allocation5 + $0x118] sm:$0xff]
    %v1601 = vld [vmem:[#allocation5 + $0x120] sm:$0xff]
    %v1602 = vld [vmem:[#allocation5 + $0x128] sm:$0xff]
    %v1603 = vld [vmem:[#allocation5 + $0x130] sm:$0xff]
    %v1604 = vld [vmem:[#allocation5 + $0x138] sm:$0xff]
    %v1605 = vld [vmem:[#allocation5 + $0x140] sm:$0xff]
    %v1606 = vld [vmem:[#allocation5 + $0x148] sm:$0xff]
    %v1607 = vld [vmem:[#allocation5 + $0x150] sm:$0xff]
    %v1608 = vld [vmem:[#allocation5 + $0x158] sm:$0xff]
    %v1609 = vld [vmem:[#allocation5 + $0x160] sm:$0xff]
    %v1610 = vld [vmem:[#allocation5 + $0x168] sm:$0xff]
    %v1611 = vld [vmem:[#allocation5 + $0x170] sm:$0xff]
    %v1612 = vld [vmem:[#allocation5 + $0x178] sm:$0xff]
    %v1613 = vld [vmem:[#allocation5 + $0x180] sm:$0xff]
    %v1614 = vld [vmem:[#allocation5 + $0x188] sm:$0xff]
    %v1615 = vld [vmem:[#allocation5 + $0x190] sm:$0xff]
    %v1616 = vld [vmem:[#allocation5 + $0x198] sm:$0xff]
    %v1617 = vld [vmem:[#allocation5 + $0x1a0] sm:$0xff]
    %v1618 = vld [vmem:[#allocation5 + $0x1a8] sm:$0xff]
    %v1619 = vld [vmem:[#allocation5 + $0x1b0] sm:$0xff]
    %v1620 = vld [vmem:[#allocation5 + $0x1b8] sm:$0xff]
    %v1621 = vld [vmem:[#allocation5 + $0x1c0] sm:$0xff]
    %v1622 = vld [vmem:[#allocation5 + $0x1c8] sm:$0xff]
    %v1623 = vld [vmem:[#allocation5 + $0x1d0] sm:$0xff]
    %v1624 = vld [vmem:[#allocation5 + $0x1d8] sm:$0xff]
    %v1625 = vld [vmem:[#allocation5 + $0x1e0] sm:$0xff]
    %v1626 = vld [vmem:[#allocation5 + $0x1e8] sm:$0xff]
    %v1627 = vld [vmem:[#allocation5 + $0x1f0] sm:$0xff]
    %v1628 = vld [vmem:[#allocation5 + $0x1f8] sm:$0xff]
    %v1629 = vld [vmem:[#allocation5 + $0x200] sm:$0xff]
    %v1630 = vld [vmem:[#allocation5 + $0x208] sm:$0xff]
    %v1631 = vld [vmem:[#allocation5 + $0x210] sm:$0xff]
    %v1632 = vld [vmem:[#allocation5 + $0x218] sm:$0xff]
    %v1633 = vld [vmem:[#allocation5 + $0x220] sm:$0xff]
    %v1634 = vld [vmem:[#allocation5 + $0x228] sm:$0xff]
    %v1635 = vld [vmem:[#allocation5 + $0x230] sm:$0xff]
    %v1636 = vld [vmem:[#allocation5 + $0x238] sm:$0xff]
    %v1637 = vld [vmem:[#allocation5 + $0x240] sm:$0xff]
    %v1638 = vld [vmem:[#allocation5 + $0x248] sm:$0xff]
    %v1639 = vld [vmem:[#allocation5 + $0x250] sm:$0xff]
    %v1640 = vld [vmem:[#allocation5 + $0x258] sm:$0xff]
    %v1641 = vld [vmem:[#allocation5 + $0x260] sm:$0xff]
    %v1642 = vld [vmem:[#allocation5 + $0x268] sm:$0xff]
    %v1643 = vld [vmem:[#allocation5 + $0x270] sm:$0xff]
    %v1644 = vld [vmem:[#allocation5 + $0x278] sm:$0xff]
    %v1645 = vld [vmem:[#allocation5 + $0x280] sm:$0xff]
    %v1646 = vld [vmem:[#allocation5 + $0x288] sm:$0xff]
    %v1647 = vld [vmem:[#allocation5 + $0x290] sm:$0xff]
    %v1648 = vld [vmem:[#allocation5 + $0x298] sm:$0xff]
    %v1649 = vld [vmem:[#allocation5 + $0x2a0] sm:$0xff]
    %v1650 = vld [vmem:[#allocation5 + $0x2a8] sm:$0xff]
    %v1651 = vld [vmem:[#allocation5 + $0x2b0] sm:$0xff]
    %v1652 = vld [vmem:[#allocation5 + $0x2b8] sm:$0xff]
    %v1653 = vld [vmem:[#allocation5 + $0x2c0] sm:$0xff]
    %v1654 = vld [vmem:[#allocation5 + $0x2c8] sm:$0xff]
    %v1655 = vld [vmem:[#allocation5 + $0x2d0] sm:$0xff]
    %v1656 = vld [vmem:[#allocation5 + $0x2d8] sm:$0xff]
    %v1657 = vld [vmem:[#allocation5 + $0x2e0] sm:$0xff]
    %v1658 = vld [vmem:[#allocation5 + $0x2e8] sm:$0xff]
    %v1659 = vld [vmem:[#allocation5 + $0x2f0] sm:$0xff]
    %v1660 = vld [vmem:[#allocation5 + $0x2f8] sm:$0xff]
    %v1661 = vld [vmem:[#allocation5 + $0x300] sm:$0xff]
    %v1662 = vld [vmem:[#allocation5 + $0x308] sm:$0xff]
    %v1663 = vld [vmem:[#allocation5 + $0x310] sm:$0xff]
    %v1664 = vld [vmem:[#allocation5 + $0x318] sm:$0xff]
    %v1665 = vld [vmem:[#allocation5 + $0x320] sm:$0xff]
    %v1666 = vld [vmem:[#allocation5 + $0x328] sm:$0xff]
    %v1667 = vld [vmem:[#allocation5 + $0x330] sm:$0xff]
    %v1668 = vld [vmem:[#allocation5 + $0x338] sm:$0xff]
    %v1669 = vld [vmem:[#allocation5 + $0x340] sm:$0xff]
    %v1670 = vld [vmem:[#allocation5 + $0x348] sm:$0xff]
    %v1671 = vld [vmem:[#allocation5 + $0x350] sm:$0xff]
    %v1672 = vld [vmem:[#allocation5 + $0x358] sm:$0xff]
    %v1673 = vld [vmem:[#allocation5 + $0x360] sm:$0xff]
    %v1674 = vld [vmem:[#allocation5 + $0x368] sm:$0xff]
    %v1675 = vld [vmem:[#allocation5 + $0x370] sm:$0xff]
    %v1676 = vld [vmem:[#allocation5 + $0x378] sm:$0xff]
    %v1677 = vld [vmem:[#allocation5 + $0x380] sm:$0xff]
    %v1678 = vld [vmem:[#allocation5 + $0x388] sm:$0xff]
    %v1679 = vld [vmem:[#allocation5 + $0x390] sm:$0xff]
    %v1680 = vld [vmem:[#allocation5 + $0x398] sm:$0xff]
    %v1681 = vld [vmem:[#allocation5 + $0x3a0] sm:$0xff]
    %v1682 = vld [vmem:[#allocation5 + $0x3a8] sm:$0xff]
    %v1683 = vld [vmem:[#allocation5 + $0x3b0] sm:$0xff]
    %v1684 = vld [vmem:[#allocation5 + $0x3b8] sm:$0xff]
    %v1685 = vld [vmem:[#allocation5 + $0x3c0] sm:$0xff]
    %v1686 = vld [vmem:[#allocation5 + $0x3c8] sm:$0xff]
    %v1687 = vld [vmem:[#allocation5 + $0x3d0] sm:$0xff]
    %v1688 = vld [vmem:[#allocation5 + $0x3d8] sm:$0xff]
    %v1689 = vld [vmem:[#allocation5 + $0x3e0] sm:$0xff]
    %v1690 = vld [vmem:[#allocation5 + $0x3e8] sm:$0xff]
    %v1691 = vld [vmem:[#allocation5 + $0x3f0] sm:$0xff]
    %v1692 = vld [vmem:[#allocation5 + $0x3f8] sm:$0xff]
    %v1821 = vunpack.c.l.b16 %v1565
    %v1822 = vunpack.c.h.b16 %v1565
    %v1823 = vunpack.c.l.b16 %v1566
    %v1824 = vunpack.c.h.b16 %v1566
    %v1825 = vunpack.c.l.b16 %v1567
    %v1826 = vunpack.c.h.b16 %v1567
    %v1827 = vunpack.c.l.b16 %v1568
    %v1828 = vunpack.c.h.b16 %v1568
    %v1829 = vunpack.c.l.b16 %v1569
    %v1830 = vunpack.c.h.b16 %v1569
    %v1831 = vunpack.c.l.b16 %v1570
    %v1832 = vunpack.c.h.b16 %v1570
    %v1833 = vunpack.c.l.b16 %v1571
    %v1834 = vunpack.c.h.b16 %v1571
    %v1835 = vunpack.c.l.b16 %v1572
    %v1836 = vunpack.c.h.b16 %v1572
    %v1837 = vunpack.c.l.b16 %v1573
    %v1838 = vunpack.c.h.b16 %v1573
    %v1839 = vunpack.c.l.b16 %v1574
    %v1840 = vunpack.c.h.b16 %v1574
    %v1841 = vunpack.c.l.b16 %v1575
    %v1842 = vunpack.c.h.b16 %v1575
    %v1843 = vunpack.c.l.b16 %v1576
    %v1844 = vunpack.c.h.b16 %v1576
    %v1845 = vunpack.c.l.b16 %v1577
    %v1846 = vunpack.c.h.b16 %v1577
    %v1847 = vunpack.c.l.b16 %v1578
    %v1848 = vunpack.c.h.b16 %v1578
    %v1849 = vunpack.c.l.b16 %v1579
    %v1850 = vunpack.c.h.b16 %v1579
    %v1851 = vunpack.c.l.b16 %v1580
    %v1852 = vunpack.c.h.b16 %v1580
    %v1853 = vunpack.c.l.b16 %v1581
    %v1854 = vunpack.c.h.b16 %v1581
    %v1855 = vunpack.c.l.b16 %v1582
    %v1856 = vunpack.c.h.b16 %v1582
    %v1857 = vunpack.c.l.b16 %v1583
    %v1858 = vunpack.c.h.b16 %v1583
    %v1859 = vunpack.c.l.b16 %v1584
    %v1860 = vunpack.c.h.b16 %v1584
    %v1861 = vunpack.c.l.b16 %v1585
    %v1862 = vunpack.c.h.b16 %v1585
    %v1863 = vunpack.c.l.b16 %v1586
    %v1864 = vunpack.c.h.b16 %v1586
    %v1865 = vunpack.c.l.b16 %v1587
    %v1866 = vunpack.c.h.b16 %v1587
    %v1867 = vunpack.c.l.b16 %v1588
    %v1868 = vunpack.c.h.b16 %v1588
    %v1869 = vunpack.c.l.b16 %v1589
    %v1870 = vunpack.c.h.b16 %v1589
    %v1871 = vunpack.c.l.b16 %v1590
    %v1872 = vunpack.c.h.b16 %v1590
    %v1873 = vunpack.c.l.b16 %v1591
    %v1874 = vunpack.c.h.b16 %v1591
    %v1875 = vunpack.c.l.b16 %v1592
    %v1876 = vunpack.c.h.b16 %v1592
    %v1877 = vunpack.c.l.b16 %v1593
    %v1878 = vunpack.c.h.b16 %v1593
    %v1879 = vunpack.c.l.b16 %v1594
    %v1880 = vunpack.c.h.b16 %v1594
    %v1881 = vunpack.c.l.b16 %v1595
    %v1882 = vunpack.c.h.b16 %v1595
    %v1883 = vunpack.c.l.b16 %v1596
    %v1884 = vunpack.c.h.b16 %v1596
    %v1885 = vunpack.c.l.b16 %v1597
    %v1886 = vunpack.c.h.b16 %v1597
    %v1887 = vunpack.c.l.b16 %v1598
    %v1888 = vunpack.c.h.b16 %v1598
    %v1889 = vunpack.c.l.b16 %v1599
    %v1890 = vunpack.c.h.b16 %v1599
    %v1891 = vunpack.c.l.b16 %v1600
    %v1892 = vunpack.c.h.b16 %v1600
    %v1893 = vunpack.c.l.b16 %v1601
    %v1894 = vunpack.c.h.b16 %v1601
    %v1895 = vunpack.c.l.b16 %v1602
    %v1896 = vunpack.c.h.b16 %v1602
    %v1897 = vunpack.c.l.b16 %v1603
    %v1898 = vunpack.c.h.b16 %v1603
    %v1899 = vunpack.c.l.b16 %v1604
    %v1900 = vunpack.c.h.b16 %v1604
    %v1901 = vunpack.c.l.b16 %v1605
    %v1902 = vunpack.c.h.b16 %v1605
    %v1903 = vunpack.c.l.b16 %v1606
    %v1904 = vunpack.c.h.b16 %v1606
    %v1905 = vunpack.c.l.b16 %v1607
    %v1906 = vunpack.c.h.b16 %v1607
    %v1907 = vunpack.c.l.b16 %v1608
    %v1908 = vunpack.c.h.b16 %v1608
    %v1909 = vunpack.c.l.b16 %v1609
    %v1910 = vunpack.c.h.b16 %v1609
    %v1911 = vunpack.c.l.b16 %v1610
    %v1912 = vunpack.c.h.b16 %v1610
    %v1913 = vunpack.c.l.b16 %v1611
    %v1914 = vunpack.c.h.b16 %v1611
    %v1915 = vunpack.c.l.b16 %v1612
    %v1916 = vunpack.c.h.b16 %v1612
    %v1917 = vunpack.c.l.b16 %v1613
    %v1918 = vunpack.c.h.b16 %v1613
    %v1919 = vunpack.c.l.b16 %v1614
    %v1920 = vunpack.c.h.b16 %v1614
    %v1921 = vunpack.c.l.b16 %v1615
    %v1922 = vunpack.c.h.b16 %v1615
    %v1923 = vunpack.c.l.b16 %v1616
    %v1924 = vunpack.c.h.b16 %v1616
    %v1925 = vunpack.c.l.b16 %v1617
    %v1926 = vunpack.c.h.b16 %v1617
    %v1927 = vunpack.c.l.b16 %v1618
    %v1928 = vunpack.c.h.b16 %v1618
    %v1929 = vunpack.c.l.b16 %v1619
    %v1930 = vunpack.c.h.b16 %v1619
    %v1931 = vunpack.c.l.b16 %v1620
    %v1932 = vunpack.c.h.b16 %v1620
    %v1933 = vunpack.c.l.b16 %v1621
    %v1934 = vunpack.c.h.b16 %v1621
    %v1935 = vunpack.c.l.b16 %v1622
    %v1936 = vunpack.c.h.b16 %v1622
    %v1937 = vunpack.c.l.b16 %v1623
    %v1938 = vunpack.c.h.b16 %v1623
    %v1939 = vunpack.c.l.b16 %v1624
    %v1940 = vunpack.c.h.b16 %v1624
    %v1941 = vunpack.c.l.b16 %v1625
    %v1942 = vunpack.c.h.b16 %v1625
    %v1943 = vunpack.c.l.b16 %v1626
    %v1944 = vunpack.c.h.b16 %v1626
    %v1945 = vunpack.c.l.b16 %v1627
    %v1946 = vunpack.c.h.b16 %v1627
    %v1947 = vunpack.c.l.b16 %v1628
    %v1948 = vunpack.c.h.b16 %v1628
    %v1949 = vunpack.c.l.b16 %v1629
    %v1950 = vunpack.c.h.b16 %v1629
    %v1951 = vunpack.c.l.b16 %v1630
    %v1952 = vunpack.c.h.b16 %v1630
    %v1953 = vunpack.c.l.b16 %v1631
    %v1954 = vunpack.c.h.b16 %v1631
    %v1955 = vunpack.c.l.b16 %v1632
    %v1956 = vunpack.c.h.b16 %v1632
    %v1957 = vunpack.c.l.b16 %v1633
    %v1958 = vunpack.c.h.b16 %v1633
    %v1959 = vunpack.c.l.b16 %v1634
    %v1960 = vunpack.c.h.b16 %v1634
    %v1961 = vunpack.c.l.b16 %v1635
    %v1962 = vunpack.c.h.b16 %v1635
    %v1963 = vunpack.c.l.b16 %v1636
    %v1964 = vunpack.c.h.b16 %v1636
    %v1965 = vunpack.c.l.b16 %v1637
    %v1966 = vunpack.c.h.b16 %v1637
    %v1967 = vunpack.c.l.b16 %v1638
    %v1968 = vunpack.c.h.b16 %v1638
    %v1969 = vunpack.c.l.b16 %v1639
    %v1970 = vunpack.c.h.b16 %v1639
    %v1971 = vunpack.c.l.b16 %v1640
    %v1972 = vunpack.c.h.b16 %v1640
    %v1973 = vunpack.c.l.b16 %v1641
    %v1974 = vunpack.c.h.b16 %v1641
    %v1975 = vunpack.c.l.b16 %v1642
    %v1976 = vunpack.c.h.b16 %v1642
    %v1977 = vunpack.c.l.b16 %v1643
    %v1978 = vunpack.c.h.b16 %v1643
    %v1979 = vunpack.c.l.b16 %v1644
    %v1980 = vunpack.c.h.b16 %v1644
    %v1981 = vunpack.c.l.b16 %v1645
    %v1982 = vunpack.c.h.b16 %v1645
    %v1983 = vunpack.c.l.b16 %v1646
    %v1984 = vunpack.c.h.b16 %v1646
    %v1985 = vunpack.c.l.b16 %v1647
    %v1986 = vunpack.c.h.b16 %v1647
    %v1987 = vunpack.c.l.b16 %v1648
    %v1988 = vunpack.c.h.b16 %v1648
    %v1989 = vunpack.c.l.b16 %v1649
    %v1990 = vunpack.c.h.b16 %v1649
    %v1991 = vunpack.c.l.b16 %v1650
    %v1992 = vunpack.c.h.b16 %v1650
    %v1993 = vunpack.c.l.b16 %v1651
    %v1994 = vunpack.c.h.b16 %v1651
    %v1995 = vunpack.c.l.b16 %v1652
    %v1996 = vunpack.c.h.b16 %v1652
    %v1997 = vunpack.c.l.b16 %v1653
    %v1998 = vunpack.c.h.b16 %v1653
    %v1999 = vunpack.c.l.b16 %v1654
    %v2000 = vunpack.c.h.b16 %v1654
    %v2001 = vunpack.c.l.b16 %v1655
    %v2002 = vunpack.c.h.b16 %v1655
    %v2003 = vunpack.c.l.b16 %v1656
    %v2004 = vunpack.c.h.b16 %v1656
    %v2005 = vunpack.c.l.b16 %v1657
    %v2006 = vunpack.c.h.b16 %v1657
    %v2007 = vunpack.c.l.b16 %v1658
    %v2008 = vunpack.c.h.b16 %v1658
    %v2009 = vunpack.c.l.b16 %v1659
    %v2010 = vunpack.c.h.b16 %v1659
    %v2011 = vunpack.c.l.b16 %v1660
    %v2012 = vunpack.c.h.b16 %v1660
    %v2013 = vunpack.c.l.b16 %v1661
    %v2014 = vunpack.c.h.b16 %v1661
    %v2015 = vunpack.c.l.b16 %v1662
    %v2016 = vunpack.c.h.b16 %v1662
    %v2017 = vunpack.c.l.b16 %v1663
    %v2018 = vunpack.c.h.b16 %v1663
    %v2019 = vunpack.c.l.b16 %v1664
    %v2020 = vunpack.c.h.b16 %v1664
    %v2021 = vunpack.c.l.b16 %v1665
    %v2022 = vunpack.c.h.b16 %v1665
    %v2023 = vunpack.c.l.b16 %v1666
    %v2024 = vunpack.c.h.b16 %v1666
    %v2025 = vunpack.c.l.b16 %v1667
    %v2026 = vunpack.c.h.b16 %v1667
    %v2027 = vunpack.c.l.b16 %v1668
    %v2028 = vunpack.c.h.b16 %v1668
    %v2029 = vunpack.c.l.b16 %v1669
    %v2030 = vunpack.c.h.b16 %v1669
    %v2031 = vunpack.c.l.b16 %v1670
    %v2032 = vunpack.c.h.b16 %v1670
    %v2033 = vunpack.c.l.b16 %v1671
    %v2034 = vunpack.c.h.b16 %v1671
    %v2035 = vunpack.c.l.b16 %v1672
    %v2036 = vunpack.c.h.b16 %v1672
    %v2037 = vunpack.c.l.b16 %v1673
    %v2038 = vunpack.c.h.b16 %v1673
    %v2039 = vunpack.c.l.b16 %v1674
    %v2040 = vunpack.c.h.b16 %v1674
    %v2041 = vunpack.c.l.b16 %v1675
    %v2042 = vunpack.c.h.b16 %v1675
    %v2043 = vunpack.c.l.b16 %v1676
    %v2044 = vunpack.c.h.b16 %v1676
    %v2045 = vunpack.c.l.b16 %v1677
    %v2046 = vunpack.c.h.b16 %v1677
    %v2047 = vunpack.c.l.b16 %v1678
    %v2048 = vunpack.c.h.b16 %v1678
    %v2049 = vunpack.c.l.b16 %v1679
    %v2050 = vunpack.c.h.b16 %v1679
    %v2051 = vunpack.c.l.b16 %v1680
    %v2052 = vunpack.c.h.b16 %v1680
    %v2053 = vunpack.c.l.b16 %v1681
    %v2054 = vunpack.c.h.b16 %v1681
    %v2055 = vunpack.c.l.b16 %v1682
    %v2056 = vunpack.c.h.b16 %v1682
    %v2057 = vunpack.c.l.b16 %v1683
    %v2058 = vunpack.c.h.b16 %v1683
    %v2059 = vunpack.c.l.b16 %v1684
    %v2060 = vunpack.c.h.b16 %v1684
    %v2061 = vunpack.c.l.b16 %v1685
    %v2062 = vunpack.c.h.b16 %v1685
    %v2063 = vunpack.c.l.b16 %v1686
    %v2064 = vunpack.c.h.b16 %v1686
    %v2065 = vunpack.c.l.b16 %v1687
    %v2066 = vunpack.c.h.b16 %v1687
    %v2067 = vunpack.c.l.b16 %v1688
    %v2068 = vunpack.c.h.b16 %v1688
    %v2069 = vunpack.c.l.b16 %v1689
    %v2070 = vunpack.c.h.b16 %v1689
    %v2071 = vunpack.c.l.b16 %v1690
    %v2072 = vunpack.c.h.b16 %v1690
    %v2073 = vunpack.c.l.b16 %v1691
    %v2074 = vunpack.c.h.b16 %v1691
    %v2075 = vunpack.c.l.b16 %v1692
    %v2076 = vunpack.c.h.b16 %v1692
    %v2077 = vpack.c.b16 %v1829, %v1821
    %v2078 = vpack.c.b16 %v1830, %v1822
    %v2079 = vpack.c.b16 %v1831, %v1823
    %v2080 = vpack.c.b16 %v1832, %v1824
    %v2081 = vpack.c.b16 %v1833, %v1825
    %v2082 = vpack.c.b16 %v1834, %v1826
    %v2083 = vpack.c.b16 %v1835, %v1827
    %v2084 = vpack.c.b16 %v1836, %v1828
    %v2085 = vpack.c.b16 %v1845, %v1837
    %v2086 = vpack.c.b16 %v1846, %v1838
    %v2087 = vpack.c.b16 %v1847, %v1839
    %v2088 = vpack.c.b16 %v1848, %v1840
    %v2089 = vpack.c.b16 %v1849, %v1841
    %v2090 = vpack.c.b16 %v1850, %v1842
    %v2091 = vpack.c.b16 %v1851, %v1843
    %v2092 = vpack.c.b16 %v1852, %v1844
    %v2093 = vpack.c.b16 %v1861, %v1853
    %v2094 = vpack.c.b16 %v1862, %v1854
    %v2095 = vpack.c.b16 %v1863, %v1855
    %v2096 = vpack.c.b16 %v1864, %v1856
    %v2097 = vpack.c.b16 %v1865, %v1857
    %v2098 = vpack.c.b16 %v1866, %v1858
    %v2099 = vpack.c.b16 %v1867, %v1859
    %v2100 = vpack.c.b16 %v1868, %v1860
    %v2101 = vpack.c.b16 %v1877, %v1869
    %v2102 = vpack.c.b16 %v1878, %v1870
    %v2103 = vpack.c.b16 %v1879, %v1871
    %v2104 = vpack.c.b16 %v1880, %v1872
    %v2105 = vpack.c.b16 %v1881, %v1873
    %v2106 = vpack.c.b16 %v1882, %v1874
    %v2107 = vpack.c.b16 %v1883, %v1875
    %v2108 = vpack.c.b16 %v1884, %v1876
    %v2109 = vpack.c.b16 %v1893, %v1885
    %v2110 = vpack.c.b16 %v1894, %v1886
    %v2111 = vpack.c.b16 %v1895, %v1887
    %v2112 = vpack.c.b16 %v1896, %v1888
    %v2113 = vpack.c.b16 %v1897, %v1889
    %v2114 = vpack.c.b16 %v1898, %v1890
    %v2115 = vpack.c.b16 %v1899, %v1891
    %v2116 = vpack.c.b16 %v1900, %v1892
    %v2117 = vpack.c.b16 %v1909, %v1901
    %v2118 = vpack.c.b16 %v1910, %v1902
    %v2119 = vpack.c.b16 %v1911, %v1903
    %v2120 = vpack.c.b16 %v1912, %v1904
    %v2121 = vpack.c.b16 %v1913, %v1905
    %v2122 = vpack.c.b16 %v1914, %v1906
    %v2123 = vpack.c.b16 %v1915, %v1907
    %v2124 = vpack.c.b16 %v1916, %v1908
    %v2125 = vpack.c.b16 %v1925, %v1917
    %v2126 = vpack.c.b16 %v1926, %v1918
    %v2127 = vpack.c.b16 %v1927, %v1919
    %v2128 = vpack.c.b16 %v1928, %v1920
    %v2129 = vpack.c.b16 %v1929, %v1921
    %v2130 = vpack.c.b16 %v1930, %v1922
    %v2131 = vpack.c.b16 %v1931, %v1923
    %v2132 = vpack.c.b16 %v1932, %v1924
    %v2133 = vpack.c.b16 %v1941, %v1933
    %v2134 = vpack.c.b16 %v1942, %v1934
    %v2135 = vpack.c.b16 %v1943, %v1935
    %v2136 = vpack.c.b16 %v1944, %v1936
    %v2137 = vpack.c.b16 %v1945, %v1937
    %v2138 = vpack.c.b16 %v1946, %v1938
    %v2139 = vpack.c.b16 %v1947, %v1939
    %v2140 = vpack.c.b16 %v1948, %v1940
    %v2141 = vpack.c.b16 %v1957, %v1949
    %v2142 = vpack.c.b16 %v1958, %v1950
    %v2143 = vpack.c.b16 %v1959, %v1951
    %v2144 = vpack.c.b16 %v1960, %v1952
    %v2145 = vpack.c.b16 %v1961, %v1953
    %v2146 = vpack.c.b16 %v1962, %v1954
    %v2147 = vpack.c.b16 %v1963, %v1955
    %v2148 = vpack.c.b16 %v1964, %v1956
    %v2149 = vpack.c.b16 %v1973, %v1965
    %v2150 = vpack.c.b16 %v1974, %v1966
    %v2151 = vpack.c.b16 %v1975, %v1967
    %v2152 = vpack.c.b16 %v1976, %v1968
    %v2153 = vpack.c.b16 %v1977, %v1969
    %v2154 = vpack.c.b16 %v1978, %v1970
    %v2155 = vpack.c.b16 %v1979, %v1971
    %v2156 = vpack.c.b16 %v1980, %v1972
    %v2157 = vpack.c.b16 %v1989, %v1981
    %v2158 = vpack.c.b16 %v1990, %v1982
    %v2159 = vpack.c.b16 %v1991, %v1983
    %v2160 = vpack.c.b16 %v1992, %v1984
    %v2161 = vpack.c.b16 %v1993, %v1985
    %v2162 = vpack.c.b16 %v1994, %v1986
    %v2163 = vpack.c.b16 %v1995, %v1987
    %v2164 = vpack.c.b16 %v1996, %v1988
    %v2165 = vpack.c.b16 %v2005, %v1997
    %v2166 = vpack.c.b16 %v2006, %v1998
    %v2167 = vpack.c.b16 %v2007, %v1999
    %v2168 = vpack.c.b16 %v2008, %v2000
    %v2169 = vpack.c.b16 %v2009, %v2001
    %v2170 = vpack.c.b16 %v2010, %v2002
    %v2171 = vpack.c.b16 %v2011, %v2003
    %v2172 = vpack.c.b16 %v2012, %v2004
    %v2173 = vpack.c.b16 %v2021, %v2013
    %v2174 = vpack.c.b16 %v2022, %v2014
    %v2175 = vpack.c.b16 %v2023, %v2015
    %v2176 = vpack.c.b16 %v2024, %v2016
    %v2177 = vpack.c.b16 %v2025, %v2017
    %v2178 = vpack.c.b16 %v2026, %v2018
    %v2179 = vpack.c.b16 %v2027, %v2019
    %v2180 = vpack.c.b16 %v2028, %v2020
    %v2181 = vpack.c.b16 %v2037, %v2029
    %v2182 = vpack.c.b16 %v2038, %v2030
    %v2183 = vpack.c.b16 %v2039, %v2031
    %v2184 = vpack.c.b16 %v2040, %v2032
    %v2185 = vpack.c.b16 %v2041, %v2033
    %v2186 = vpack.c.b16 %v2042, %v2034
    %v2187 = vpack.c.b16 %v2043, %v2035
    %v2188 = vpack.c.b16 %v2044, %v2036
    %v2189 = vpack.c.b16 %v2053, %v2045
    %v2190 = vpack.c.b16 %v2054, %v2046
    %v2191 = vpack.c.b16 %v2055, %v2047
    %v2192 = vpack.c.b16 %v2056, %v2048
    %v2193 = vpack.c.b16 %v2057, %v2049
    %v2194 = vpack.c.b16 %v2058, %v2050
    %v2195 = vpack.c.b16 %v2059, %v2051
    %v2196 = vpack.c.b16 %v2060, %v2052
    %v2197 = vpack.c.b16 %v2069, %v2061
    %v2198 = vpack.c.b16 %v2070, %v2062
    %v2199 = vpack.c.b16 %v2071, %v2063
    %v2200 = vpack.c.b16 %v2072, %v2064
    %v2201 = vpack.c.b16 %v2073, %v2065
    %v2202 = vpack.c.b16 %v2074, %v2066
    %v2203 = vpack.c.b16 %v2075, %v2067
    %v2204 = vpack.c.b16 %v2076, %v2068
    %2333 = vmatpush.bf16.msra.mxu0 %v2133
    %2334 = vmatpush.bf16.msra.mxu0 %v2125
    %2335 = vmatpush.bf16.msra.mxu0 %v2117
    %2336 = vmatpush.bf16.msra.mxu0 %v2109
    %2337 = vmatpush.bf16.msra.mxu0 %v2101
    %2338 = vmatpush.bf16.msra.mxu0 %v2093
    %2339 = vmatpush.bf16.msra.mxu0 %v2085
    %2340 = vmatpush.bf16.msra.mxu0 %v2077
    %2341 = vmatmul.bf16.gmra.mxu0 0
    %v2342 = vpop.f32.mrf.mxu0
    %v2343 = vadd.f32 0.0, %v2342
    %v2344 = vpop.f32.mrf.mxu0
    %2345 = vdwg.mxu0
    %2346 = vmatpush.bf16.msra.mxu0 %v2197
    %2347 = vmatpush.bf16.msra.mxu0 %v2189
    %2348 = vmatpush.bf16.msra.mxu0 %v2181
    %2349 = vmatpush.bf16.msra.mxu0 %v2173
    %2350 = vmatpush.bf16.msra.mxu0 %v2165
    %2351 = vmatpush.bf16.msra.mxu0 %v2157
    %2352 = vmatpush.bf16.msra.mxu0 %v2149
    %2353 = vmatpush.bf16.msra.mxu0 %v2141
    %2354 = vmatmul.bf16.gmra.mxu0 0
    %v2355 = vpop.f32.mrf.mxu0
    %v2356 = vadd.f32 %v2343, %v2355
    %v2357 = vpop.f32.mrf.mxu0
    %2358 = vdwg.mxu0
    %2359 = vmatpush.bf16.msra.mxu0 %v2134
    %2360 = vmatpush.bf16.msra.mxu0 %v2126
    %2361 = vmatpush.bf16.msra.mxu0 %v2118
    %2362 = vmatpush.bf16.msra.mxu0 %v2110
    %2363 = vmatpush.bf16.msra.mxu0 %v2102
    %2364 = vmatpush.bf16.msra.mxu0 %v2094
    %2365 = vmatpush.bf16.msra.mxu0 %v2086
    %2366 = vmatpush.bf16.msra.mxu0 %v2078
    %2367 = vmatmul.bf16.gmra.mxu0 0
    %v2368 = vpop.f32.mrf.mxu0
    %v2369 = vadd.f32 0.0, %v2368
    %v2370 = vpop.f32.mrf.mxu0
    %2371 = vdwg.mxu0
    %2372 = vmatpush.bf16.msra.mxu0 %v2198
    %2373 = vmatpush.bf16.msra.mxu0 %v2190
    %2374 = vmatpush.bf16.msra.mxu0 %v2182
    %2375 = vmatpush.bf16.msra.mxu0 %v2174
    %2376 = vmatpush.bf16.msra.mxu0 %v2166
    %2377 = vmatpush.bf16.msra.mxu0 %v2158
    %2378 = vmatpush.bf16.msra.mxu0 %v2150
    %2379 = vmatpush.bf16.msra.mxu0 %v2142
    %2380 = vmatmul.bf16.gmra.mxu0 0
    %v2381 = vpop.f32.mrf.mxu0
    %v2382 = vadd.f32 %v2369, %v2381
    %v2383 = vpop.f32.mrf.mxu0
    %2384 = vdwg.mxu0
    %2385 = vmatpush.bf16.msra.mxu0 %v2135
    %2386 = vmatpush.bf16.msra.mxu0 %v2127
    %2387 = vmatpush.bf16.msra.mxu0 %v2119
    %2388 = vmatpush.bf16.msra.mxu0 %v2111
    %2389 = vmatpush.bf16.msra.mxu0 %v2103
    %2390 = vmatpush.bf16.msra.mxu0 %v2095
    %2391 = vmatpush.bf16.msra.mxu0 %v2087
    %2392 = vmatpush.bf16.msra.mxu0 %v2079
    %2393 = vmatmul.bf16.gmra.mxu0 0
    %v2394 = vpop.f32.mrf.mxu0
    %v2395 = vadd.f32 0.0, %v2394
    %v2396 = vpop.f32.mrf.mxu0
    %2397 = vdwg.mxu0
    %2398 = vmatpush.bf16.msra.mxu0 %v2199
    %2399 = vmatpush.bf16.msra.mxu0 %v2191
    %2400 = vmatpush.bf16.msra.mxu0 %v2183
    %2401 = vmatpush.bf16.msra.mxu0 %v2175
    %2402 = vmatpush.bf16.msra.mxu0 %v2167
    %2403 = vmatpush.bf16.msra.mxu0 %v2159
    %2404 = vmatpush.bf16.msra.mxu0 %v2151
    %2405 = vmatpush.bf16.msra.mxu0 %v2143
    %2406 = vmatmul.bf16.gmra.mxu0 0
    %v2407 = vpop.f32.mrf.mxu0
    %v2408 = vadd.f32 %v2395, %v2407
    %v2409 = vpop.f32.mrf.mxu0
    %2410 = vdwg.mxu0
    %2411 = vmatpush.bf16.msra.mxu0 %v2136
    %2412 = vmatpush.bf16.msra.mxu0 %v2128
    %2413 = vmatpush.bf16.msra.mxu0 %v2120
    %2414 = vmatpush.bf16.msra.mxu0 %v2112
    %2415 = vmatpush.bf16.msra.mxu0 %v2104
    %2416 = vmatpush.bf16.msra.mxu0 %v2096
    %2417 = vmatpush.bf16.msra.mxu0 %v2088
    %2418 = vmatpush.bf16.msra.mxu0 %v2080
    %2419 = vmatmul.bf16.gmra.mxu0 0
    %v2420 = vpop.f32.mrf.mxu0
    %v2421 = vadd.f32 0.0, %v2420
    %v2422 = vpop.f32.mrf.mxu0
    %2423 = vdwg.mxu0
    %2424 = vmatpush.bf16.msra.mxu0 %v2200
    %2425 = vmatpush.bf16.msra.mxu0 %v2192
    %2426 = vmatpush.bf16.msra.mxu0 %v2184
    %2427 = vmatpush.bf16.msra.mxu0 %v2176
    %2428 = vmatpush.bf16.msra.mxu0 %v2168
    %2429 = vmatpush.bf16.msra.mxu0 %v2160
    %2430 = vmatpush.bf16.msra.mxu0 %v2152
    %2431 = vmatpush.bf16.msra.mxu0 %v2144
    %2432 = vmatmul.bf16.gmra.mxu0 0
    %v2433 = vpop.f32.mrf.mxu0
    %v2434 = vadd.f32 %v2421, %v2433
    %v2435 = vpop.f32.mrf.mxu0
    %2436 = vdwg.mxu0
    %2437 = vmatpush.bf16.msra.mxu0 %v2137
    %2438 = vmatpush.bf16.msra.mxu0 %v2129
    %2439 = vmatpush.bf16.msra.mxu0 %v2121
    %2440 = vmatpush.bf16.msra.mxu0 %v2113
    %2441 = vmatpush.bf16.msra.mxu0 %v2105
    %2442 = vmatpush.bf16.msra.mxu0 %v2097
    %2443 = vmatpush.bf16.msra.mxu0 %v2089
    %2444 = vmatpush.bf16.msra.mxu0 %v2081
    %2445 = vmatmul.bf16.gmra.mxu0 0
    %v2446 = vpop.f32.mrf.mxu0
    %v2447 = vadd.f32 0.0, %v2446
    %v2448 = vpop.f32.mrf.mxu0
    %2449 = vdwg.mxu0
    %2450 = vmatpush.bf16.msra.mxu0 %v2201
    %2451 = vmatpush.bf16.msra.mxu0 %v2193
    %2452 = vmatpush.bf16.msra.mxu0 %v2185
    %2453 = vmatpush.bf16.msra.mxu0 %v2177
    %2454 = vmatpush.bf16.msra.mxu0 %v2169
    %2455 = vmatpush.bf16.msra.mxu0 %v2161
    %2456 = vmatpush.bf16.msra.mxu0 %v2153
    %2457 = vmatpush.bf16.msra.mxu0 %v2145
    %2458 = vmatmul.bf16.gmra.mxu0 0
    %v2459 = vpop.f32.mrf.mxu0
    %v2460 = vadd.f32 %v2447, %v2459
    %v2461 = vpop.f32.mrf.mxu0
    %2462 = vdwg.mxu0
    %2463 = vmatpush.bf16.msra.mxu0 %v2138
    %2464 = vmatpush.bf16.msra.mxu0 %v2130
    %2465 = vmatpush.bf16.msra.mxu0 %v2122
    %2466 = vmatpush.bf16.msra.mxu0 %v2114
    %2467 = vmatpush.bf16.msra.mxu0 %v2106
    %2468 = vmatpush.bf16.msra.mxu0 %v2098
    %2469 = vmatpush.bf16.msra.mxu0 %v2090
    %2470 = vmatpush.bf16.msra.mxu0 %v2082
    %2471 = vmatmul.bf16.gmra.mxu0 0
    %v2472 = vpop.f32.mrf.mxu0
    %v2473 = vadd.f32 0.0, %v2472
    %v2474 = vpop.f32.mrf.mxu0
    %2475 = vdwg.mxu0
    %2476 = vmatpush.bf16.msra.mxu0 %v2202
    %2477 = vmatpush.bf16.msra.mxu0 %v2194
    %2478 = vmatpush.bf16.msra.mxu0 %v2186
    %2479 = vmatpush.bf16.msra.mxu0 %v2178
    %2480 = vmatpush.bf16.msra.mxu0 %v2170
    %2481 = vmatpush.bf16.msra.mxu0 %v2162
    %2482 = vmatpush.bf16.msra.mxu0 %v2154
    %2483 = vmatpush.bf16.msra.mxu0 %v2146
    %2484 = vmatmul.bf16.gmra.mxu0 0
    %v2485 = vpop.f32.mrf.mxu0
    %v2486 = vadd.f32 %v2473, %v2485
    %v2487 = vpop.f32.mrf.mxu0
    %2488 = vdwg.mxu0
    %2489 = vmatpush.bf16.msra.mxu0 %v2139
    %2490 = vmatpush.bf16.msra.mxu0 %v2131
    %2491 = vmatpush.bf16.msra.mxu0 %v2123
    %2492 = vmatpush.bf16.msra.mxu0 %v2115
    %2493 = vmatpush.bf16.msra.mxu0 %v2107
    %2494 = vmatpush.bf16.msra.mxu0 %v2099
    %2495 = vmatpush.bf16.msra.mxu0 %v2091
    %2496 = vmatpush.bf16.msra.mxu0 %v2083
    %2497 = vmatmul.bf16.gmra.mxu0 0
    %v2498 = vpop.f32.mrf.mxu0
    %v2499 = vadd.f32 0.0, %v2498
    %v2500 = vpop.f32.mrf.mxu0
    %2501 = vdwg.mxu0
    %2502 = vmatpush.bf16.msra.mxu0 %v2203
    %2503 = vmatpush.bf16.msra.mxu0 %v2195
    %2504 = vmatpush.bf16.msra.mxu0 %v2187
    %2505 = vmatpush.bf16.msra.mxu0 %v2179
    %2506 = vmatpush.bf16.msra.mxu0 %v2171
    %2507 = vmatpush.bf16.msra.mxu0 %v2163
    %2508 = vmatpush.bf16.msra.mxu0 %v2155
    %2509 = vmatpush.bf16.msra.mxu0 %v2147
    %2510 = vmatmul.bf16.gmra.mxu0 0
    %v2511 = vpop.f32.mrf.mxu0
    %v2512 = vadd.f32 %v2499, %v2511
    %v2513 = vpop.f32.mrf.mxu0
    %2514 = vdwg.mxu0
    %2515 = vmatpush.bf16.msra.mxu0 %v2140
    %2516 = vmatpush.bf16.msra.mxu0 %v2132
    %2517 = vmatpush.bf16.msra.mxu0 %v2124
    %2518 = vmatpush.bf16.msra.mxu0 %v2116
    %2519 = vmatpush.bf16.msra.mxu0 %v2108
    %2520 = vmatpush.bf16.msra.mxu0 %v2100
    %2521 = vmatpush.bf16.msra.mxu0 %v2092
    %2522 = vmatpush.bf16.msra.mxu0 %v2084
    %2523 = vmatmul.bf16.gmra.mxu0 0
    %v2524 = vpop.f32.mrf.mxu0
    %v2525 = vadd.f32 0.0, %v2524
    %v2526 = vpop.f32.mrf.mxu0
    %2527 = vdwg.mxu0
    %2528 = vmatpush.bf16.msra.mxu0 %v2204
    %2529 = vmatpush.bf16.msra.mxu0 %v2196
    %2530 = vmatpush.bf16.msra.mxu0 %v2188
    %2531 = vmatpush.bf16.msra.mxu0 %v2180
    %2532 = vmatpush.bf16.msra.mxu0 %v2172
    %2533 = vmatpush.bf16.msra.mxu0 %v2164
    %2534 = vmatpush.bf16.msra.mxu0 %v2156
    %2535 = vmatpush.bf16.msra.mxu0 %v2148
    %2536 = vmatmul.bf16.gmra.mxu0 0
    %v2537 = vpop.f32.mrf.mxu0
    %v2538 = vadd.f32 %v2525, %v2537
    %v2539 = vpop.f32.mrf.mxu0
    %2540 = vdwg.mxu0
    %v2541 = vadd.f32 %v1557, %v2356
    %v2542 = vadd.f32 %v1558, %v2382
    %v2543 = vadd.f32 %v1559, %v2408
    %v2544 = vadd.f32 %v1560, %v2434
    %v2545 = vadd.f32 %v1561, %v2460
    %v2546 = vadd.f32 %v1562, %v2486
    %v2547 = vadd.f32 %v1563, %v2512
    %v2548 = vadd.f32 %v1564, %v2538
    %v2549 = vxor.u32 %v2541, 2147483648
    %v2550 = vxor.u32 %v2542, 2147483648
    %v2551 = vmul.f32 %v2549, 1.442695
    %v2552 = vpow.pop %v2551
    %v2553 = vmul.f32 %v2550, 1.442695
    %v2554 = vpow.pop %v2553
    %v2555 = vadd.f32 %v2552, 1.0
    %v2556 = vadd.f32 %v2554, 1.0
    %v2557 = vrcp.pop %v2555
    %v2558 = vmul.f32 %v2555, %v2557
    %v2559 = vsub.f32 1.0, %v2558
    %v2560 = vmul.f32 %v2557, %v2559
    %v2561 = vadd.f32 %v2557, %v2560
    %vm2562 = vweird.f32 %v2555
    %vm2563 = vweird.f32 %v2557
    %vm2564 = vmor %vm2562, %vm2563
    %v2565 = vsel %vm2564, %v2557, %v2561
    %v2566 = vand.u32 2147483647, %v2555
    %vm2567 = vcmp.eq.f32.partialorder %v2566, 8.507059e+37
    %v2568 = vand.u32 %v2555, 2147483648
    %v2569 = vor.u32 1.1754944e-38, %v2568
    %v2570 = vsel %vm2567, %v2569, %v2565
    %v2571 = vmul.f32 1.0, %v2570
    %v2572 = vrcp.pop %v2556
    %v2573 = vmul.f32 %v2556, %v2572
    %v2574 = vsub.f32 1.0, %v2573
    %v2575 = vmul.f32 %v2572, %v2574
    %v2576 = vadd.f32 %v2572, %v2575
    %vm2577 = vweird.f32 %v2556
    %vm2578 = vweird.f32 %v2572
    %vm2579 = vmor %vm2577, %vm2578
    %v2580 = vsel %vm2579, %v2572, %v2576
    %v2581 = vand.u32 2147483647, %v2556
    %vm2582 = vcmp.eq.f32.partialorder %v2581, 8.507059e+37
    %v2583 = vand.u32 %v2556, 2147483648
    %v2584 = vor.u32 1.1754944e-38, %v2583
    %v2585 = vsel %vm2582, %v2584, %v2580
    %v2586 = vmul.f32 1.0, %v2585
    %v2587 = vxor.u32 %v2543, 2147483648
    %v2588 = vxor.u32 %v2544, 2147483648
    %v2589 = vmul.f32 %v2587, 1.442695
    %v2590 = vpow.pop %v2589
    %v2591 = vmul.f32 %v2588, 1.442695
    %v2592 = vpow.pop %v2591
    %v2593 = vadd.f32 %v2590, 1.0
    %v2594 = vadd.f32 %v2592, 1.0
    %v2595 = vrcp.pop %v2593
    %v2596 = vmul.f32 %v2593, %v2595
    %v2597 = vsub.f32 1.0, %v2596
    %v2598 = vmul.f32 %v2595, %v2597
    %v2599 = vadd.f32 %v2595, %v2598
    %vm2600 = vweird.f32 %v2593
    %vm2601 = vweird.f32 %v2595
    %vm2602 = vmor %vm2600, %vm2601
    %v2603 = vsel %vm2602, %v2595, %v2599
    %v2604 = vand.u32 2147483647, %v2593
    %vm2605 = vcmp.eq.f32.partialorder %v2604, 8.507059e+37
    %v2606 = vand.u32 %v2593, 2147483648
    %v2607 = vor.u32 1.1754944e-38, %v2606
    %v2608 = vsel %vm2605, %v2607, %v2603
    %v2609 = vmul.f32 1.0, %v2608
    %v2610 = vrcp.pop %v2594
    %v2611 = vmul.f32 %v2594, %v2610
    %v2612 = vsub.f32 1.0, %v2611
    %v2613 = vmul.f32 %v2610, %v2612
    %v2614 = vadd.f32 %v2610, %v2613
    %vm2615 = vweird.f32 %v2594
    %vm2616 = vweird.f32 %v2610
    %vm2617 = vmor %vm2615, %vm2616
    %v2618 = vsel %vm2617, %v2610, %v2614
    %v2619 = vand.u32 2147483647, %v2594
    %vm2620 = vcmp.eq.f32.partialorder %v2619, 8.507059e+37
    %v2621 = vand.u32 %v2594, 2147483648
    %v2622 = vor.u32 1.1754944e-38, %v2621
    %v2623 = vsel %vm2620, %v2622, %v2618
    %v2624 = vmul.f32 1.0, %v2623
    %v2625 = vtanh.pop %v2545
    %v2626 = vtanh.pop %v2546
    %v2627 = vxor.u32 %v2547, 2147483648
    %v2628 = vxor.u32 %v2548, 2147483648
    %v2629 = vmul.f32 %v2627, 1.442695
    %v2630 = vpow.pop %v2629
    %v2631 = vmul.f32 %v2628, 1.442695
    %v2632 = vpow.pop %v2631
    %v2633 = vadd.f32 %v2630, 1.0
    %v2634 = vadd.f32 %v2632, 1.0
    %v2635 = vrcp.pop %v2633
    %v2636 = vmul.f32 %v2633, %v2635
    %v2637 = vsub.f32 1.0, %v2636
    %v2638 = vmul.f32 %v2635, %v2637
    %v2639 = vadd.f32 %v2635, %v2638
    %vm2640 = vweird.f32 %v2633
    %vm2641 = vweird.f32 %v2635
    %vm2642 = vmor %vm2640, %vm2641
    %v2643 = vsel %vm2642, %v2635, %v2639
    %v2644 = vand.u32 2147483647, %v2633
    %vm2645 = vcmp.eq.f32.partialorder %v2644, 8.507059e+37
    %v2646 = vand.u32 %v2633, 2147483648
    %v2647 = vor.u32 1.1754944e-38, %v2646
    %v2648 = vsel %vm2645, %v2647, %v2643
    %v2649 = vmul.f32 1.0, %v2648
    %v2650 = vrcp.pop %v2634
    %v2651 = vmul.f32 %v2634, %v2650
    %v2652 = vsub.f32 1.0, %v2651
    %v2653 = vmul.f32 %v2650, %v2652
    %v2654 = vadd.f32 %v2650, %v2653
    %vm2655 = vweird.f32 %v2634
    %vm2656 = vweird.f32 %v2650
    %vm2657 = vmor %vm2655, %vm2656
    %v2658 = vsel %vm2657, %v2650, %v2654
    %v2659 = vand.u32 2147483647, %v2634
    %vm2660 = vcmp.eq.f32.partialorder %v2659, 8.507059e+37
    %v2661 = vand.u32 %v2634, 2147483648
    %v2662 = vor.u32 1.1754944e-38, %v2661
    %v2663 = vsel %vm2660, %v2662, %v2658
    %v2664 = vmul.f32 1.0, %v2663
    %v2665 = vmul.f32 %v2609, 0.0
    %v2666 = vmul.f32 %v2624, 0.0
    %v2667 = vmul.f32 %v2571, %v2625
    %v2668 = vmul.f32 %v2586, %v2626
    %v2669 = vadd.f32 %v2665, %v2667
    %v2670 = vadd.f32 %v2666, %v2668
    %v2671 = vtanh.pop %v2669
    %v2672 = vtanh.pop %v2670
    %v2673 = vmul.f32 %v2649, %v2671
    %v2674 = vmul.f32 %v2664, %v2672
    %v2675 = vld [vmem:[#allocation2 + $0x80] sm:$0xff]
    %v2676 = vld [vmem:[#allocation2 + $0x88] sm:$0xff]
    %v2677 = vld [vmem:[#allocation2 + $0x90] sm:$0xff]
    %v2678 = vld [vmem:[#allocation2 + $0x98] sm:$0xff]
    %v2679 = vld [vmem:[#allocation2 + $0xa0] sm:$0xff]
    %v2680 = vld [vmem:[#allocation2 + $0xa8] sm:$0xff]
    %v2681 = vld [vmem:[#allocation2 + $0xb0] sm:$0xff]
    %v2682 = vld [vmem:[#allocation2 + $0xb8] sm:$0xff]
    %v2683 = vpack.c.bf16 %v2673, %v2673
    %v2684 = vpack.c.bf16 %v2674, %v2674
    %2685 = vmatpush.bf16.msra.mxu0 %v2133
    %2686 = vmatpush.bf16.msra.mxu0 %v2125
    %2687 = vmatpush.bf16.msra.mxu0 %v2117
    %2688 = vmatpush.bf16.msra.mxu0 %v2109
    %2689 = vmatpush.bf16.msra.mxu0 %v2101
    %2690 = vmatpush.bf16.msra.mxu0 %v2093
    %2691 = vmatpush.bf16.msra.mxu0 %v2085
    %2692 = vmatpush.bf16.msra.mxu0 %v2077
    %2693 = vmatmul.bf16.gmra.mxu0 %v2683
    %v2694 = vpop.f32.mrf.mxu0
    %v2695 = vadd.f32 0.0, %v2694
    %v2696 = vpop.f32.mrf.mxu0
    %2697 = vdwg.mxu0
    %2698 = vmatpush.bf16.msra.mxu0 %v2197
    %2699 = vmatpush.bf16.msra.mxu0 %v2189
    %2700 = vmatpush.bf16.msra.mxu0 %v2181
    %2701 = vmatpush.bf16.msra.mxu0 %v2173
    %2702 = vmatpush.bf16.msra.mxu0 %v2165
    %2703 = vmatpush.bf16.msra.mxu0 %v2157
    %2704 = vmatpush.bf16.msra.mxu0 %v2149
    %2705 = vmatpush.bf16.msra.mxu0 %v2141
    %2706 = vmatmul.bf16.gmra.mxu0 %v2684
    %v2707 = vpop.f32.mrf.mxu0
    %v2708 = vadd.f32 %v2695, %v2707
    %v2709 = vpop.f32.mrf.mxu0
    %2710 = vdwg.mxu0
    %2711 = vmatpush.bf16.msra.mxu0 %v2134
    %2712 = vmatpush.bf16.msra.mxu0 %v2126
    %2713 = vmatpush.bf16.msra.mxu0 %v2118
    %2714 = vmatpush.bf16.msra.mxu0 %v2110
    %2715 = vmatpush.bf16.msra.mxu0 %v2102
    %2716 = vmatpush.bf16.msra.mxu0 %v2094
    %2717 = vmatpush.bf16.msra.mxu0 %v2086
    %2718 = vmatpush.bf16.msra.mxu0 %v2078
    %2719 = vmatmul.bf16.gmra.mxu0 %v2683
    %v2720 = vpop.f32.mrf.mxu0
    %v2721 = vadd.f32 0.0, %v2720
    %v2722 = vpop.f32.mrf.mxu0
    %2723 = vdwg.mxu0
    %2724 = vmatpush.bf16.msra.mxu0 %v2198
    %2725 = vmatpush.bf16.msra.mxu0 %v2190
    %2726 = vmatpush.bf16.msra.mxu0 %v2182
    %2727 = vmatpush.bf16.msra.mxu0 %v2174
    %2728 = vmatpush.bf16.msra.mxu0 %v2166
    %2729 = vmatpush.bf16.msra.mxu0 %v2158
    %2730 = vmatpush.bf16.msra.mxu0 %v2150
    %2731 = vmatpush.bf16.msra.mxu0 %v2142
    %2732 = vmatmul.bf16.gmra.mxu0 %v2684
    %v2733 = vpop.f32.mrf.mxu0
    %v2734 = vadd.f32 %v2721, %v2733
    %v2735 = vpop.f32.mrf.mxu0
    %2736 = vdwg.mxu0
    %2737 = vmatpush.bf16.msra.mxu0 %v2135
    %2738 = vmatpush.bf16.msra.mxu0 %v2127
    %2739 = vmatpush.bf16.msra.mxu0 %v2119
    %2740 = vmatpush.bf16.msra.mxu0 %v2111
    %2741 = vmatpush.bf16.msra.mxu0 %v2103
    %2742 = vmatpush.bf16.msra.mxu0 %v2095
    %2743 = vmatpush.bf16.msra.mxu0 %v2087
    %2744 = vmatpush.bf16.msra.mxu0 %v2079
    %2745 = vmatmul.bf16.gmra.mxu0 %v2683
    %v2746 = vpop.f32.mrf.mxu0
    %v2747 = vadd.f32 0.0, %v2746
    %v2748 = vpop.f32.mrf.mxu0
    %2749 = vdwg.mxu0
    %2750 = vmatpush.bf16.msra.mxu0 %v2199
    %2751 = vmatpush.bf16.msra.mxu0 %v2191
    %2752 = vmatpush.bf16.msra.mxu0 %v2183
    %2753 = vmatpush.bf16.msra.mxu0 %v2175
    %2754 = vmatpush.bf16.msra.mxu0 %v2167
    %2755 = vmatpush.bf16.msra.mxu0 %v2159
    %2756 = vmatpush.bf16.msra.mxu0 %v2151
    %2757 = vmatpush.bf16.msra.mxu0 %v2143
    %2758 = vmatmul.bf16.gmra.mxu0 %v2684
    %v2759 = vpop.f32.mrf.mxu0
    %v2760 = vadd.f32 %v2747, %v2759
    %v2761 = vpop.f32.mrf.mxu0
    %2762 = vdwg.mxu0
    %2763 = vmatpush.bf16.msra.mxu0 %v2136
    %2764 = vmatpush.bf16.msra.mxu0 %v2128
    %2765 = vmatpush.bf16.msra.mxu0 %v2120
    %2766 = vmatpush.bf16.msra.mxu0 %v2112
    %2767 = vmatpush.bf16.msra.mxu0 %v2104
    %2768 = vmatpush.bf16.msra.mxu0 %v2096
    %2769 = vmatpush.bf16.msra.mxu0 %v2088
    %2770 = vmatpush.bf16.msra.mxu0 %v2080
    %2771 = vmatmul.bf16.gmra.mxu0 %v2683
    %v2772 = vpop.f32.mrf.mxu0
    %v2773 = vadd.f32 0.0, %v2772
    %v2774 = vpop.f32.mrf.mxu0
    %2775 = vdwg.mxu0
    %2776 = vmatpush.bf16.msra.mxu0 %v2200
    %2777 = vmatpush.bf16.msra.mxu0 %v2192
    %2778 = vmatpush.bf16.msra.mxu0 %v2184
    %2779 = vmatpush.bf16.msra.mxu0 %v2176
    %2780 = vmatpush.bf16.msra.mxu0 %v2168
    %2781 = vmatpush.bf16.msra.mxu0 %v2160
    %2782 = vmatpush.bf16.msra.mxu0 %v2152
    %2783 = vmatpush.bf16.msra.mxu0 %v2144
    %2784 = vmatmul.bf16.gmra.mxu0 %v2684
    %v2785 = vpop.f32.mrf.mxu0
    %v2786 = vadd.f32 %v2773, %v2785
    %v2787 = vpop.f32.mrf.mxu0
    %2788 = vdwg.mxu0
    %2789 = vmatpush.bf16.msra.mxu0 %v2137
    %2790 = vmatpush.bf16.msra.mxu0 %v2129
    %2791 = vmatpush.bf16.msra.mxu0 %v2121
    %2792 = vmatpush.bf16.msra.mxu0 %v2113
    %2793 = vmatpush.bf16.msra.mxu0 %v2105
    %2794 = vmatpush.bf16.msra.mxu0 %v2097
    %2795 = vmatpush.bf16.msra.mxu0 %v2089
    %2796 = vmatpush.bf16.msra.mxu0 %v2081
    %2797 = vmatmul.bf16.gmra.mxu0 %v2683
    %v2798 = vpop.f32.mrf.mxu0
    %v2799 = vadd.f32 0.0, %v2798
    %v2800 = vpop.f32.mrf.mxu0
    %2801 = vdwg.mxu0
    %2802 = vmatpush.bf16.msra.mxu0 %v2201
    %2803 = vmatpush.bf16.msra.mxu0 %v2193
    %2804 = vmatpush.bf16.msra.mxu0 %v2185
    %2805 = vmatpush.bf16.msra.mxu0 %v2177
    %2806 = vmatpush.bf16.msra.mxu0 %v2169
    %2807 = vmatpush.bf16.msra.mxu0 %v2161
    %2808 = vmatpush.bf16.msra.mxu0 %v2153
    %2809 = vmatpush.bf16.msra.mxu0 %v2145
    %2810 = vmatmul.bf16.gmra.mxu0 %v2684
    %v2811 = vpop.f32.mrf.mxu0
    %v2812 = vadd.f32 %v2799, %v2811
    %v2813 = vpop.f32.mrf.mxu0
    %2814 = vdwg.mxu0
    %2815 = vmatpush.bf16.msra.mxu0 %v2138
    %2816 = vmatpush.bf16.msra.mxu0 %v2130
    %2817 = vmatpush.bf16.msra.mxu0 %v2122
    %2818 = vmatpush.bf16.msra.mxu0 %v2114
    %2819 = vmatpush.bf16.msra.mxu0 %v2106
    %2820 = vmatpush.bf16.msra.mxu0 %v2098
    %2821 = vmatpush.bf16.msra.mxu0 %v2090
    %2822 = vmatpush.bf16.msra.mxu0 %v2082
    %2823 = vmatmul.bf16.gmra.mxu0 %v2683
    %v2824 = vpop.f32.mrf.mxu0
    %v2825 = vadd.f32 0.0, %v2824
    %v2826 = vpop.f32.mrf.mxu0
    %2827 = vdwg.mxu0
    %2828 = vmatpush.bf16.msra.mxu0 %v2202
    %2829 = vmatpush.bf16.msra.mxu0 %v2194
    %2830 = vmatpush.bf16.msra.mxu0 %v2186
    %2831 = vmatpush.bf16.msra.mxu0 %v2178
    %2832 = vmatpush.bf16.msra.mxu0 %v2170
    %2833 = vmatpush.bf16.msra.mxu0 %v2162
    %2834 = vmatpush.bf16.msra.mxu0 %v2154
    %2835 = vmatpush.bf16.msra.mxu0 %v2146
    %2836 = vmatmul.bf16.gmra.mxu0 %v2684
    %v2837 = vpop.f32.mrf.mxu0
    %v2838 = vadd.f32 %v2825, %v2837
    %v2839 = vpop.f32.mrf.mxu0
    %2840 = vdwg.mxu0
    %2841 = vmatpush.bf16.msra.mxu0 %v2139
    %2842 = vmatpush.bf16.msra.mxu0 %v2131
    %2843 = vmatpush.bf16.msra.mxu0 %v2123
    %2844 = vmatpush.bf16.msra.mxu0 %v2115
    %2845 = vmatpush.bf16.msra.mxu0 %v2107
    %2846 = vmatpush.bf16.msra.mxu0 %v2099
    %2847 = vmatpush.bf16.msra.mxu0 %v2091
    %2848 = vmatpush.bf16.msra.mxu0 %v2083
    %2849 = vmatmul.bf16.gmra.mxu0 %v2683
    %v2850 = vpop.f32.mrf.mxu0
    %v2851 = vadd.f32 0.0, %v2850
    %v2852 = vpop.f32.mrf.mxu0
    %2853 = vdwg.mxu0
    %2854 = vmatpush.bf16.msra.mxu0 %v2203
    %2855 = vmatpush.bf16.msra.mxu0 %v2195
    %2856 = vmatpush.bf16.msra.mxu0 %v2187
    %2857 = vmatpush.bf16.msra.mxu0 %v2179
    %2858 = vmatpush.bf16.msra.mxu0 %v2171
    %2859 = vmatpush.bf16.msra.mxu0 %v2163
    %2860 = vmatpush.bf16.msra.mxu0 %v2155
    %2861 = vmatpush.bf16.msra.mxu0 %v2147
    %2862 = vmatmul.bf16.gmra.mxu0 %v2684
    %v2863 = vpop.f32.mrf.mxu0
    %v2864 = vadd.f32 %v2851, %v2863
    %v2865 = vpop.f32.mrf.mxu0
    %2866 = vdwg.mxu0
    %2867 = vmatpush.bf16.msra.mxu0 %v2140
    %2868 = vmatpush.bf16.msra.mxu0 %v2132
    %2869 = vmatpush.bf16.msra.mxu0 %v2124
    %2870 = vmatpush.bf16.msra.mxu0 %v2116
    %2871 = vmatpush.bf16.msra.mxu0 %v2108
    %2872 = vmatpush.bf16.msra.mxu0 %v2100
    %2873 = vmatpush.bf16.msra.mxu0 %v2092
    %2874 = vmatpush.bf16.msra.mxu0 %v2084
    %2875 = vmatmul.bf16.gmra.mxu0 %v2683
    %v2876 = vpop.f32.mrf.mxu0
    %v2877 = vadd.f32 0.0, %v2876
    %v2878 = vpop.f32.mrf.mxu0
    %2879 = vdwg.mxu0
    %2880 = vmatpush.bf16.msra.mxu0 %v2204
    %2881 = vmatpush.bf16.msra.mxu0 %v2196
    %2882 = vmatpush.bf16.msra.mxu0 %v2188
    %2883 = vmatpush.bf16.msra.mxu0 %v2180
    %2884 = vmatpush.bf16.msra.mxu0 %v2172
    %2885 = vmatpush.bf16.msra.mxu0 %v2164
    %2886 = vmatpush.bf16.msra.mxu0 %v2156
    %2887 = vmatpush.bf16.msra.mxu0 %v2148
    %2888 = vmatmul.bf16.gmra.mxu0 %v2684
    %v2889 = vpop.f32.mrf.mxu0
    %v2890 = vadd.f32 %v2877, %v2889
    %v2891 = vpop.f32.mrf.mxu0
    %2892 = vdwg.mxu0
    %v2893 = vadd.f32 %v2675, %v2708
    %v2894 = vadd.f32 %v2676, %v2734
    %v2895 = vadd.f32 %v2677, %v2760
    %v2896 = vadd.f32 %v2678, %v2786
    %v2897 = vadd.f32 %v2679, %v2812
    %v2898 = vadd.f32 %v2680, %v2838
    %v2899 = vadd.f32 %v2681, %v2864
    %v2900 = vadd.f32 %v2682, %v2890
    %v2901 = vxor.u32 %v2893, 2147483648
    %v2902 = vxor.u32 %v2894, 2147483648
    %v2903 = vmul.f32 %v2901, 1.442695
    %v2904 = vpow.pop %v2903
    %v2905 = vmul.f32 %v2902, 1.442695
    %v2906 = vpow.pop %v2905
    %v2907 = vadd.f32 %v2904, 1.0
    %v2908 = vadd.f32 %v2906, 1.0
    %v2909 = vrcp.pop %v2907
    %v2910 = vmul.f32 %v2907, %v2909
    %v2911 = vsub.f32 1.0, %v2910
    %v2912 = vmul.f32 %v2909, %v2911
    %v2913 = vadd.f32 %v2909, %v2912
    %vm2914 = vweird.f32 %v2907
    %vm2915 = vweird.f32 %v2909
    %vm2916 = vmor %vm2914, %vm2915
    %v2917 = vsel %vm2916, %v2909, %v2913
    %v2918 = vand.u32 2147483647, %v2907
    %vm2919 = vcmp.eq.f32.partialorder %v2918, 8.507059e+37
    %v2920 = vand.u32 %v2907, 2147483648
    %v2921 = vor.u32 1.1754944e-38, %v2920
    %v2922 = vsel %vm2919, %v2921, %v2917
    %v2923 = vmul.f32 1.0, %v2922
    %v2924 = vrcp.pop %v2908
    %v2925 = vmul.f32 %v2908, %v2924
    %v2926 = vsub.f32 1.0, %v2925
    %v2927 = vmul.f32 %v2924, %v2926
    %v2928 = vadd.f32 %v2924, %v2927
    %vm2929 = vweird.f32 %v2908
    %vm2930 = vweird.f32 %v2924
    %vm2931 = vmor %vm2929, %vm2930
    %v2932 = vsel %vm2931, %v2924, %v2928
    %v2933 = vand.u32 2147483647, %v2908
    %vm2934 = vcmp.eq.f32.partialorder %v2933, 8.507059e+37
    %v2935 = vand.u32 %v2908, 2147483648
    %v2936 = vor.u32 1.1754944e-38, %v2935
    %v2937 = vsel %vm2934, %v2936, %v2932
    %v2938 = vmul.f32 1.0, %v2937
    %v2939 = vxor.u32 %v2895, 2147483648
    %v2940 = vxor.u32 %v2896, 2147483648
    %v2941 = vmul.f32 %v2939, 1.442695
    %v2942 = vpow.pop %v2941
    %v2943 = vmul.f32 %v2940, 1.442695
    %v2944 = vpow.pop %v2943
    %v2945 = vadd.f32 %v2942, 1.0
    %v2946 = vadd.f32 %v2944, 1.0
    %v2947 = vrcp.pop %v2945
    %v2948 = vmul.f32 %v2945, %v2947
    %v2949 = vsub.f32 1.0, %v2948
    %v2950 = vmul.f32 %v2947, %v2949
    %v2951 = vadd.f32 %v2947, %v2950
    %vm2952 = vweird.f32 %v2945
    %vm2953 = vweird.f32 %v2947
    %vm2954 = vmor %vm2952, %vm2953
    %v2955 = vsel %vm2954, %v2947, %v2951
    %v2956 = vand.u32 2147483647, %v2945
    %vm2957 = vcmp.eq.f32.partialorder %v2956, 8.507059e+37
    %v2958 = vand.u32 %v2945, 2147483648
    %v2959 = vor.u32 1.1754944e-38, %v2958
    %v2960 = vsel %vm2957, %v2959, %v2955
    %v2961 = vmul.f32 1.0, %v2960
    %v2962 = vrcp.pop %v2946
    %v2963 = vmul.f32 %v2946, %v2962
    %v2964 = vsub.f32 1.0, %v2963
    %v2965 = vmul.f32 %v2962, %v2964
    %v2966 = vadd.f32 %v2962, %v2965
    %vm2967 = vweird.f32 %v2946
    %vm2968 = vweird.f32 %v2962
    %vm2969 = vmor %vm2967, %vm2968
    %v2970 = vsel %vm2969, %v2962, %v2966
    %v2971 = vand.u32 2147483647, %v2946
    %vm2972 = vcmp.eq.f32.partialorder %v2971, 8.507059e+37
    %v2973 = vand.u32 %v2946, 2147483648
    %v2974 = vor.u32 1.1754944e-38, %v2973
    %v2975 = vsel %vm2972, %v2974, %v2970
    %v2976 = vmul.f32 1.0, %v2975
    %v2977 = vtanh.pop %v2897
    %v2978 = vtanh.pop %v2898
    %v2979 = vxor.u32 %v2899, 2147483648
    %v2980 = vxor.u32 %v2900, 2147483648
    %v2981 = vmul.f32 %v2979, 1.442695
    %v2982 = vpow.pop %v2981
    %v2983 = vmul.f32 %v2980, 1.442695
    %v2984 = vpow.pop %v2983
    %v2985 = vadd.f32 %v2982, 1.0
    %v2986 = vadd.f32 %v2984, 1.0
    %v2987 = vrcp.pop %v2985
    %v2988 = vmul.f32 %v2985, %v2987
    %v2989 = vsub.f32 1.0, %v2988
    %v2990 = vmul.f32 %v2987, %v2989
    %v2991 = vadd.f32 %v2987, %v2990
    %vm2992 = vweird.f32 %v2985
    %vm2993 = vweird.f32 %v2987
    %vm2994 = vmor %vm2992, %vm2993
    %v2995 = vsel %vm2994, %v2987, %v2991
    %v2996 = vand.u32 2147483647, %v2985
    %vm2997 = vcmp.eq.f32.partialorder %v2996, 8.507059e+37
    %v2998 = vand.u32 %v2985, 2147483648
    %v2999 = vor.u32 1.1754944e-38, %v2998
    %v3000 = vsel %vm2997, %v2999, %v2995
    %v3001 = vmul.f32 1.0, %v3000
    %v3002 = vrcp.pop %v2986
    %v3003 = vmul.f32 %v2986, %v3002
    %v3004 = vsub.f32 1.0, %v3003
    %v3005 = vmul.f32 %v3002, %v3004
    %v3006 = vadd.f32 %v3002, %v3005
    %vm3007 = vweird.f32 %v2986
    %vm3008 = vweird.f32 %v3002
    %vm3009 = vmor %vm3007, %vm3008
    %v3010 = vsel %vm3009, %v3002, %v3006
    %v3011 = vand.u32 2147483647, %v2986
    %vm3012 = vcmp.eq.f32.partialorder %v3011, 8.507059e+37
    %v3013 = vand.u32 %v2986, 2147483648
    %v3014 = vor.u32 1.1754944e-38, %v3013
    %v3015 = vsel %vm3012, %v3014, %v3010
    %v3016 = vmul.f32 1.0, %v3015
    %v3017 = vmul.f32 %v2961, %v2669
    %v3018 = vmul.f32 %v2976, %v2670
    %v3019 = vmul.f32 %v2923, %v2977
    %v3020 = vmul.f32 %v2938, %v2978
    %v3021 = vadd.f32 %v3017, %v3019
    %v3022 = vadd.f32 %v3018, %v3020
    %v3023 = vtanh.pop %v3021
    %v3024 = vtanh.pop %v3022
    %v3025 = vmul.f32 %v3001, %v3023
    %v3026 = vmul.f32 %v3016, %v3024
    %v3027 = vld [vmem:[#allocation2 + $0x100] sm:$0xff]
    %v3028 = vld [vmem:[#allocation2 + $0x108] sm:$0xff]
    %v3029 = vld [vmem:[#allocation2 + $0x110] sm:$0xff]
    %v3030 = vld [vmem:[#allocation2 + $0x118] sm:$0xff]
    %v3031 = vld [vmem:[#allocation2 + $0x120] sm:$0xff]
    %v3032 = vld [vmem:[#allocation2 + $0x128] sm:$0xff]
    %v3033 = vld [vmem:[#allocation2 + $0x130] sm:$0xff]
    %v3034 = vld [vmem:[#allocation2 + $0x138] sm:$0xff]
    %v3035 = vpack.c.bf16 %v3025, %v3025
    %v3036 = vpack.c.bf16 %v3026, %v3026
    %3037 = vmatpush.bf16.msra.mxu0 %v2133
    %3038 = vmatpush.bf16.msra.mxu0 %v2125
    %3039 = vmatpush.bf16.msra.mxu0 %v2117
    %3040 = vmatpush.bf16.msra.mxu0 %v2109
    %3041 = vmatpush.bf16.msra.mxu0 %v2101
    %3042 = vmatpush.bf16.msra.mxu0 %v2093
    %3043 = vmatpush.bf16.msra.mxu0 %v2085
    %3044 = vmatpush.bf16.msra.mxu0 %v2077
    %3045 = vmatmul.bf16.gmra.mxu0 %v3035
    %v3046 = vpop.f32.mrf.mxu0
    %v3047 = vadd.f32 0.0, %v3046
    %v3048 = vpop.f32.mrf.mxu0
    %3049 = vdwg.mxu0
    %3050 = vmatpush.bf16.msra.mxu0 %v2197
    %3051 = vmatpush.bf16.msra.mxu0 %v2189
    %3052 = vmatpush.bf16.msra.mxu0 %v2181
    %3053 = vmatpush.bf16.msra.mxu0 %v2173
    %3054 = vmatpush.bf16.msra.mxu0 %v2165
    %3055 = vmatpush.bf16.msra.mxu0 %v2157
    %3056 = vmatpush.bf16.msra.mxu0 %v2149
    %3057 = vmatpush.bf16.msra.mxu0 %v2141
    %3058 = vmatmul.bf16.gmra.mxu0 %v3036
    %v3059 = vpop.f32.mrf.mxu0
    %v3060 = vadd.f32 %v3047, %v3059
    %v3061 = vpop.f32.mrf.mxu0
    %3062 = vdwg.mxu0
    %3063 = vmatpush.bf16.msra.mxu0 %v2134
    %3064 = vmatpush.bf16.msra.mxu0 %v2126
    %3065 = vmatpush.bf16.msra.mxu0 %v2118
    %3066 = vmatpush.bf16.msra.mxu0 %v2110
    %3067 = vmatpush.bf16.msra.mxu0 %v2102
    %3068 = vmatpush.bf16.msra.mxu0 %v2094
    %3069 = vmatpush.bf16.msra.mxu0 %v2086
    %3070 = vmatpush.bf16.msra.mxu0 %v2078
    %3071 = vmatmul.bf16.gmra.mxu0 %v3035
    %v3072 = vpop.f32.mrf.mxu0
    %v3073 = vadd.f32 0.0, %v3072
    %v3074 = vpop.f32.mrf.mxu0
    %3075 = vdwg.mxu0
    %3076 = vmatpush.bf16.msra.mxu0 %v2198
    %3077 = vmatpush.bf16.msra.mxu0 %v2190
    %3078 = vmatpush.bf16.msra.mxu0 %v2182
    %3079 = vmatpush.bf16.msra.mxu0 %v2174
    %3080 = vmatpush.bf16.msra.mxu0 %v2166
    %3081 = vmatpush.bf16.msra.mxu0 %v2158
    %3082 = vmatpush.bf16.msra.mxu0 %v2150
    %3083 = vmatpush.bf16.msra.mxu0 %v2142
    %3084 = vmatmul.bf16.gmra.mxu0 %v3036
    %v3085 = vpop.f32.mrf.mxu0
    %v3086 = vadd.f32 %v3073, %v3085
    %v3087 = vpop.f32.mrf.mxu0
    %3088 = vdwg.mxu0
    %3089 = vmatpush.bf16.msra.mxu0 %v2135
    %3090 = vmatpush.bf16.msra.mxu0 %v2127
    %3091 = vmatpush.bf16.msra.mxu0 %v2119
    %3092 = vmatpush.bf16.msra.mxu0 %v2111
    %3093 = vmatpush.bf16.msra.mxu0 %v2103
    %3094 = vmatpush.bf16.msra.mxu0 %v2095
    %3095 = vmatpush.bf16.msra.mxu0 %v2087
    %3096 = vmatpush.bf16.msra.mxu0 %v2079
    %3097 = vmatmul.bf16.gmra.mxu0 %v3035
    %v3098 = vpop.f32.mrf.mxu0
    %v3099 = vadd.f32 0.0, %v3098
    %v3100 = vpop.f32.mrf.mxu0
    %3101 = vdwg.mxu0
    %3102 = vmatpush.bf16.msra.mxu0 %v2199
    %3103 = vmatpush.bf16.msra.mxu0 %v2191
    %3104 = vmatpush.bf16.msra.mxu0 %v2183
    %3105 = vmatpush.bf16.msra.mxu0 %v2175
    %3106 = vmatpush.bf16.msra.mxu0 %v2167
    %3107 = vmatpush.bf16.msra.mxu0 %v2159
    %3108 = vmatpush.bf16.msra.mxu0 %v2151
    %3109 = vmatpush.bf16.msra.mxu0 %v2143
    %3110 = vmatmul.bf16.gmra.mxu0 %v3036
    %v3111 = vpop.f32.mrf.mxu0
    %v3112 = vadd.f32 %v3099, %v3111
    %v3113 = vpop.f32.mrf.mxu0
    %3114 = vdwg.mxu0
    %3115 = vmatpush.bf16.msra.mxu0 %v2136
    %3116 = vmatpush.bf16.msra.mxu0 %v2128
    %3117 = vmatpush.bf16.msra.mxu0 %v2120
    %3118 = vmatpush.bf16.msra.mxu0 %v2112
    %3119 = vmatpush.bf16.msra.mxu0 %v2104
    %3120 = vmatpush.bf16.msra.mxu0 %v2096
    %3121 = vmatpush.bf16.msra.mxu0 %v2088
    %3122 = vmatpush.bf16.msra.mxu0 %v2080
    %3123 = vmatmul.bf16.gmra.mxu0 %v3035
    %v3124 = vpop.f32.mrf.mxu0
    %v3125 = vadd.f32 0.0, %v3124
    %v3126 = vpop.f32.mrf.mxu0
    %3127 = vdwg.mxu0
    %3128 = vmatpush.bf16.msra.mxu0 %v2200
    %3129 = vmatpush.bf16.msra.mxu0 %v2192
    %3130 = vmatpush.bf16.msra.mxu0 %v2184
    %3131 = vmatpush.bf16.msra.mxu0 %v2176
    %3132 = vmatpush.bf16.msra.mxu0 %v2168
    %3133 = vmatpush.bf16.msra.mxu0 %v2160
    %3134 = vmatpush.bf16.msra.mxu0 %v2152
    %3135 = vmatpush.bf16.msra.mxu0 %v2144
    %3136 = vmatmul.bf16.gmra.mxu0 %v3036
    %v3137 = vpop.f32.mrf.mxu0
    %v3138 = vadd.f32 %v3125, %v3137
    %v3139 = vpop.f32.mrf.mxu0
    %3140 = vdwg.mxu0
    %3141 = vmatpush.bf16.msra.mxu0 %v2137
    %3142 = vmatpush.bf16.msra.mxu0 %v2129
    %3143 = vmatpush.bf16.msra.mxu0 %v2121
    %3144 = vmatpush.bf16.msra.mxu0 %v2113
    %3145 = vmatpush.bf16.msra.mxu0 %v2105
    %3146 = vmatpush.bf16.msra.mxu0 %v2097
    %3147 = vmatpush.bf16.msra.mxu0 %v2089
    %3148 = vmatpush.bf16.msra.mxu0 %v2081
    %3149 = vmatmul.bf16.gmra.mxu0 %v3035
    %v3150 = vpop.f32.mrf.mxu0
    %v3151 = vadd.f32 0.0, %v3150
    %v3152 = vpop.f32.mrf.mxu0
    %3153 = vdwg.mxu0
    %3154 = vmatpush.bf16.msra.mxu0 %v2201
    %3155 = vmatpush.bf16.msra.mxu0 %v2193
    %3156 = vmatpush.bf16.msra.mxu0 %v2185
    %3157 = vmatpush.bf16.msra.mxu0 %v2177
    %3158 = vmatpush.bf16.msra.mxu0 %v2169
    %3159 = vmatpush.bf16.msra.mxu0 %v2161
    %3160 = vmatpush.bf16.msra.mxu0 %v2153
    %3161 = vmatpush.bf16.msra.mxu0 %v2145
    %3162 = vmatmul.bf16.gmra.mxu0 %v3036
    %v3163 = vpop.f32.mrf.mxu0
    %v3164 = vadd.f32 %v3151, %v3163
    %v3165 = vpop.f32.mrf.mxu0
    %3166 = vdwg.mxu0
    %3167 = vmatpush.bf16.msra.mxu0 %v2138
    %3168 = vmatpush.bf16.msra.mxu0 %v2130
    %3169 = vmatpush.bf16.msra.mxu0 %v2122
    %3170 = vmatpush.bf16.msra.mxu0 %v2114
    %3171 = vmatpush.bf16.msra.mxu0 %v2106
    %3172 = vmatpush.bf16.msra.mxu0 %v2098
    %3173 = vmatpush.bf16.msra.mxu0 %v2090
    %3174 = vmatpush.bf16.msra.mxu0 %v2082
    %3175 = vmatmul.bf16.gmra.mxu0 %v3035
    %v3176 = vpop.f32.mrf.mxu0
    %v3177 = vadd.f32 0.0, %v3176
    %v3178 = vpop.f32.mrf.mxu0
    %3179 = vdwg.mxu0
    %3180 = vmatpush.bf16.msra.mxu0 %v2202
    %3181 = vmatpush.bf16.msra.mxu0 %v2194
    %3182 = vmatpush.bf16.msra.mxu0 %v2186
    %3183 = vmatpush.bf16.msra.mxu0 %v2178
    %3184 = vmatpush.bf16.msra.mxu0 %v2170
    %3185 = vmatpush.bf16.msra.mxu0 %v2162
    %3186 = vmatpush.bf16.msra.mxu0 %v2154
    %3187 = vmatpush.bf16.msra.mxu0 %v2146
    %3188 = vmatmul.bf16.gmra.mxu0 %v3036
    %v3189 = vpop.f32.mrf.mxu0
    %v3190 = vadd.f32 %v3177, %v3189
    %v3191 = vpop.f32.mrf.mxu0
    %3192 = vdwg.mxu0
    %3193 = vmatpush.bf16.msra.mxu0 %v2139
    %3194 = vmatpush.bf16.msra.mxu0 %v2131
    %3195 = vmatpush.bf16.msra.mxu0 %v2123
    %3196 = vmatpush.bf16.msra.mxu0 %v2115
    %3197 = vmatpush.bf16.msra.mxu0 %v2107
    %3198 = vmatpush.bf16.msra.mxu0 %v2099
    %3199 = vmatpush.bf16.msra.mxu0 %v2091
    %3200 = vmatpush.bf16.msra.mxu0 %v2083
    %3201 = vmatmul.bf16.gmra.mxu0 %v3035
    %v3202 = vpop.f32.mrf.mxu0
    %v3203 = vadd.f32 0.0, %v3202
    %v3204 = vpop.f32.mrf.mxu0
    %3205 = vdwg.mxu0
    %3206 = vmatpush.bf16.msra.mxu0 %v2203
    %3207 = vmatpush.bf16.msra.mxu0 %v2195
    %3208 = vmatpush.bf16.msra.mxu0 %v2187
    %3209 = vmatpush.bf16.msra.mxu0 %v2179
    %3210 = vmatpush.bf16.msra.mxu0 %v2171
    %3211 = vmatpush.bf16.msra.mxu0 %v2163
    %3212 = vmatpush.bf16.msra.mxu0 %v2155
    %3213 = vmatpush.bf16.msra.mxu0 %v2147
    %3214 = vmatmul.bf16.gmra.mxu0 %v3036
    %v3215 = vpop.f32.mrf.mxu0
    %v3216 = vadd.f32 %v3203, %v3215
    %v3217 = vpop.f32.mrf.mxu0
    %3218 = vdwg.mxu0
    %3219 = vmatpush.bf16.msra.mxu0 %v2140
    %3220 = vmatpush.bf16.msra.mxu0 %v2132
    %3221 = vmatpush.bf16.msra.mxu0 %v2124
    %3222 = vmatpush.bf16.msra.mxu0 %v2116
    %3223 = vmatpush.bf16.msra.mxu0 %v2108
    %3224 = vmatpush.bf16.msra.mxu0 %v2100
    %3225 = vmatpush.bf16.msra.mxu0 %v2092
    %3226 = vmatpush.bf16.msra.mxu0 %v2084
    %3227 = vmatmul.bf16.gmra.mxu0 %v3035
    %v3228 = vpop.f32.mrf.mxu0
    %v3229 = vadd.f32 0.0, %v3228
    %v3230 = vpop.f32.mrf.mxu0
    %3231 = vdwg.mxu0
    %3232 = vmatpush.bf16.msra.mxu0 %v2204
    %3233 = vmatpush.bf16.msra.mxu0 %v2196
    %3234 = vmatpush.bf16.msra.mxu0 %v2188
    %3235 = vmatpush.bf16.msra.mxu0 %v2180
    %3236 = vmatpush.bf16.msra.mxu0 %v2172
    %3237 = vmatpush.bf16.msra.mxu0 %v2164
    %3238 = vmatpush.bf16.msra.mxu0 %v2156
    %3239 = vmatpush.bf16.msra.mxu0 %v2148
    %3240 = vmatmul.bf16.gmra.mxu0 %v3036
    %v3241 = vpop.f32.mrf.mxu0
    %v3242 = vadd.f32 %v3229, %v3241
    %v3243 = vpop.f32.mrf.mxu0
    %3244 = vdwg.mxu0
    %v3245 = vadd.f32 %v3027, %v3060
    %v3246 = vadd.f32 %v3028, %v3086
    %v3247 = vadd.f32 %v3029, %v3112
    %v3248 = vadd.f32 %v3030, %v3138
    %v3249 = vadd.f32 %v3031, %v3164
    %v3250 = vadd.f32 %v3032, %v3190
    %v3251 = vadd.f32 %v3033, %v3216
    %v3252 = vadd.f32 %v3034, %v3242
    %v3253 = vxor.u32 %v3245, 2147483648
    %v3254 = vxor.u32 %v3246, 2147483648
    %v3255 = vmul.f32 %v3253, 1.442695
    %v3256 = vpow.pop %v3255
    %v3257 = vmul.f32 %v3254, 1.442695
    %v3258 = vpow.pop %v3257
    %v3259 = vadd.f32 %v3256, 1.0
    %v3260 = vadd.f32 %v3258, 1.0
    %v3261 = vrcp.pop %v3259
    %v3262 = vmul.f32 %v3259, %v3261
    %v3263 = vsub.f32 1.0, %v3262
    %v3264 = vmul.f32 %v3261, %v3263
    %v3265 = vadd.f32 %v3261, %v3264
    %vm3266 = vweird.f32 %v3259
    %vm3267 = vweird.f32 %v3261
    %vm3268 = vmor %vm3266, %vm3267
    %v3269 = vsel %vm3268, %v3261, %v3265
    %v3270 = vand.u32 2147483647, %v3259
    %vm3271 = vcmp.eq.f32.partialorder %v3270, 8.507059e+37
    %v3272 = vand.u32 %v3259, 2147483648
    %v3273 = vor.u32 1.1754944e-38, %v3272
    %v3274 = vsel %vm3271, %v3273, %v3269
    %v3275 = vmul.f32 1.0, %v3274
    %v3276 = vrcp.pop %v3260
    %v3277 = vmul.f32 %v3260, %v3276
    %v3278 = vsub.f32 1.0, %v3277
    %v3279 = vmul.f32 %v3276, %v3278
    %v3280 = vadd.f32 %v3276, %v3279
    %vm3281 = vweird.f32 %v3260
    %vm3282 = vweird.f32 %v3276
    %vm3283 = vmor %vm3281, %vm3282
    %v3284 = vsel %vm3283, %v3276, %v3280
    %v3285 = vand.u32 2147483647, %v3260
    %vm3286 = vcmp.eq.f32.partialorder %v3285, 8.507059e+37
    %v3287 = vand.u32 %v3260, 2147483648
    %v3288 = vor.u32 1.1754944e-38, %v3287
    %v3289 = vsel %vm3286, %v3288, %v3284
    %v3290 = vmul.f32 1.0, %v3289
    %v3291 = vxor.u32 %v3247, 2147483648
    %v3292 = vxor.u32 %v3248, 2147483648
    %v3293 = vmul.f32 %v3291, 1.442695
    %v3294 = vpow.pop %v3293
    %v3295 = vmul.f32 %v3292, 1.442695
    %v3296 = vpow.pop %v3295
    %v3297 = vadd.f32 %v3294, 1.0
    %v3298 = vadd.f32 %v3296, 1.0
    %v3299 = vrcp.pop %v3297
    %v3300 = vmul.f32 %v3297, %v3299
    %v3301 = vsub.f32 1.0, %v3300
    %v3302 = vmul.f32 %v3299, %v3301
    %v3303 = vadd.f32 %v3299, %v3302
    %vm3304 = vweird.f32 %v3297
    %vm3305 = vweird.f32 %v3299
    %vm3306 = vmor %vm3304, %vm3305
    %v3307 = vsel %vm3306, %v3299, %v3303
    %v3308 = vand.u32 2147483647, %v3297
    %vm3309 = vcmp.eq.f32.partialorder %v3308, 8.507059e+37
    %v3310 = vand.u32 %v3297, 2147483648
    %v3311 = vor.u32 1.1754944e-38, %v3310
    %v3312 = vsel %vm3309, %v3311, %v3307
    %v3313 = vmul.f32 1.0, %v3312
    %v3314 = vrcp.pop %v3298
    %v3315 = vmul.f32 %v3298, %v3314
    %v3316 = vsub.f32 1.0, %v3315
    %v3317 = vmul.f32 %v3314, %v3316
    %v3318 = vadd.f32 %v3314, %v3317
    %vm3319 = vweird.f32 %v3298
    %vm3320 = vweird.f32 %v3314
    %vm3321 = vmor %vm3319, %vm3320
    %v3322 = vsel %vm3321, %v3314, %v3318
    %v3323 = vand.u32 2147483647, %v3298
    %vm3324 = vcmp.eq.f32.partialorder %v3323, 8.507059e+37
    %v3325 = vand.u32 %v3298, 2147483648
    %v3326 = vor.u32 1.1754944e-38, %v3325
    %v3327 = vsel %vm3324, %v3326, %v3322
    %v3328 = vmul.f32 1.0, %v3327
    %v3329 = vtanh.pop %v3249
    %v3330 = vtanh.pop %v3250
    %v3331 = vxor.u32 %v3251, 2147483648
    %v3332 = vxor.u32 %v3252, 2147483648
    %v3333 = vmul.f32 %v3331, 1.442695
    %v3334 = vpow.pop %v3333
    %v3335 = vmul.f32 %v3332, 1.442695
    %v3336 = vpow.pop %v3335
    %v3337 = vadd.f32 %v3334, 1.0
    %v3338 = vadd.f32 %v3336, 1.0
    %v3339 = vrcp.pop %v3337
    %v3340 = vmul.f32 %v3337, %v3339
    %v3341 = vsub.f32 1.0, %v3340
    %v3342 = vmul.f32 %v3339, %v3341
    %v3343 = vadd.f32 %v3339, %v3342
    %vm3344 = vweird.f32 %v3337
    %vm3345 = vweird.f32 %v3339
    %vm3346 = vmor %vm3344, %vm3345
    %v3347 = vsel %vm3346, %v3339, %v3343
    %v3348 = vand.u32 2147483647, %v3337
    %vm3349 = vcmp.eq.f32.partialorder %v3348, 8.507059e+37
    %v3350 = vand.u32 %v3337, 2147483648
    %v3351 = vor.u32 1.1754944e-38, %v3350
    %v3352 = vsel %vm3349, %v3351, %v3347
    %v3353 = vmul.f32 1.0, %v3352
    %v3354 = vrcp.pop %v3338
    %v3355 = vmul.f32 %v3338, %v3354
    %v3356 = vsub.f32 1.0, %v3355
    %v3357 = vmul.f32 %v3354, %v3356
    %v3358 = vadd.f32 %v3354, %v3357
    %vm3359 = vweird.f32 %v3338
    %vm3360 = vweird.f32 %v3354
    %vm3361 = vmor %vm3359, %vm3360
    %v3362 = vsel %vm3361, %v3354, %v3358
    %v3363 = vand.u32 2147483647, %v3338
    %vm3364 = vcmp.eq.f32.partialorder %v3363, 8.507059e+37
    %v3365 = vand.u32 %v3338, 2147483648
    %v3366 = vor.u32 1.1754944e-38, %v3365
    %v3367 = vsel %vm3364, %v3366, %v3362
    %v3368 = vmul.f32 1.0, %v3367
    %v3369 = vmul.f32 %v3313, %v3021
    %v3370 = vmul.f32 %v3328, %v3022
    %v3371 = vmul.f32 %v3275, %v3329
    %v3372 = vmul.f32 %v3290, %v3330
    %v3373 = vadd.f32 %v3369, %v3371
    %v3374 = vadd.f32 %v3370, %v3372
    %v3375 = vtanh.pop %v3373
    %v3376 = vtanh.pop %v3374
    %v3377 = vmul.f32 %v3353, %v3375
    %v3378 = vmul.f32 %v3368, %v3376
    %v3379 = vld [vmem:[#allocation2 + $0x180] sm:$0xff]
    %v3380 = vld [vmem:[#allocation2 + $0x188] sm:$0xff]
    %v3381 = vld [vmem:[#allocation2 + $0x190] sm:$0xff]
    %v3382 = vld [vmem:[#allocation2 + $0x198] sm:$0xff]
    %v3383 = vld [vmem:[#allocation2 + $0x1a0] sm:$0xff]
    %v3384 = vld [vmem:[#allocation2 + $0x1a8] sm:$0xff]
    %v3385 = vld [vmem:[#allocation2 + $0x1b0] sm:$0xff]
    %v3386 = vld [vmem:[#allocation2 + $0x1b8] sm:$0xff]
    %v3387 = vpack.c.bf16 %v3377, %v3377
    %v3388 = vpack.c.bf16 %v3378, %v3378
    %3389 = vmatpush.bf16.msra.mxu0 %v2133
    %3390 = vmatpush.bf16.msra.mxu0 %v2125
    %3391 = vmatpush.bf16.msra.mxu0 %v2117
    %3392 = vmatpush.bf16.msra.mxu0 %v2109
    %3393 = vmatpush.bf16.msra.mxu0 %v2101
    %3394 = vmatpush.bf16.msra.mxu0 %v2093
    %3395 = vmatpush.bf16.msra.mxu0 %v2085
    %3396 = vmatpush.bf16.msra.mxu0 %v2077
    %3397 = vmatmul.bf16.gmra.mxu0 %v3387
    %v3398 = vpop.f32.mrf.mxu0
    %v3399 = vadd.f32 0.0, %v3398
    %v3400 = vpop.f32.mrf.mxu0
    %3401 = vdwg.mxu0
    %3402 = vmatpush.bf16.msra.mxu0 %v2197
    %3403 = vmatpush.bf16.msra.mxu0 %v2189
    %3404 = vmatpush.bf16.msra.mxu0 %v2181
    %3405 = vmatpush.bf16.msra.mxu0 %v2173
    %3406 = vmatpush.bf16.msra.mxu0 %v2165
    %3407 = vmatpush.bf16.msra.mxu0 %v2157
    %3408 = vmatpush.bf16.msra.mxu0 %v2149
    %3409 = vmatpush.bf16.msra.mxu0 %v2141
    %3410 = vmatmul.bf16.gmra.mxu0 %v3388
    %v3411 = vpop.f32.mrf.mxu0
    %v3412 = vadd.f32 %v3399, %v3411
    %v3413 = vpop.f32.mrf.mxu0
    %3414 = vdwg.mxu0
    %3415 = vmatpush.bf16.msra.mxu0 %v2134
    %3416 = vmatpush.bf16.msra.mxu0 %v2126
    %3417 = vmatpush.bf16.msra.mxu0 %v2118
    %3418 = vmatpush.bf16.msra.mxu0 %v2110
    %3419 = vmatpush.bf16.msra.mxu0 %v2102
    %3420 = vmatpush.bf16.msra.mxu0 %v2094
    %3421 = vmatpush.bf16.msra.mxu0 %v2086
    %3422 = vmatpush.bf16.msra.mxu0 %v2078
    %3423 = vmatmul.bf16.gmra.mxu0 %v3387
    %v3424 = vpop.f32.mrf.mxu0
    %v3425 = vadd.f32 0.0, %v3424
    %v3426 = vpop.f32.mrf.mxu0
    %3427 = vdwg.mxu0
    %3428 = vmatpush.bf16.msra.mxu0 %v2198
    %3429 = vmatpush.bf16.msra.mxu0 %v2190
    %3430 = vmatpush.bf16.msra.mxu0 %v2182
    %3431 = vmatpush.bf16.msra.mxu0 %v2174
    %3432 = vmatpush.bf16.msra.mxu0 %v2166
    %3433 = vmatpush.bf16.msra.mxu0 %v2158
    %3434 = vmatpush.bf16.msra.mxu0 %v2150
    %3435 = vmatpush.bf16.msra.mxu0 %v2142
    %3436 = vmatmul.bf16.gmra.mxu0 %v3388
    %v3437 = vpop.f32.mrf.mxu0
    %v3438 = vadd.f32 %v3425, %v3437
    %v3439 = vpop.f32.mrf.mxu0
    %3440 = vdwg.mxu0
    %3441 = vmatpush.bf16.msra.mxu0 %v2135
    %3442 = vmatpush.bf16.msra.mxu0 %v2127
    %3443 = vmatpush.bf16.msra.mxu0 %v2119
    %3444 = vmatpush.bf16.msra.mxu0 %v2111
    %3445 = vmatpush.bf16.msra.mxu0 %v2103
    %3446 = vmatpush.bf16.msra.mxu0 %v2095
    %3447 = vmatpush.bf16.msra.mxu0 %v2087
    %3448 = vmatpush.bf16.msra.mxu0 %v2079
    %3449 = vmatmul.bf16.gmra.mxu0 %v3387
    %v3450 = vpop.f32.mrf.mxu0
    %v3451 = vadd.f32 0.0, %v3450
    %v3452 = vpop.f32.mrf.mxu0
    %3453 = vdwg.mxu0
    %3454 = vmatpush.bf16.msra.mxu0 %v2199
    %3455 = vmatpush.bf16.msra.mxu0 %v2191
    %3456 = vmatpush.bf16.msra.mxu0 %v2183
    %3457 = vmatpush.bf16.msra.mxu0 %v2175
    %3458 = vmatpush.bf16.msra.mxu0 %v2167
    %3459 = vmatpush.bf16.msra.mxu0 %v2159
    %3460 = vmatpush.bf16.msra.mxu0 %v2151
    %3461 = vmatpush.bf16.msra.mxu0 %v2143
    %3462 = vmatmul.bf16.gmra.mxu0 %v3388
    %v3463 = vpop.f32.mrf.mxu0
    %v3464 = vadd.f32 %v3451, %v3463
    %v3465 = vpop.f32.mrf.mxu0
    %3466 = vdwg.mxu0
    %3467 = vmatpush.bf16.msra.mxu0 %v2136
    %3468 = vmatpush.bf16.msra.mxu0 %v2128
    %3469 = vmatpush.bf16.msra.mxu0 %v2120
    %3470 = vmatpush.bf16.msra.mxu0 %v2112
    %3471 = vmatpush.bf16.msra.mxu0 %v2104
    %3472 = vmatpush.bf16.msra.mxu0 %v2096
    %3473 = vmatpush.bf16.msra.mxu0 %v2088
    %3474 = vmatpush.bf16.msra.mxu0 %v2080
    %3475 = vmatmul.bf16.gmra.mxu0 %v3387
    %v3476 = vpop.f32.mrf.mxu0
    %v3477 = vadd.f32 0.0, %v3476
    %v3478 = vpop.f32.mrf.mxu0
    %3479 = vdwg.mxu0
    %3480 = vmatpush.bf16.msra.mxu0 %v2200
    %3481 = vmatpush.bf16.msra.mxu0 %v2192
    %3482 = vmatpush.bf16.msra.mxu0 %v2184
    %3483 = vmatpush.bf16.msra.mxu0 %v2176
    %3484 = vmatpush.bf16.msra.mxu0 %v2168
    %3485 = vmatpush.bf16.msra.mxu0 %v2160
    %3486 = vmatpush.bf16.msra.mxu0 %v2152
    %3487 = vmatpush.bf16.msra.mxu0 %v2144
    %3488 = vmatmul.bf16.gmra.mxu0 %v3388
    %v3489 = vpop.f32.mrf.mxu0
    %v3490 = vadd.f32 %v3477, %v3489
    %v3491 = vpop.f32.mrf.mxu0
    %3492 = vdwg.mxu0
    %3493 = vmatpush.bf16.msra.mxu0 %v2137
    %3494 = vmatpush.bf16.msra.mxu0 %v2129
    %3495 = vmatpush.bf16.msra.mxu0 %v2121
    %3496 = vmatpush.bf16.msra.mxu0 %v2113
    %3497 = vmatpush.bf16.msra.mxu0 %v2105
    %3498 = vmatpush.bf16.msra.mxu0 %v2097
    %3499 = vmatpush.bf16.msra.mxu0 %v2089
    %3500 = vmatpush.bf16.msra.mxu0 %v2081
    %3501 = vmatmul.bf16.gmra.mxu0 %v3387
    %v3502 = vpop.f32.mrf.mxu0
    %v3503 = vadd.f32 0.0, %v3502
    %v3504 = vpop.f32.mrf.mxu0
    %3505 = vdwg.mxu0
    %3506 = vmatpush.bf16.msra.mxu0 %v2201
    %3507 = vmatpush.bf16.msra.mxu0 %v2193
    %3508 = vmatpush.bf16.msra.mxu0 %v2185
    %3509 = vmatpush.bf16.msra.mxu0 %v2177
    %3510 = vmatpush.bf16.msra.mxu0 %v2169
    %3511 = vmatpush.bf16.msra.mxu0 %v2161
    %3512 = vmatpush.bf16.msra.mxu0 %v2153
    %3513 = vmatpush.bf16.msra.mxu0 %v2145
    %3514 = vmatmul.bf16.gmra.mxu0 %v3388
    %v3515 = vpop.f32.mrf.mxu0
    %v3516 = vadd.f32 %v3503, %v3515
    %v3517 = vpop.f32.mrf.mxu0
    %3518 = vdwg.mxu0
    %3519 = vmatpush.bf16.msra.mxu0 %v2138
    %3520 = vmatpush.bf16.msra.mxu0 %v2130
    %3521 = vmatpush.bf16.msra.mxu0 %v2122
    %3522 = vmatpush.bf16.msra.mxu0 %v2114
    %3523 = vmatpush.bf16.msra.mxu0 %v2106
    %3524 = vmatpush.bf16.msra.mxu0 %v2098
    %3525 = vmatpush.bf16.msra.mxu0 %v2090
    %3526 = vmatpush.bf16.msra.mxu0 %v2082
    %3527 = vmatmul.bf16.gmra.mxu0 %v3387
    %v3528 = vpop.f32.mrf.mxu0
    %v3529 = vadd.f32 0.0, %v3528
    %v3530 = vpop.f32.mrf.mxu0
    %3531 = vdwg.mxu0
    %3532 = vmatpush.bf16.msra.mxu0 %v2202
    %3533 = vmatpush.bf16.msra.mxu0 %v2194
    %3534 = vmatpush.bf16.msra.mxu0 %v2186
    %3535 = vmatpush.bf16.msra.mxu0 %v2178
    %3536 = vmatpush.bf16.msra.mxu0 %v2170
    %3537 = vmatpush.bf16.msra.mxu0 %v2162
    %3538 = vmatpush.bf16.msra.mxu0 %v2154
    %3539 = vmatpush.bf16.msra.mxu0 %v2146
    %3540 = vmatmul.bf16.gmra.mxu0 %v3388
    %v3541 = vpop.f32.mrf.mxu0
    %v3542 = vadd.f32 %v3529, %v3541
    %v3543 = vpop.f32.mrf.mxu0
    %3544 = vdwg.mxu0
    %3545 = vmatpush.bf16.msra.mxu0 %v2139
    %3546 = vmatpush.bf16.msra.mxu0 %v2131
    %3547 = vmatpush.bf16.msra.mxu0 %v2123
    %3548 = vmatpush.bf16.msra.mxu0 %v2115
    %3549 = vmatpush.bf16.msra.mxu0 %v2107
    %3550 = vmatpush.bf16.msra.mxu0 %v2099
    %3551 = vmatpush.bf16.msra.mxu0 %v2091
    %3552 = vmatpush.bf16.msra.mxu0 %v2083
    %3553 = vmatmul.bf16.gmra.mxu0 %v3387
    %v3554 = vpop.f32.mrf.mxu0
    %v3555 = vadd.f32 0.0, %v3554
    %v3556 = vpop.f32.mrf.mxu0
    %3557 = vdwg.mxu0
    %3558 = vmatpush.bf16.msra.mxu0 %v2203
    %3559 = vmatpush.bf16.msra.mxu0 %v2195
    %3560 = vmatpush.bf16.msra.mxu0 %v2187
    %3561 = vmatpush.bf16.msra.mxu0 %v2179
    %3562 = vmatpush.bf16.msra.mxu0 %v2171
    %3563 = vmatpush.bf16.msra.mxu0 %v2163
    %3564 = vmatpush.bf16.msra.mxu0 %v2155
    %3565 = vmatpush.bf16.msra.mxu0 %v2147
    %3566 = vmatmul.bf16.gmra.mxu0 %v3388
    %v3567 = vpop.f32.mrf.mxu0
    %v3568 = vadd.f32 %v3555, %v3567
    %v3569 = vpop.f32.mrf.mxu0
    %3570 = vdwg.mxu0
    %3571 = vmatpush.bf16.msra.mxu0 %v2140
    %3572 = vmatpush.bf16.msra.mxu0 %v2132
    %3573 = vmatpush.bf16.msra.mxu0 %v2124
    %3574 = vmatpush.bf16.msra.mxu0 %v2116
    %3575 = vmatpush.bf16.msra.mxu0 %v2108
    %3576 = vmatpush.bf16.msra.mxu0 %v2100
    %3577 = vmatpush.bf16.msra.mxu0 %v2092
    %3578 = vmatpush.bf16.msra.mxu0 %v2084
    %3579 = vmatmul.bf16.gmra.mxu0 %v3387
    %v3580 = vpop.f32.mrf.mxu0
    %v3581 = vadd.f32 0.0, %v3580
    %v3582 = vpop.f32.mrf.mxu0
    %3583 = vdwg.mxu0
    %3584 = vmatpush.bf16.msra.mxu0 %v2204
    %3585 = vmatpush.bf16.msra.mxu0 %v2196
    %3586 = vmatpush.bf16.msra.mxu0 %v2188
    %3587 = vmatpush.bf16.msra.mxu0 %v2180
    %3588 = vmatpush.bf16.msra.mxu0 %v2172
    %3589 = vmatpush.bf16.msra.mxu0 %v2164
    %3590 = vmatpush.bf16.msra.mxu0 %v2156
    %3591 = vmatpush.bf16.msra.mxu0 %v2148
    %3592 = vmatmul.bf16.gmra.mxu0 %v3388
    %v3593 = vpop.f32.mrf.mxu0
    %v3594 = vadd.f32 %v3581, %v3593
    %v3595 = vpop.f32.mrf.mxu0
    %3596 = vdwg.mxu0
    %v3597 = vadd.f32 %v3379, %v3412
    %v3598 = vadd.f32 %v3380, %v3438
    %v3599 = vadd.f32 %v3381, %v3464
    %v3600 = vadd.f32 %v3382, %v3490
    %v3601 = vadd.f32 %v3383, %v3516
    %v3602 = vadd.f32 %v3384, %v3542
    %v3603 = vadd.f32 %v3385, %v3568
    %v3604 = vadd.f32 %v3386, %v3594
    %v3605 = vxor.u32 %v3597, 2147483648
    %v3606 = vxor.u32 %v3598, 2147483648
    %v3607 = vmul.f32 %v3605, 1.442695
    %v3608 = vpow.pop %v3607
    %v3609 = vmul.f32 %v3606, 1.442695
    %v3610 = vpow.pop %v3609
    %v3611 = vadd.f32 %v3608, 1.0
    %v3612 = vadd.f32 %v3610, 1.0
    %v3613 = vrcp.pop %v3611
    %v3614 = vmul.f32 %v3611, %v3613
    %v3615 = vsub.f32 1.0, %v3614
    %v3616 = vmul.f32 %v3613, %v3615
    %v3617 = vadd.f32 %v3613, %v3616
    %vm3618 = vweird.f32 %v3611
    %vm3619 = vweird.f32 %v3613
    %vm3620 = vmor %vm3618, %vm3619
    %v3621 = vsel %vm3620, %v3613, %v3617
    %v3622 = vand.u32 2147483647, %v3611
    %vm3623 = vcmp.eq.f32.partialorder %v3622, 8.507059e+37
    %v3624 = vand.u32 %v3611, 2147483648
    %v3625 = vor.u32 1.1754944e-38, %v3624
    %v3626 = vsel %vm3623, %v3625, %v3621
    %v3627 = vmul.f32 1.0, %v3626
    %v3628 = vrcp.pop %v3612
    %v3629 = vmul.f32 %v3612, %v3628
    %v3630 = vsub.f32 1.0, %v3629
    %v3631 = vmul.f32 %v3628, %v3630
    %v3632 = vadd.f32 %v3628, %v3631
    %vm3633 = vweird.f32 %v3612
    %vm3634 = vweird.f32 %v3628
    %vm3635 = vmor %vm3633, %vm3634
    %v3636 = vsel %vm3635, %v3628, %v3632
    %v3637 = vand.u32 2147483647, %v3612
    %vm3638 = vcmp.eq.f32.partialorder %v3637, 8.507059e+37
    %v3639 = vand.u32 %v3612, 2147483648
    %v3640 = vor.u32 1.1754944e-38, %v3639
    %v3641 = vsel %vm3638, %v3640, %v3636
    %v3642 = vmul.f32 1.0, %v3641
    %v3643 = vxor.u32 %v3599, 2147483648
    %v3644 = vxor.u32 %v3600, 2147483648
    %v3645 = vmul.f32 %v3643, 1.442695
    %v3646 = vpow.pop %v3645
    %v3647 = vmul.f32 %v3644, 1.442695
    %v3648 = vpow.pop %v3647
    %v3649 = vadd.f32 %v3646, 1.0
    %v3650 = vadd.f32 %v3648, 1.0
    %v3651 = vrcp.pop %v3649
    %v3652 = vmul.f32 %v3649, %v3651
    %v3653 = vsub.f32 1.0, %v3652
    %v3654 = vmul.f32 %v3651, %v3653
    %v3655 = vadd.f32 %v3651, %v3654
    %vm3656 = vweird.f32 %v3649
    %vm3657 = vweird.f32 %v3651
    %vm3658 = vmor %vm3656, %vm3657
    %v3659 = vsel %vm3658, %v3651, %v3655
    %v3660 = vand.u32 2147483647, %v3649
    %vm3661 = vcmp.eq.f32.partialorder %v3660, 8.507059e+37
    %v3662 = vand.u32 %v3649, 2147483648
    %v3663 = vor.u32 1.1754944e-38, %v3662
    %v3664 = vsel %vm3661, %v3663, %v3659
    %v3665 = vmul.f32 1.0, %v3664
    %v3666 = vrcp.pop %v3650
    %v3667 = vmul.f32 %v3650, %v3666
    %v3668 = vsub.f32 1.0, %v3667
    %v3669 = vmul.f32 %v3666, %v3668
    %v3670 = vadd.f32 %v3666, %v3669
    %vm3671 = vweird.f32 %v3650
    %vm3672 = vweird.f32 %v3666
    %vm3673 = vmor %vm3671, %vm3672
    %v3674 = vsel %vm3673, %v3666, %v3670
    %v3675 = vand.u32 2147483647, %v3650
    %vm3676 = vcmp.eq.f32.partialorder %v3675, 8.507059e+37
    %v3677 = vand.u32 %v3650, 2147483648
    %v3678 = vor.u32 1.1754944e-38, %v3677
    %v3679 = vsel %vm3676, %v3678, %v3674
    %v3680 = vmul.f32 1.0, %v3679
    %v3681 = vtanh.pop %v3601
    %v3682 = vtanh.pop %v3602
    %v3683 = vxor.u32 %v3603, 2147483648
    %v3684 = vxor.u32 %v3604, 2147483648
    %v3685 = vmul.f32 %v3683, 1.442695
    %v3686 = vpow.pop %v3685
    %v3687 = vmul.f32 %v3684, 1.442695
    %v3688 = vpow.pop %v3687
    %v3689 = vadd.f32 %v3686, 1.0
    %v3690 = vadd.f32 %v3688, 1.0
    %v3691 = vrcp.pop %v3689
    %v3692 = vmul.f32 %v3689, %v3691
    %v3693 = vsub.f32 1.0, %v3692
    %v3694 = vmul.f32 %v3691, %v3693
    %v3695 = vadd.f32 %v3691, %v3694
    %vm3696 = vweird.f32 %v3689
    %vm3697 = vweird.f32 %v3691
    %vm3698 = vmor %vm3696, %vm3697
    %v3699 = vsel %vm3698, %v3691, %v3695
    %v3700 = vand.u32 2147483647, %v3689
    %vm3701 = vcmp.eq.f32.partialorder %v3700, 8.507059e+37
    %v3702 = vand.u32 %v3689, 2147483648
    %v3703 = vor.u32 1.1754944e-38, %v3702
    %v3704 = vsel %vm3701, %v3703, %v3699
    %v3705 = vmul.f32 1.0, %v3704
    %v3706 = vrcp.pop %v3690
    %v3707 = vmul.f32 %v3690, %v3706
    %v3708 = vsub.f32 1.0, %v3707
    %v3709 = vmul.f32 %v3706, %v3708
    %v3710 = vadd.f32 %v3706, %v3709
    %vm3711 = vweird.f32 %v3690
    %vm3712 = vweird.f32 %v3706
    %vm3713 = vmor %vm3711, %vm3712
    %v3714 = vsel %vm3713, %v3706, %v3710
    %v3715 = vand.u32 2147483647, %v3690
    %vm3716 = vcmp.eq.f32.partialorder %v3715, 8.507059e+37
    %v3717 = vand.u32 %v3690, 2147483648
    %v3718 = vor.u32 1.1754944e-38, %v3717
    %v3719 = vsel %vm3716, %v3718, %v3714
    %v3720 = vmul.f32 1.0, %v3719
    %v3721 = vmul.f32 %v3665, %v3373
    %v3722 = vmul.f32 %v3680, %v3374
    %v3723 = vmul.f32 %v3627, %v3681
    %v3724 = vmul.f32 %v3642, %v3682
    %v3725 = vadd.f32 %v3721, %v3723
    %v3726 = vadd.f32 %v3722, %v3724
    %v3727 = vtanh.pop %v3725
    %v3728 = vtanh.pop %v3726
    %v3729 = vmul.f32 %v3705, %v3727
    %v3730 = vmul.f32 %v3720, %v3728
    %v3731 = vld [vmem:[#allocation2 + $0x200] sm:$0xff]
    %v3732 = vld [vmem:[#allocation2 + $0x208] sm:$0xff]
    %v3733 = vld [vmem:[#allocation2 + $0x210] sm:$0xff]
    %v3734 = vld [vmem:[#allocation2 + $0x218] sm:$0xff]
    %v3735 = vld [vmem:[#allocation2 + $0x220] sm:$0xff]
    %v3736 = vld [vmem:[#allocation2 + $0x228] sm:$0xff]
    %v3737 = vld [vmem:[#allocation2 + $0x230] sm:$0xff]
    %v3738 = vld [vmem:[#allocation2 + $0x238] sm:$0xff]
    %v3739 = vpack.c.bf16 %v3729, %v3729
    %v3740 = vpack.c.bf16 %v3730, %v3730
    %3741 = vmatpush.bf16.msra.mxu0 %v2133
    %3742 = vmatpush.bf16.msra.mxu0 %v2125
    %3743 = vmatpush.bf16.msra.mxu0 %v2117
    %3744 = vmatpush.bf16.msra.mxu0 %v2109
    %3745 = vmatpush.bf16.msra.mxu0 %v2101
    %3746 = vmatpush.bf16.msra.mxu0 %v2093
    %3747 = vmatpush.bf16.msra.mxu0 %v2085
    %3748 = vmatpush.bf16.msra.mxu0 %v2077
    %3749 = vmatmul.bf16.gmra.mxu0 %v3739
    %v3750 = vpop.f32.mrf.mxu0
    %v3751 = vadd.f32 0.0, %v3750
    %v3752 = vpop.f32.mrf.mxu0
    %3753 = vdwg.mxu0
    %3754 = vmatpush.bf16.msra.mxu0 %v2197
    %3755 = vmatpush.bf16.msra.mxu0 %v2189
    %3756 = vmatpush.bf16.msra.mxu0 %v2181
    %3757 = vmatpush.bf16.msra.mxu0 %v2173
    %3758 = vmatpush.bf16.msra.mxu0 %v2165
    %3759 = vmatpush.bf16.msra.mxu0 %v2157
    %3760 = vmatpush.bf16.msra.mxu0 %v2149
    %3761 = vmatpush.bf16.msra.mxu0 %v2141
    %3762 = vmatmul.bf16.gmra.mxu0 %v3740
    %v3763 = vpop.f32.mrf.mxu0
    %v3764 = vadd.f32 %v3751, %v3763
    %v3765 = vpop.f32.mrf.mxu0
    %3766 = vdwg.mxu0
    %3767 = vmatpush.bf16.msra.mxu0 %v2134
    %3768 = vmatpush.bf16.msra.mxu0 %v2126
    %3769 = vmatpush.bf16.msra.mxu0 %v2118
    %3770 = vmatpush.bf16.msra.mxu0 %v2110
    %3771 = vmatpush.bf16.msra.mxu0 %v2102
    %3772 = vmatpush.bf16.msra.mxu0 %v2094
    %3773 = vmatpush.bf16.msra.mxu0 %v2086
    %3774 = vmatpush.bf16.msra.mxu0 %v2078
    %3775 = vmatmul.bf16.gmra.mxu0 %v3739
    %v3776 = vpop.f32.mrf.mxu0
    %v3777 = vadd.f32 0.0, %v3776
    %v3778 = vpop.f32.mrf.mxu0
    %3779 = vdwg.mxu0
    %3780 = vmatpush.bf16.msra.mxu0 %v2198
    %3781 = vmatpush.bf16.msra.mxu0 %v2190
    %3782 = vmatpush.bf16.msra.mxu0 %v2182
    %3783 = vmatpush.bf16.msra.mxu0 %v2174
    %3784 = vmatpush.bf16.msra.mxu0 %v2166
    %3785 = vmatpush.bf16.msra.mxu0 %v2158
    %3786 = vmatpush.bf16.msra.mxu0 %v2150
    %3787 = vmatpush.bf16.msra.mxu0 %v2142
    %3788 = vmatmul.bf16.gmra.mxu0 %v3740
    %v3789 = vpop.f32.mrf.mxu0
    %v3790 = vadd.f32 %v3777, %v3789
    %v3791 = vpop.f32.mrf.mxu0
    %3792 = vdwg.mxu0
    %3793 = vmatpush.bf16.msra.mxu0 %v2135
    %3794 = vmatpush.bf16.msra.mxu0 %v2127
    %3795 = vmatpush.bf16.msra.mxu0 %v2119
    %3796 = vmatpush.bf16.msra.mxu0 %v2111
    %3797 = vmatpush.bf16.msra.mxu0 %v2103
    %3798 = vmatpush.bf16.msra.mxu0 %v2095
    %3799 = vmatpush.bf16.msra.mxu0 %v2087
    %3800 = vmatpush.bf16.msra.mxu0 %v2079
    %3801 = vmatmul.bf16.gmra.mxu0 %v3739
    %v3802 = vpop.f32.mrf.mxu0
    %v3803 = vadd.f32 0.0, %v3802
    %v3804 = vpop.f32.mrf.mxu0
    %3805 = vdwg.mxu0
    %3806 = vmatpush.bf16.msra.mxu0 %v2199
    %3807 = vmatpush.bf16.msra.mxu0 %v2191
    %3808 = vmatpush.bf16.msra.mxu0 %v2183
    %3809 = vmatpush.bf16.msra.mxu0 %v2175
    %3810 = vmatpush.bf16.msra.mxu0 %v2167
    %3811 = vmatpush.bf16.msra.mxu0 %v2159
    %3812 = vmatpush.bf16.msra.mxu0 %v2151
    %3813 = vmatpush.bf16.msra.mxu0 %v2143
    %3814 = vmatmul.bf16.gmra.mxu0 %v3740
    %v3815 = vpop.f32.mrf.mxu0
    %v3816 = vadd.f32 %v3803, %v3815
    %v3817 = vpop.f32.mrf.mxu0
    %3818 = vdwg.mxu0
    %3819 = vmatpush.bf16.msra.mxu0 %v2136
    %3820 = vmatpush.bf16.msra.mxu0 %v2128
    %3821 = vmatpush.bf16.msra.mxu0 %v2120
    %3822 = vmatpush.bf16.msra.mxu0 %v2112
    %3823 = vmatpush.bf16.msra.mxu0 %v2104
    %3824 = vmatpush.bf16.msra.mxu0 %v2096
    %3825 = vmatpush.bf16.msra.mxu0 %v2088
    %3826 = vmatpush.bf16.msra.mxu0 %v2080
    %3827 = vmatmul.bf16.gmra.mxu0 %v3739
    %v3828 = vpop.f32.mrf.mxu0
    %v3829 = vadd.f32 0.0, %v3828
    %v3830 = vpop.f32.mrf.mxu0
    %3831 = vdwg.mxu0
    %3832 = vmatpush.bf16.msra.mxu0 %v2200
    %3833 = vmatpush.bf16.msra.mxu0 %v2192
    %3834 = vmatpush.bf16.msra.mxu0 %v2184
    %3835 = vmatpush.bf16.msra.mxu0 %v2176
    %3836 = vmatpush.bf16.msra.mxu0 %v2168
    %3837 = vmatpush.bf16.msra.mxu0 %v2160
    %3838 = vmatpush.bf16.msra.mxu0 %v2152
    %3839 = vmatpush.bf16.msra.mxu0 %v2144
    %3840 = vmatmul.bf16.gmra.mxu0 %v3740
    %v3841 = vpop.f32.mrf.mxu0
    %v3842 = vadd.f32 %v3829, %v3841
    %v3843 = vpop.f32.mrf.mxu0
    %3844 = vdwg.mxu0
    %3845 = vmatpush.bf16.msra.mxu0 %v2137
    %3846 = vmatpush.bf16.msra.mxu0 %v2129
    %3847 = vmatpush.bf16.msra.mxu0 %v2121
    %3848 = vmatpush.bf16.msra.mxu0 %v2113
    %3849 = vmatpush.bf16.msra.mxu0 %v2105
    %3850 = vmatpush.bf16.msra.mxu0 %v2097
    %3851 = vmatpush.bf16.msra.mxu0 %v2089
    %3852 = vmatpush.bf16.msra.mxu0 %v2081
    %3853 = vmatmul.bf16.gmra.mxu0 %v3739
    %v3854 = vpop.f32.mrf.mxu0
    %v3855 = vadd.f32 0.0, %v3854
    %v3856 = vpop.f32.mrf.mxu0
    %3857 = vdwg.mxu0
    %3858 = vmatpush.bf16.msra.mxu0 %v2201
    %3859 = vmatpush.bf16.msra.mxu0 %v2193
    %3860 = vmatpush.bf16.msra.mxu0 %v2185
    %3861 = vmatpush.bf16.msra.mxu0 %v2177
    %3862 = vmatpush.bf16.msra.mxu0 %v2169
    %3863 = vmatpush.bf16.msra.mxu0 %v2161
    %3864 = vmatpush.bf16.msra.mxu0 %v2153
    %3865 = vmatpush.bf16.msra.mxu0 %v2145
    %3866 = vmatmul.bf16.gmra.mxu0 %v3740
    %v3867 = vpop.f32.mrf.mxu0
    %v3868 = vadd.f32 %v3855, %v3867
    %v3869 = vpop.f32.mrf.mxu0
    %3870 = vdwg.mxu0
    %3871 = vmatpush.bf16.msra.mxu0 %v2138
    %3872 = vmatpush.bf16.msra.mxu0 %v2130
    %3873 = vmatpush.bf16.msra.mxu0 %v2122
    %3874 = vmatpush.bf16.msra.mxu0 %v2114
    %3875 = vmatpush.bf16.msra.mxu0 %v2106
    %3876 = vmatpush.bf16.msra.mxu0 %v2098
    %3877 = vmatpush.bf16.msra.mxu0 %v2090
    %3878 = vmatpush.bf16.msra.mxu0 %v2082
    %3879 = vmatmul.bf16.gmra.mxu0 %v3739
    %v3880 = vpop.f32.mrf.mxu0
    %v3881 = vadd.f32 0.0, %v3880
    %v3882 = vpop.f32.mrf.mxu0
    %3883 = vdwg.mxu0
    %3884 = vmatpush.bf16.msra.mxu0 %v2202
    %3885 = vmatpush.bf16.msra.mxu0 %v2194
    %3886 = vmatpush.bf16.msra.mxu0 %v2186
    %3887 = vmatpush.bf16.msra.mxu0 %v2178
    %3888 = vmatpush.bf16.msra.mxu0 %v2170
    %3889 = vmatpush.bf16.msra.mxu0 %v2162
    %3890 = vmatpush.bf16.msra.mxu0 %v2154
    %3891 = vmatpush.bf16.msra.mxu0 %v2146
    %3892 = vmatmul.bf16.gmra.mxu0 %v3740
    %v3893 = vpop.f32.mrf.mxu0
    %v3894 = vadd.f32 %v3881, %v3893
    %v3895 = vpop.f32.mrf.mxu0
    %3896 = vdwg.mxu0
    %3897 = vmatpush.bf16.msra.mxu0 %v2139
    %3898 = vmatpush.bf16.msra.mxu0 %v2131
    %3899 = vmatpush.bf16.msra.mxu0 %v2123
    %3900 = vmatpush.bf16.msra.mxu0 %v2115
    %3901 = vmatpush.bf16.msra.mxu0 %v2107
    %3902 = vmatpush.bf16.msra.mxu0 %v2099
    %3903 = vmatpush.bf16.msra.mxu0 %v2091
    %3904 = vmatpush.bf16.msra.mxu0 %v2083
    %3905 = vmatmul.bf16.gmra.mxu0 %v3739
    %v3906 = vpop.f32.mrf.mxu0
    %v3907 = vadd.f32 0.0, %v3906
    %v3908 = vpop.f32.mrf.mxu0
    %3909 = vdwg.mxu0
    %3910 = vmatpush.bf16.msra.mxu0 %v2203
    %3911 = vmatpush.bf16.msra.mxu0 %v2195
    %3912 = vmatpush.bf16.msra.mxu0 %v2187
    %3913 = vmatpush.bf16.msra.mxu0 %v2179
    %3914 = vmatpush.bf16.msra.mxu0 %v2171
    %3915 = vmatpush.bf16.msra.mxu0 %v2163
    %3916 = vmatpush.bf16.msra.mxu0 %v2155
    %3917 = vmatpush.bf16.msra.mxu0 %v2147
    %3918 = vmatmul.bf16.gmra.mxu0 %v3740
    %v3919 = vpop.f32.mrf.mxu0
    %v3920 = vadd.f32 %v3907, %v3919
    %v3921 = vpop.f32.mrf.mxu0
    %3922 = vdwg.mxu0
    %3923 = vmatpush.bf16.msra.mxu0 %v2140
    %3924 = vmatpush.bf16.msra.mxu0 %v2132
    %3925 = vmatpush.bf16.msra.mxu0 %v2124
    %3926 = vmatpush.bf16.msra.mxu0 %v2116
    %3927 = vmatpush.bf16.msra.mxu0 %v2108
    %3928 = vmatpush.bf16.msra.mxu0 %v2100
    %3929 = vmatpush.bf16.msra.mxu0 %v2092
    %3930 = vmatpush.bf16.msra.mxu0 %v2084
    %3931 = vmatmul.bf16.gmra.mxu0 %v3739
    %v3932 = vpop.f32.mrf.mxu0
    %v3933 = vadd.f32 0.0, %v3932
    %v3934 = vpop.f32.mrf.mxu0
    %3935 = vdwg.mxu0
    %3936 = vmatpush.bf16.msra.mxu0 %v2204
    %3937 = vmatpush.bf16.msra.mxu0 %v2196
    %3938 = vmatpush.bf16.msra.mxu0 %v2188
    %3939 = vmatpush.bf16.msra.mxu0 %v2180
    %3940 = vmatpush.bf16.msra.mxu0 %v2172
    %3941 = vmatpush.bf16.msra.mxu0 %v2164
    %3942 = vmatpush.bf16.msra.mxu0 %v2156
    %3943 = vmatpush.bf16.msra.mxu0 %v2148
    %3944 = vmatmul.bf16.gmra.mxu0 %v3740
    %v3945 = vpop.f32.mrf.mxu0
    %v3946 = vadd.f32 %v3933, %v3945
    %v3947 = vpop.f32.mrf.mxu0
    %3948 = vdwg.mxu0
    %v3949 = vadd.f32 %v3731, %v3764
    %v3950 = vadd.f32 %v3732, %v3790
    %v3951 = vadd.f32 %v3733, %v3816
    %v3952 = vadd.f32 %v3734, %v3842
    %v3953 = vadd.f32 %v3735, %v3868
    %v3954 = vadd.f32 %v3736, %v3894
    %v3955 = vadd.f32 %v3737, %v3920
    %v3956 = vadd.f32 %v3738, %v3946
    %v3957 = vxor.u32 %v3949, 2147483648
    %v3958 = vxor.u32 %v3950, 2147483648
    %v3959 = vmul.f32 %v3957, 1.442695
    %v3960 = vpow.pop %v3959
    %v3961 = vmul.f32 %v3958, 1.442695
    %v3962 = vpow.pop %v3961
    %v3963 = vadd.f32 %v3960, 1.0
    %v3964 = vadd.f32 %v3962, 1.0
    %v3965 = vrcp.pop %v3963
    %v3966 = vmul.f32 %v3963, %v3965
    %v3967 = vsub.f32 1.0, %v3966
    %v3968 = vmul.f32 %v3965, %v3967
    %v3969 = vadd.f32 %v3965, %v3968
    %vm3970 = vweird.f32 %v3963
    %vm3971 = vweird.f32 %v3965
    %vm3972 = vmor %vm3970, %vm3971
    %v3973 = vsel %vm3972, %v3965, %v3969
    %v3974 = vand.u32 2147483647, %v3963
    %vm3975 = vcmp.eq.f32.partialorder %v3974, 8.507059e+37
    %v3976 = vand.u32 %v3963, 2147483648
    %v3977 = vor.u32 1.1754944e-38, %v3976
    %v3978 = vsel %vm3975, %v3977, %v3973
    %v3979 = vmul.f32 1.0, %v3978
    %v3980 = vrcp.pop %v3964
    %v3981 = vmul.f32 %v3964, %v3980
    %v3982 = vsub.f32 1.0, %v3981
    %v3983 = vmul.f32 %v3980, %v3982
    %v3984 = vadd.f32 %v3980, %v3983
    %vm3985 = vweird.f32 %v3964
    %vm3986 = vweird.f32 %v3980
    %vm3987 = vmor %vm3985, %vm3986
    %v3988 = vsel %vm3987, %v3980, %v3984
    %v3989 = vand.u32 2147483647, %v3964
    %vm3990 = vcmp.eq.f32.partialorder %v3989, 8.507059e+37
    %v3991 = vand.u32 %v3964, 2147483648
    %v3992 = vor.u32 1.1754944e-38, %v3991
    %v3993 = vsel %vm3990, %v3992, %v3988
    %v3994 = vmul.f32 1.0, %v3993
    %v3995 = vxor.u32 %v3951, 2147483648
    %v3996 = vxor.u32 %v3952, 2147483648
    %v3997 = vmul.f32 %v3995, 1.442695
    %v3998 = vpow.pop %v3997
    %v3999 = vmul.f32 %v3996, 1.442695
    %v4000 = vpow.pop %v3999
    %v4001 = vadd.f32 %v3998, 1.0
    %v4002 = vadd.f32 %v4000, 1.0
    %v4003 = vrcp.pop %v4001
    %v4004 = vmul.f32 %v4001, %v4003
    %v4005 = vsub.f32 1.0, %v4004
    %v4006 = vmul.f32 %v4003, %v4005
    %v4007 = vadd.f32 %v4003, %v4006
    %vm4008 = vweird.f32 %v4001
    %vm4009 = vweird.f32 %v4003
    %vm4010 = vmor %vm4008, %vm4009
    %v4011 = vsel %vm4010, %v4003, %v4007
    %v4012 = vand.u32 2147483647, %v4001
    %vm4013 = vcmp.eq.f32.partialorder %v4012, 8.507059e+37
    %v4014 = vand.u32 %v4001, 2147483648
    %v4015 = vor.u32 1.1754944e-38, %v4014
    %v4016 = vsel %vm4013, %v4015, %v4011
    %v4017 = vmul.f32 1.0, %v4016
    %v4018 = vrcp.pop %v4002
    %v4019 = vmul.f32 %v4002, %v4018
    %v4020 = vsub.f32 1.0, %v4019
    %v4021 = vmul.f32 %v4018, %v4020
    %v4022 = vadd.f32 %v4018, %v4021
    %vm4023 = vweird.f32 %v4002
    %vm4024 = vweird.f32 %v4018
    %vm4025 = vmor %vm4023, %vm4024
    %v4026 = vsel %vm4025, %v4018, %v4022
    %v4027 = vand.u32 2147483647, %v4002
    %vm4028 = vcmp.eq.f32.partialorder %v4027, 8.507059e+37
    %v4029 = vand.u32 %v4002, 2147483648
    %v4030 = vor.u32 1.1754944e-38, %v4029
    %v4031 = vsel %vm4028, %v4030, %v4026
    %v4032 = vmul.f32 1.0, %v4031
    %v4033 = vtanh.pop %v3953
    %v4034 = vtanh.pop %v3954
    %v4035 = vxor.u32 %v3955, 2147483648
    %v4036 = vxor.u32 %v3956, 2147483648
    %v4037 = vmul.f32 %v4035, 1.442695
    %v4038 = vpow.pop %v4037
    %v4039 = vmul.f32 %v4036, 1.442695
    %v4040 = vpow.pop %v4039
    %v4041 = vadd.f32 %v4038, 1.0
    %v4042 = vadd.f32 %v4040, 1.0
    %v4043 = vrcp.pop %v4041
    %v4044 = vmul.f32 %v4041, %v4043
    %v4045 = vsub.f32 1.0, %v4044
    %v4046 = vmul.f32 %v4043, %v4045
    %v4047 = vadd.f32 %v4043, %v4046
    %vm4048 = vweird.f32 %v4041
    %vm4049 = vweird.f32 %v4043
    %vm4050 = vmor %vm4048, %vm4049
    %v4051 = vsel %vm4050, %v4043, %v4047
    %v4052 = vand.u32 2147483647, %v4041
    %vm4053 = vcmp.eq.f32.partialorder %v4052, 8.507059e+37
    %v4054 = vand.u32 %v4041, 2147483648
    %v4055 = vor.u32 1.1754944e-38, %v4054
    %v4056 = vsel %vm4053, %v4055, %v4051
    %v4057 = vmul.f32 1.0, %v4056
    %v4058 = vrcp.pop %v4042
    %v4059 = vmul.f32 %v4042, %v4058
    %v4060 = vsub.f32 1.0, %v4059
    %v4061 = vmul.f32 %v4058, %v4060
    %v4062 = vadd.f32 %v4058, %v4061
    %vm4063 = vweird.f32 %v4042
    %vm4064 = vweird.f32 %v4058
    %vm4065 = vmor %vm4063, %vm4064
    %v4066 = vsel %vm4065, %v4058, %v4062
    %v4067 = vand.u32 2147483647, %v4042
    %vm4068 = vcmp.eq.f32.partialorder %v4067, 8.507059e+37
    %v4069 = vand.u32 %v4042, 2147483648
    %v4070 = vor.u32 1.1754944e-38, %v4069
    %v4071 = vsel %vm4068, %v4070, %v4066
    %v4072 = vmul.f32 1.0, %v4071
    %v4073 = vmul.f32 %v4017, %v3725
    %v4074 = vmul.f32 %v4032, %v3726
    %v4075 = vmul.f32 %v3979, %v4033
    %v4076 = vmul.f32 %v3994, %v4034
    %v4077 = vadd.f32 %v4073, %v4075
    %v4078 = vadd.f32 %v4074, %v4076
    %v4079 = vtanh.pop %v4077
    %v4080 = vtanh.pop %v4078
    %v4081 = vmul.f32 %v4057, %v4079
    %v4082 = vmul.f32 %v4072, %v4080
    %v4083 = vld [vmem:[#allocation2 + $0x280] sm:$0xff]
    %v4084 = vld [vmem:[#allocation2 + $0x288] sm:$0xff]
    %v4085 = vld [vmem:[#allocation2 + $0x290] sm:$0xff]
    %v4086 = vld [vmem:[#allocation2 + $0x298] sm:$0xff]
    %v4087 = vld [vmem:[#allocation2 + $0x2a0] sm:$0xff]
    %v4088 = vld [vmem:[#allocation2 + $0x2a8] sm:$0xff]
    %v4089 = vld [vmem:[#allocation2 + $0x2b0] sm:$0xff]
    %v4090 = vld [vmem:[#allocation2 + $0x2b8] sm:$0xff]
    %v4091 = vpack.c.bf16 %v4081, %v4081
    %v4092 = vpack.c.bf16 %v4082, %v4082
    %4093 = vmatpush.bf16.msra.mxu0 %v2133
    %4094 = vmatpush.bf16.msra.mxu0 %v2125
    %4095 = vmatpush.bf16.msra.mxu0 %v2117
    %4096 = vmatpush.bf16.msra.mxu0 %v2109
    %4097 = vmatpush.bf16.msra.mxu0 %v2101
    %4098 = vmatpush.bf16.msra.mxu0 %v2093
    %4099 = vmatpush.bf16.msra.mxu0 %v2085
    %4100 = vmatpush.bf16.msra.mxu0 %v2077
    %4101 = vmatmul.bf16.gmra.mxu0 %v4091
    %v4102 = vpop.f32.mrf.mxu0
    %v4103 = vadd.f32 0.0, %v4102
    %v4104 = vpop.f32.mrf.mxu0
    %4105 = vdwg.mxu0
    %4106 = vmatpush.bf16.msra.mxu0 %v2197
    %4107 = vmatpush.bf16.msra.mxu0 %v2189
    %4108 = vmatpush.bf16.msra.mxu0 %v2181
    %4109 = vmatpush.bf16.msra.mxu0 %v2173
    %4110 = vmatpush.bf16.msra.mxu0 %v2165
    %4111 = vmatpush.bf16.msra.mxu0 %v2157
    %4112 = vmatpush.bf16.msra.mxu0 %v2149
    %4113 = vmatpush.bf16.msra.mxu0 %v2141
    %4114 = vmatmul.bf16.gmra.mxu0 %v4092
    %v4115 = vpop.f32.mrf.mxu0
    %v4116 = vadd.f32 %v4103, %v4115
    %v4117 = vpop.f32.mrf.mxu0
    %4118 = vdwg.mxu0
    %4119 = vmatpush.bf16.msra.mxu0 %v2134
    %4120 = vmatpush.bf16.msra.mxu0 %v2126
    %4121 = vmatpush.bf16.msra.mxu0 %v2118
    %4122 = vmatpush.bf16.msra.mxu0 %v2110
    %4123 = vmatpush.bf16.msra.mxu0 %v2102
    %4124 = vmatpush.bf16.msra.mxu0 %v2094
    %4125 = vmatpush.bf16.msra.mxu0 %v2086
    %4126 = vmatpush.bf16.msra.mxu0 %v2078
    %4127 = vmatmul.bf16.gmra.mxu0 %v4091
    %v4128 = vpop.f32.mrf.mxu0
    %v4129 = vadd.f32 0.0, %v4128
    %v4130 = vpop.f32.mrf.mxu0
    %4131 = vdwg.mxu0
    %4132 = vmatpush.bf16.msra.mxu0 %v2198
    %4133 = vmatpush.bf16.msra.mxu0 %v2190
    %4134 = vmatpush.bf16.msra.mxu0 %v2182
    %4135 = vmatpush.bf16.msra.mxu0 %v2174
    %4136 = vmatpush.bf16.msra.mxu0 %v2166
    %4137 = vmatpush.bf16.msra.mxu0 %v2158
    %4138 = vmatpush.bf16.msra.mxu0 %v2150
    %4139 = vmatpush.bf16.msra.mxu0 %v2142
    %4140 = vmatmul.bf16.gmra.mxu0 %v4092
    %v4141 = vpop.f32.mrf.mxu0
    %v4142 = vadd.f32 %v4129, %v4141
    %v4143 = vpop.f32.mrf.mxu0
    %4144 = vdwg.mxu0
    %4145 = vmatpush.bf16.msra.mxu0 %v2135
    %4146 = vmatpush.bf16.msra.mxu0 %v2127
    %4147 = vmatpush.bf16.msra.mxu0 %v2119
    %4148 = vmatpush.bf16.msra.mxu0 %v2111
    %4149 = vmatpush.bf16.msra.mxu0 %v2103
    %4150 = vmatpush.bf16.msra.mxu0 %v2095
    %4151 = vmatpush.bf16.msra.mxu0 %v2087
    %4152 = vmatpush.bf16.msra.mxu0 %v2079
    %4153 = vmatmul.bf16.gmra.mxu0 %v4091
    %v4154 = vpop.f32.mrf.mxu0
    %v4155 = vadd.f32 0.0, %v4154
    %v4156 = vpop.f32.mrf.mxu0
    %4157 = vdwg.mxu0
    %4158 = vmatpush.bf16.msra.mxu0 %v2199
    %4159 = vmatpush.bf16.msra.mxu0 %v2191
    %4160 = vmatpush.bf16.msra.mxu0 %v2183
    %4161 = vmatpush.bf16.msra.mxu0 %v2175
    %4162 = vmatpush.bf16.msra.mxu0 %v2167
    %4163 = vmatpush.bf16.msra.mxu0 %v2159
    %4164 = vmatpush.bf16.msra.mxu0 %v2151
    %4165 = vmatpush.bf16.msra.mxu0 %v2143
    %4166 = vmatmul.bf16.gmra.mxu0 %v4092
    %v4167 = vpop.f32.mrf.mxu0
    %v4168 = vadd.f32 %v4155, %v4167
    %v4169 = vpop.f32.mrf.mxu0
    %4170 = vdwg.mxu0
    %4171 = vmatpush.bf16.msra.mxu0 %v2136
    %4172 = vmatpush.bf16.msra.mxu0 %v2128
    %4173 = vmatpush.bf16.msra.mxu0 %v2120
    %4174 = vmatpush.bf16.msra.mxu0 %v2112
    %4175 = vmatpush.bf16.msra.mxu0 %v2104
    %4176 = vmatpush.bf16.msra.mxu0 %v2096
    %4177 = vmatpush.bf16.msra.mxu0 %v2088
    %4178 = vmatpush.bf16.msra.mxu0 %v2080
    %4179 = vmatmul.bf16.gmra.mxu0 %v4091
    %v4180 = vpop.f32.mrf.mxu0
    %v4181 = vadd.f32 0.0, %v4180
    %v4182 = vpop.f32.mrf.mxu0
    %4183 = vdwg.mxu0
    %4184 = vmatpush.bf16.msra.mxu0 %v2200
    %4185 = vmatpush.bf16.msra.mxu0 %v2192
    %4186 = vmatpush.bf16.msra.mxu0 %v2184
    %4187 = vmatpush.bf16.msra.mxu0 %v2176
    %4188 = vmatpush.bf16.msra.mxu0 %v2168
    %4189 = vmatpush.bf16.msra.mxu0 %v2160
    %4190 = vmatpush.bf16.msra.mxu0 %v2152
    %4191 = vmatpush.bf16.msra.mxu0 %v2144
    %4192 = vmatmul.bf16.gmra.mxu0 %v4092
    %v4193 = vpop.f32.mrf.mxu0
    %v4194 = vadd.f32 %v4181, %v4193
    %v4195 = vpop.f32.mrf.mxu0
    %4196 = vdwg.mxu0
    %4197 = vmatpush.bf16.msra.mxu0 %v2137
    %4198 = vmatpush.bf16.msra.mxu0 %v2129
    %4199 = vmatpush.bf16.msra.mxu0 %v2121
    %4200 = vmatpush.bf16.msra.mxu0 %v2113
    %4201 = vmatpush.bf16.msra.mxu0 %v2105
    %4202 = vmatpush.bf16.msra.mxu0 %v2097
    %4203 = vmatpush.bf16.msra.mxu0 %v2089
    %4204 = vmatpush.bf16.msra.mxu0 %v2081
    %4205 = vmatmul.bf16.gmra.mxu0 %v4091
    %v4206 = vpop.f32.mrf.mxu0
    %v4207 = vadd.f32 0.0, %v4206
    %v4208 = vpop.f32.mrf.mxu0
    %4209 = vdwg.mxu0
    %4210 = vmatpush.bf16.msra.mxu0 %v2201
    %4211 = vmatpush.bf16.msra.mxu0 %v2193
    %4212 = vmatpush.bf16.msra.mxu0 %v2185
    %4213 = vmatpush.bf16.msra.mxu0 %v2177
    %4214 = vmatpush.bf16.msra.mxu0 %v2169
    %4215 = vmatpush.bf16.msra.mxu0 %v2161
    %4216 = vmatpush.bf16.msra.mxu0 %v2153
    %4217 = vmatpush.bf16.msra.mxu0 %v2145
    %4218 = vmatmul.bf16.gmra.mxu0 %v4092
    %v4219 = vpop.f32.mrf.mxu0
    %v4220 = vadd.f32 %v4207, %v4219
    %v4221 = vpop.f32.mrf.mxu0
    %4222 = vdwg.mxu0
    %4223 = vmatpush.bf16.msra.mxu0 %v2138
    %4224 = vmatpush.bf16.msra.mxu0 %v2130
    %4225 = vmatpush.bf16.msra.mxu0 %v2122
    %4226 = vmatpush.bf16.msra.mxu0 %v2114
    %4227 = vmatpush.bf16.msra.mxu0 %v2106
    %4228 = vmatpush.bf16.msra.mxu0 %v2098
    %4229 = vmatpush.bf16.msra.mxu0 %v2090
    %4230 = vmatpush.bf16.msra.mxu0 %v2082
    %4231 = vmatmul.bf16.gmra.mxu0 %v4091
    %v4232 = vpop.f32.mrf.mxu0
    %v4233 = vadd.f32 0.0, %v4232
    %v4234 = vpop.f32.mrf.mxu0
    %4235 = vdwg.mxu0
    %4236 = vmatpush.bf16.msra.mxu0 %v2202
    %4237 = vmatpush.bf16.msra.mxu0 %v2194
    %4238 = vmatpush.bf16.msra.mxu0 %v2186
    %4239 = vmatpush.bf16.msra.mxu0 %v2178
    %4240 = vmatpush.bf16.msra.mxu0 %v2170
    %4241 = vmatpush.bf16.msra.mxu0 %v2162
    %4242 = vmatpush.bf16.msra.mxu0 %v2154
    %4243 = vmatpush.bf16.msra.mxu0 %v2146
    %4244 = vmatmul.bf16.gmra.mxu0 %v4092
    %v4245 = vpop.f32.mrf.mxu0
    %v4246 = vadd.f32 %v4233, %v4245
    %v4247 = vpop.f32.mrf.mxu0
    %4248 = vdwg.mxu0
    %4249 = vmatpush.bf16.msra.mxu0 %v2139
    %4250 = vmatpush.bf16.msra.mxu0 %v2131
    %4251 = vmatpush.bf16.msra.mxu0 %v2123
    %4252 = vmatpush.bf16.msra.mxu0 %v2115
    %4253 = vmatpush.bf16.msra.mxu0 %v2107
    %4254 = vmatpush.bf16.msra.mxu0 %v2099
    %4255 = vmatpush.bf16.msra.mxu0 %v2091
    %4256 = vmatpush.bf16.msra.mxu0 %v2083
    %4257 = vmatmul.bf16.gmra.mxu0 %v4091
    %v4258 = vpop.f32.mrf.mxu0
    %v4259 = vadd.f32 0.0, %v4258
    %v4260 = vpop.f32.mrf.mxu0
    %4261 = vdwg.mxu0
    %4262 = vmatpush.bf16.msra.mxu0 %v2203
    %4263 = vmatpush.bf16.msra.mxu0 %v2195
    %4264 = vmatpush.bf16.msra.mxu0 %v2187
    %4265 = vmatpush.bf16.msra.mxu0 %v2179
    %4266 = vmatpush.bf16.msra.mxu0 %v2171
    %4267 = vmatpush.bf16.msra.mxu0 %v2163
    %4268 = vmatpush.bf16.msra.mxu0 %v2155
    %4269 = vmatpush.bf16.msra.mxu0 %v2147
    %4270 = vmatmul.bf16.gmra.mxu0 %v4092
    %v4271 = vpop.f32.mrf.mxu0
    %v4272 = vadd.f32 %v4259, %v4271
    %v4273 = vpop.f32.mrf.mxu0
    %4274 = vdwg.mxu0
    %4275 = vmatpush.bf16.msra.mxu0 %v2140
    %4276 = vmatpush.bf16.msra.mxu0 %v2132
    %4277 = vmatpush.bf16.msra.mxu0 %v2124
    %4278 = vmatpush.bf16.msra.mxu0 %v2116
    %4279 = vmatpush.bf16.msra.mxu0 %v2108
    %4280 = vmatpush.bf16.msra.mxu0 %v2100
    %4281 = vmatpush.bf16.msra.mxu0 %v2092
    %4282 = vmatpush.bf16.msra.mxu0 %v2084
    %4283 = vmatmul.bf16.gmra.mxu0 %v4091
    %v4284 = vpop.f32.mrf.mxu0
    %v4285 = vadd.f32 0.0, %v4284
    %v4286 = vpop.f32.mrf.mxu0
    %4287 = vdwg.mxu0
    %4288 = vmatpush.bf16.msra.mxu0 %v2204
    %4289 = vmatpush.bf16.msra.mxu0 %v2196
    %4290 = vmatpush.bf16.msra.mxu0 %v2188
    %4291 = vmatpush.bf16.msra.mxu0 %v2180
    %4292 = vmatpush.bf16.msra.mxu0 %v2172
    %4293 = vmatpush.bf16.msra.mxu0 %v2164
    %4294 = vmatpush.bf16.msra.mxu0 %v2156
    %4295 = vmatpush.bf16.msra.mxu0 %v2148
    %4296 = vmatmul.bf16.gmra.mxu0 %v4092
    %v4297 = vpop.f32.mrf.mxu0
    %v4298 = vadd.f32 %v4285, %v4297
    %v4299 = vpop.f32.mrf.mxu0
    %4300 = vdwg.mxu0
    %v4301 = vadd.f32 %v4083, %v4116
    %v4302 = vadd.f32 %v4084, %v4142
    %v4303 = vadd.f32 %v4085, %v4168
    %v4304 = vadd.f32 %v4086, %v4194
    %v4305 = vadd.f32 %v4087, %v4220
    %v4306 = vadd.f32 %v4088, %v4246
    %v4307 = vadd.f32 %v4089, %v4272
    %v4308 = vadd.f32 %v4090, %v4298
    %v4309 = vxor.u32 %v4301, 2147483648
    %v4310 = vxor.u32 %v4302, 2147483648
    %v4311 = vmul.f32 %v4309, 1.442695
    %v4312 = vpow.pop %v4311
    %v4313 = vmul.f32 %v4310, 1.442695
    %v4314 = vpow.pop %v4313
    %v4315 = vadd.f32 %v4312, 1.0
    %v4316 = vadd.f32 %v4314, 1.0
    %v4317 = vrcp.pop %v4315
    %v4318 = vmul.f32 %v4315, %v4317
    %v4319 = vsub.f32 1.0, %v4318
    %v4320 = vmul.f32 %v4317, %v4319
    %v4321 = vadd.f32 %v4317, %v4320
    %vm4322 = vweird.f32 %v4315
    %vm4323 = vweird.f32 %v4317
    %vm4324 = vmor %vm4322, %vm4323
    %v4325 = vsel %vm4324, %v4317, %v4321
    %v4326 = vand.u32 2147483647, %v4315
    %vm4327 = vcmp.eq.f32.partialorder %v4326, 8.507059e+37
    %v4328 = vand.u32 %v4315, 2147483648
    %v4329 = vor.u32 1.1754944e-38, %v4328
    %v4330 = vsel %vm4327, %v4329, %v4325
    %v4331 = vmul.f32 1.0, %v4330
    %v4332 = vrcp.pop %v4316
    %v4333 = vmul.f32 %v4316, %v4332
    %v4334 = vsub.f32 1.0, %v4333
    %v4335 = vmul.f32 %v4332, %v4334
    %v4336 = vadd.f32 %v4332, %v4335
    %vm4337 = vweird.f32 %v4316
    %vm4338 = vweird.f32 %v4332
    %vm4339 = vmor %vm4337, %vm4338
    %v4340 = vsel %vm4339, %v4332, %v4336
    %v4341 = vand.u32 2147483647, %v4316
    %vm4342 = vcmp.eq.f32.partialorder %v4341, 8.507059e+37
    %v4343 = vand.u32 %v4316, 2147483648
    %v4344 = vor.u32 1.1754944e-38, %v4343
    %v4345 = vsel %vm4342, %v4344, %v4340
    %v4346 = vmul.f32 1.0, %v4345
    %v4347 = vxor.u32 %v4303, 2147483648
    %v4348 = vxor.u32 %v4304, 2147483648
    %v4349 = vmul.f32 %v4347, 1.442695
    %v4350 = vpow.pop %v4349
    %v4351 = vmul.f32 %v4348, 1.442695
    %v4352 = vpow.pop %v4351
    %v4353 = vadd.f32 %v4350, 1.0
    %v4354 = vadd.f32 %v4352, 1.0
    %v4355 = vrcp.pop %v4353
    %v4356 = vmul.f32 %v4353, %v4355
    %v4357 = vsub.f32 1.0, %v4356
    %v4358 = vmul.f32 %v4355, %v4357
    %v4359 = vadd.f32 %v4355, %v4358
    %vm4360 = vweird.f32 %v4353
    %vm4361 = vweird.f32 %v4355
    %vm4362 = vmor %vm4360, %vm4361
    %v4363 = vsel %vm4362, %v4355, %v4359
    %v4364 = vand.u32 2147483647, %v4353
    %vm4365 = vcmp.eq.f32.partialorder %v4364, 8.507059e+37
    %v4366 = vand.u32 %v4353, 2147483648
    %v4367 = vor.u32 1.1754944e-38, %v4366
    %v4368 = vsel %vm4365, %v4367, %v4363
    %v4369 = vmul.f32 1.0, %v4368
    %v4370 = vrcp.pop %v4354
    %v4371 = vmul.f32 %v4354, %v4370
    %v4372 = vsub.f32 1.0, %v4371
    %v4373 = vmul.f32 %v4370, %v4372
    %v4374 = vadd.f32 %v4370, %v4373
    %vm4375 = vweird.f32 %v4354
    %vm4376 = vweird.f32 %v4370
    %vm4377 = vmor %vm4375, %vm4376
    %v4378 = vsel %vm4377, %v4370, %v4374
    %v4379 = vand.u32 2147483647, %v4354
    %vm4380 = vcmp.eq.f32.partialorder %v4379, 8.507059e+37
    %v4381 = vand.u32 %v4354, 2147483648
    %v4382 = vor.u32 1.1754944e-38, %v4381
    %v4383 = vsel %vm4380, %v4382, %v4378
    %v4384 = vmul.f32 1.0, %v4383
    %v4385 = vtanh.pop %v4305
    %v4386 = vtanh.pop %v4306
    %v4387 = vxor.u32 %v4307, 2147483648
    %v4388 = vxor.u32 %v4308, 2147483648
    %v4389 = vmul.f32 %v4387, 1.442695
    %v4390 = vpow.pop %v4389
    %v4391 = vmul.f32 %v4388, 1.442695
    %v4392 = vpow.pop %v4391
    %v4393 = vadd.f32 %v4390, 1.0
    %v4394 = vadd.f32 %v4392, 1.0
    %v4395 = vrcp.pop %v4393
    %v4396 = vmul.f32 %v4393, %v4395
    %v4397 = vsub.f32 1.0, %v4396
    %v4398 = vmul.f32 %v4395, %v4397
    %v4399 = vadd.f32 %v4395, %v4398
    %vm4400 = vweird.f32 %v4393
    %vm4401 = vweird.f32 %v4395
    %vm4402 = vmor %vm4400, %vm4401
    %v4403 = vsel %vm4402, %v4395, %v4399
    %v4404 = vand.u32 2147483647, %v4393
    %vm4405 = vcmp.eq.f32.partialorder %v4404, 8.507059e+37
    %v4406 = vand.u32 %v4393, 2147483648
    %v4407 = vor.u32 1.1754944e-38, %v4406
    %v4408 = vsel %vm4405, %v4407, %v4403
    %v4409 = vmul.f32 1.0, %v4408
    %v4410 = vrcp.pop %v4394
    %v4411 = vmul.f32 %v4394, %v4410
    %v4412 = vsub.f32 1.0, %v4411
    %v4413 = vmul.f32 %v4410, %v4412
    %v4414 = vadd.f32 %v4410, %v4413
    %vm4415 = vweird.f32 %v4394
    %vm4416 = vweird.f32 %v4410
    %vm4417 = vmor %vm4415, %vm4416
    %v4418 = vsel %vm4417, %v4410, %v4414
    %v4419 = vand.u32 2147483647, %v4394
    %vm4420 = vcmp.eq.f32.partialorder %v4419, 8.507059e+37
    %v4421 = vand.u32 %v4394, 2147483648
    %v4422 = vor.u32 1.1754944e-38, %v4421
    %v4423 = vsel %vm4420, %v4422, %v4418
    %v4424 = vmul.f32 1.0, %v4423
    %v4425 = vmul.f32 %v4369, %v4077
    %v4426 = vmul.f32 %v4384, %v4078
    %v4427 = vmul.f32 %v4331, %v4385
    %v4428 = vmul.f32 %v4346, %v4386
    %v4429 = vadd.f32 %v4425, %v4427
    %v4430 = vadd.f32 %v4426, %v4428
    %v4431 = vtanh.pop %v4429
    %v4432 = vtanh.pop %v4430
    %v4433 = vmul.f32 %v4409, %v4431
    %v4434 = vmul.f32 %v4424, %v4432
    %v4435 = vld [vmem:[#allocation2 + $0x300] sm:$0xff]
    %v4436 = vld [vmem:[#allocation2 + $0x308] sm:$0xff]
    %v4437 = vld [vmem:[#allocation2 + $0x310] sm:$0xff]
    %v4438 = vld [vmem:[#allocation2 + $0x318] sm:$0xff]
    %v4439 = vld [vmem:[#allocation2 + $0x320] sm:$0xff]
    %v4440 = vld [vmem:[#allocation2 + $0x328] sm:$0xff]
    %v4441 = vld [vmem:[#allocation2 + $0x330] sm:$0xff]
    %v4442 = vld [vmem:[#allocation2 + $0x338] sm:$0xff]
    %v4443 = vpack.c.bf16 %v4433, %v4433
    %v4444 = vpack.c.bf16 %v4434, %v4434
    %4445 = vmatpush.bf16.msra.mxu0 %v2133
    %4446 = vmatpush.bf16.msra.mxu0 %v2125
    %4447 = vmatpush.bf16.msra.mxu0 %v2117
    %4448 = vmatpush.bf16.msra.mxu0 %v2109
    %4449 = vmatpush.bf16.msra.mxu0 %v2101
    %4450 = vmatpush.bf16.msra.mxu0 %v2093
    %4451 = vmatpush.bf16.msra.mxu0 %v2085
    %4452 = vmatpush.bf16.msra.mxu0 %v2077
    %4453 = vmatmul.bf16.gmra.mxu0 %v4443
    %v4454 = vpop.f32.mrf.mxu0
    %v4455 = vadd.f32 0.0, %v4454
    %v4456 = vpop.f32.mrf.mxu0
    %4457 = vdwg.mxu0
    %4458 = vmatpush.bf16.msra.mxu0 %v2197
    %4459 = vmatpush.bf16.msra.mxu0 %v2189
    %4460 = vmatpush.bf16.msra.mxu0 %v2181
    %4461 = vmatpush.bf16.msra.mxu0 %v2173
    %4462 = vmatpush.bf16.msra.mxu0 %v2165
    %4463 = vmatpush.bf16.msra.mxu0 %v2157
    %4464 = vmatpush.bf16.msra.mxu0 %v2149
    %4465 = vmatpush.bf16.msra.mxu0 %v2141
    %4466 = vmatmul.bf16.gmra.mxu0 %v4444
    %v4467 = vpop.f32.mrf.mxu0
    %v4468 = vadd.f32 %v4455, %v4467
    %v4469 = vpop.f32.mrf.mxu0
    %4470 = vdwg.mxu0
    %4471 = vmatpush.bf16.msra.mxu0 %v2134
    %4472 = vmatpush.bf16.msra.mxu0 %v2126
    %4473 = vmatpush.bf16.msra.mxu0 %v2118
    %4474 = vmatpush.bf16.msra.mxu0 %v2110
    %4475 = vmatpush.bf16.msra.mxu0 %v2102
    %4476 = vmatpush.bf16.msra.mxu0 %v2094
    %4477 = vmatpush.bf16.msra.mxu0 %v2086
    %4478 = vmatpush.bf16.msra.mxu0 %v2078
    %4479 = vmatmul.bf16.gmra.mxu0 %v4443
    %v4480 = vpop.f32.mrf.mxu0
    %v4481 = vadd.f32 0.0, %v4480
    %v4482 = vpop.f32.mrf.mxu0
    %4483 = vdwg.mxu0
    %4484 = vmatpush.bf16.msra.mxu0 %v2198
    %4485 = vmatpush.bf16.msra.mxu0 %v2190
    %4486 = vmatpush.bf16.msra.mxu0 %v2182
    %4487 = vmatpush.bf16.msra.mxu0 %v2174
    %4488 = vmatpush.bf16.msra.mxu0 %v2166
    %4489 = vmatpush.bf16.msra.mxu0 %v2158
    %4490 = vmatpush.bf16.msra.mxu0 %v2150
    %4491 = vmatpush.bf16.msra.mxu0 %v2142
    %4492 = vmatmul.bf16.gmra.mxu0 %v4444
    %v4493 = vpop.f32.mrf.mxu0
    %v4494 = vadd.f32 %v4481, %v4493
    %v4495 = vpop.f32.mrf.mxu0
    %4496 = vdwg.mxu0
    %4497 = vmatpush.bf16.msra.mxu0 %v2135
    %4498 = vmatpush.bf16.msra.mxu0 %v2127
    %4499 = vmatpush.bf16.msra.mxu0 %v2119
    %4500 = vmatpush.bf16.msra.mxu0 %v2111
    %4501 = vmatpush.bf16.msra.mxu0 %v2103
    %4502 = vmatpush.bf16.msra.mxu0 %v2095
    %4503 = vmatpush.bf16.msra.mxu0 %v2087
    %4504 = vmatpush.bf16.msra.mxu0 %v2079
    %4505 = vmatmul.bf16.gmra.mxu0 %v4443
    %v4506 = vpop.f32.mrf.mxu0
    %v4507 = vadd.f32 0.0, %v4506
    %v4508 = vpop.f32.mrf.mxu0
    %4509 = vdwg.mxu0
    %4510 = vmatpush.bf16.msra.mxu0 %v2199
    %4511 = vmatpush.bf16.msra.mxu0 %v2191
    %4512 = vmatpush.bf16.msra.mxu0 %v2183
    %4513 = vmatpush.bf16.msra.mxu0 %v2175
    %4514 = vmatpush.bf16.msra.mxu0 %v2167
    %4515 = vmatpush.bf16.msra.mxu0 %v2159
    %4516 = vmatpush.bf16.msra.mxu0 %v2151
    %4517 = vmatpush.bf16.msra.mxu0 %v2143
    %4518 = vmatmul.bf16.gmra.mxu0 %v4444
    %v4519 = vpop.f32.mrf.mxu0
    %v4520 = vadd.f32 %v4507, %v4519
    %v4521 = vpop.f32.mrf.mxu0
    %4522 = vdwg.mxu0
    %4523 = vmatpush.bf16.msra.mxu0 %v2136
    %4524 = vmatpush.bf16.msra.mxu0 %v2128
    %4525 = vmatpush.bf16.msra.mxu0 %v2120
    %4526 = vmatpush.bf16.msra.mxu0 %v2112
    %4527 = vmatpush.bf16.msra.mxu0 %v2104
    %4528 = vmatpush.bf16.msra.mxu0 %v2096
    %4529 = vmatpush.bf16.msra.mxu0 %v2088
    %4530 = vmatpush.bf16.msra.mxu0 %v2080
    %4531 = vmatmul.bf16.gmra.mxu0 %v4443
    %v4532 = vpop.f32.mrf.mxu0
    %v4533 = vadd.f32 0.0, %v4532
    %v4534 = vpop.f32.mrf.mxu0
    %4535 = vdwg.mxu0
    %4536 = vmatpush.bf16.msra.mxu0 %v2200
    %4537 = vmatpush.bf16.msra.mxu0 %v2192
    %4538 = vmatpush.bf16.msra.mxu0 %v2184
    %4539 = vmatpush.bf16.msra.mxu0 %v2176
    %4540 = vmatpush.bf16.msra.mxu0 %v2168
    %4541 = vmatpush.bf16.msra.mxu0 %v2160
    %4542 = vmatpush.bf16.msra.mxu0 %v2152
    %4543 = vmatpush.bf16.msra.mxu0 %v2144
    %4544 = vmatmul.bf16.gmra.mxu0 %v4444
    %v4545 = vpop.f32.mrf.mxu0
    %v4546 = vadd.f32 %v4533, %v4545
    %v4547 = vpop.f32.mrf.mxu0
    %4548 = vdwg.mxu0
    %4549 = vmatpush.bf16.msra.mxu0 %v2137
    %4550 = vmatpush.bf16.msra.mxu0 %v2129
    %4551 = vmatpush.bf16.msra.mxu0 %v2121
    %4552 = vmatpush.bf16.msra.mxu0 %v2113
    %4553 = vmatpush.bf16.msra.mxu0 %v2105
    %4554 = vmatpush.bf16.msra.mxu0 %v2097
    %4555 = vmatpush.bf16.msra.mxu0 %v2089
    %4556 = vmatpush.bf16.msra.mxu0 %v2081
    %4557 = vmatmul.bf16.gmra.mxu0 %v4443
    %v4558 = vpop.f32.mrf.mxu0
    %v4559 = vadd.f32 0.0, %v4558
    %v4560 = vpop.f32.mrf.mxu0
    %4561 = vdwg.mxu0
    %4562 = vmatpush.bf16.msra.mxu0 %v2201
    %4563 = vmatpush.bf16.msra.mxu0 %v2193
    %4564 = vmatpush.bf16.msra.mxu0 %v2185
    %4565 = vmatpush.bf16.msra.mxu0 %v2177
    %4566 = vmatpush.bf16.msra.mxu0 %v2169
    %4567 = vmatpush.bf16.msra.mxu0 %v2161
    %4568 = vmatpush.bf16.msra.mxu0 %v2153
    %4569 = vmatpush.bf16.msra.mxu0 %v2145
    %4570 = vmatmul.bf16.gmra.mxu0 %v4444
    %v4571 = vpop.f32.mrf.mxu0
    %v4572 = vadd.f32 %v4559, %v4571
    %v4573 = vpop.f32.mrf.mxu0
    %4574 = vdwg.mxu0
    %4575 = vmatpush.bf16.msra.mxu0 %v2138
    %4576 = vmatpush.bf16.msra.mxu0 %v2130
    %4577 = vmatpush.bf16.msra.mxu0 %v2122
    %4578 = vmatpush.bf16.msra.mxu0 %v2114
    %4579 = vmatpush.bf16.msra.mxu0 %v2106
    %4580 = vmatpush.bf16.msra.mxu0 %v2098
    %4581 = vmatpush.bf16.msra.mxu0 %v2090
    %4582 = vmatpush.bf16.msra.mxu0 %v2082
    %4583 = vmatmul.bf16.gmra.mxu0 %v4443
    %v4584 = vpop.f32.mrf.mxu0
    %v4585 = vadd.f32 0.0, %v4584
    %v4586 = vpop.f32.mrf.mxu0
    %4587 = vdwg.mxu0
    %4588 = vmatpush.bf16.msra.mxu0 %v2202
    %4589 = vmatpush.bf16.msra.mxu0 %v2194
    %4590 = vmatpush.bf16.msra.mxu0 %v2186
    %4591 = vmatpush.bf16.msra.mxu0 %v2178
    %4592 = vmatpush.bf16.msra.mxu0 %v2170
    %4593 = vmatpush.bf16.msra.mxu0 %v2162
    %4594 = vmatpush.bf16.msra.mxu0 %v2154
    %4595 = vmatpush.bf16.msra.mxu0 %v2146
    %4596 = vmatmul.bf16.gmra.mxu0 %v4444
    %v4597 = vpop.f32.mrf.mxu0
    %v4598 = vadd.f32 %v4585, %v4597
    %v4599 = vpop.f32.mrf.mxu0
    %4600 = vdwg.mxu0
    %4601 = vmatpush.bf16.msra.mxu0 %v2139
    %4602 = vmatpush.bf16.msra.mxu0 %v2131
    %4603 = vmatpush.bf16.msra.mxu0 %v2123
    %4604 = vmatpush.bf16.msra.mxu0 %v2115
    %4605 = vmatpush.bf16.msra.mxu0 %v2107
    %4606 = vmatpush.bf16.msra.mxu0 %v2099
    %4607 = vmatpush.bf16.msra.mxu0 %v2091
    %4608 = vmatpush.bf16.msra.mxu0 %v2083
    %4609 = vmatmul.bf16.gmra.mxu0 %v4443
    %v4610 = vpop.f32.mrf.mxu0
    %v4611 = vadd.f32 0.0, %v4610
    %v4612 = vpop.f32.mrf.mxu0
    %4613 = vdwg.mxu0
    %4614 = vmatpush.bf16.msra.mxu0 %v2203
    %4615 = vmatpush.bf16.msra.mxu0 %v2195
    %4616 = vmatpush.bf16.msra.mxu0 %v2187
    %4617 = vmatpush.bf16.msra.mxu0 %v2179
    %4618 = vmatpush.bf16.msra.mxu0 %v2171
    %4619 = vmatpush.bf16.msra.mxu0 %v2163
    %4620 = vmatpush.bf16.msra.mxu0 %v2155
    %4621 = vmatpush.bf16.msra.mxu0 %v2147
    %4622 = vmatmul.bf16.gmra.mxu0 %v4444
    %v4623 = vpop.f32.mrf.mxu0
    %v4624 = vadd.f32 %v4611, %v4623
    %v4625 = vpop.f32.mrf.mxu0
    %4626 = vdwg.mxu0
    %4627 = vmatpush.bf16.msra.mxu0 %v2140
    %4628 = vmatpush.bf16.msra.mxu0 %v2132
    %4629 = vmatpush.bf16.msra.mxu0 %v2124
    %4630 = vmatpush.bf16.msra.mxu0 %v2116
    %4631 = vmatpush.bf16.msra.mxu0 %v2108
    %4632 = vmatpush.bf16.msra.mxu0 %v2100
    %4633 = vmatpush.bf16.msra.mxu0 %v2092
    %4634 = vmatpush.bf16.msra.mxu0 %v2084
    %4635 = vmatmul.bf16.gmra.mxu0 %v4443
    %v4636 = vpop.f32.mrf.mxu0
    %v4637 = vadd.f32 0.0, %v4636
    %v4638 = vpop.f32.mrf.mxu0
    %4639 = vdwg.mxu0
    %4640 = vmatpush.bf16.msra.mxu0 %v2204
    %4641 = vmatpush.bf16.msra.mxu0 %v2196
    %4642 = vmatpush.bf16.msra.mxu0 %v2188
    %4643 = vmatpush.bf16.msra.mxu0 %v2180
    %4644 = vmatpush.bf16.msra.mxu0 %v2172
    %4645 = vmatpush.bf16.msra.mxu0 %v2164
    %4646 = vmatpush.bf16.msra.mxu0 %v2156
    %4647 = vmatpush.bf16.msra.mxu0 %v2148
    %4648 = vmatmul.bf16.gmra.mxu0 %v4444
    %v4649 = vpop.f32.mrf.mxu0
    %v4650 = vadd.f32 %v4637, %v4649
    %v4651 = vpop.f32.mrf.mxu0
    %4652 = vdwg.mxu0
    %v4653 = vadd.f32 %v4435, %v4468
    %v4654 = vadd.f32 %v4436, %v4494
    %v4655 = vadd.f32 %v4437, %v4520
    %v4656 = vadd.f32 %v4438, %v4546
    %v4657 = vadd.f32 %v4439, %v4572
    %v4658 = vadd.f32 %v4440, %v4598
    %v4659 = vadd.f32 %v4441, %v4624
    %v4660 = vadd.f32 %v4442, %v4650
    %v4661 = vxor.u32 %v4653, 2147483648
    %v4662 = vxor.u32 %v4654, 2147483648
    %v4663 = vmul.f32 %v4661, 1.442695
    %v4664 = vpow.pop %v4663
    %v4665 = vmul.f32 %v4662, 1.442695
    %v4666 = vpow.pop %v4665
    %v4667 = vadd.f32 %v4664, 1.0
    %v4668 = vadd.f32 %v4666, 1.0
    %v4669 = vrcp.pop %v4667
    %v4670 = vmul.f32 %v4667, %v4669
    %v4671 = vsub.f32 1.0, %v4670
    %v4672 = vmul.f32 %v4669, %v4671
    %v4673 = vadd.f32 %v4669, %v4672
    %vm4674 = vweird.f32 %v4667
    %vm4675 = vweird.f32 %v4669
    %vm4676 = vmor %vm4674, %vm4675
    %v4677 = vsel %vm4676, %v4669, %v4673
    %v4678 = vand.u32 2147483647, %v4667
    %vm4679 = vcmp.eq.f32.partialorder %v4678, 8.507059e+37
    %v4680 = vand.u32 %v4667, 2147483648
    %v4681 = vor.u32 1.1754944e-38, %v4680
    %v4682 = vsel %vm4679, %v4681, %v4677
    %v4683 = vmul.f32 1.0, %v4682
    %v4684 = vrcp.pop %v4668
    %v4685 = vmul.f32 %v4668, %v4684
    %v4686 = vsub.f32 1.0, %v4685
    %v4687 = vmul.f32 %v4684, %v4686
    %v4688 = vadd.f32 %v4684, %v4687
    %vm4689 = vweird.f32 %v4668
    %vm4690 = vweird.f32 %v4684
    %vm4691 = vmor %vm4689, %vm4690
    %v4692 = vsel %vm4691, %v4684, %v4688
    %v4693 = vand.u32 2147483647, %v4668
    %vm4694 = vcmp.eq.f32.partialorder %v4693, 8.507059e+37
    %v4695 = vand.u32 %v4668, 2147483648
    %v4696 = vor.u32 1.1754944e-38, %v4695
    %v4697 = vsel %vm4694, %v4696, %v4692
    %v4698 = vmul.f32 1.0, %v4697
    %v4699 = vxor.u32 %v4655, 2147483648
    %v4700 = vxor.u32 %v4656, 2147483648
    %v4701 = vmul.f32 %v4699, 1.442695
    %v4702 = vpow.pop %v4701
    %v4703 = vmul.f32 %v4700, 1.442695
    %v4704 = vpow.pop %v4703
    %v4705 = vadd.f32 %v4702, 1.0
    %v4706 = vadd.f32 %v4704, 1.0
    %v4707 = vrcp.pop %v4705
    %v4708 = vmul.f32 %v4705, %v4707
    %v4709 = vsub.f32 1.0, %v4708
    %v4710 = vmul.f32 %v4707, %v4709
    %v4711 = vadd.f32 %v4707, %v4710
    %vm4712 = vweird.f32 %v4705
    %vm4713 = vweird.f32 %v4707
    %vm4714 = vmor %vm4712, %vm4713
    %v4715 = vsel %vm4714, %v4707, %v4711
    %v4716 = vand.u32 2147483647, %v4705
    %vm4717 = vcmp.eq.f32.partialorder %v4716, 8.507059e+37
    %v4718 = vand.u32 %v4705, 2147483648
    %v4719 = vor.u32 1.1754944e-38, %v4718
    %v4720 = vsel %vm4717, %v4719, %v4715
    %v4721 = vmul.f32 1.0, %v4720
    %v4722 = vrcp.pop %v4706
    %v4723 = vmul.f32 %v4706, %v4722
    %v4724 = vsub.f32 1.0, %v4723
    %v4725 = vmul.f32 %v4722, %v4724
    %v4726 = vadd.f32 %v4722, %v4725
    %vm4727 = vweird.f32 %v4706
    %vm4728 = vweird.f32 %v4722
    %vm4729 = vmor %vm4727, %vm4728
    %v4730 = vsel %vm4729, %v4722, %v4726
    %v4731 = vand.u32 2147483647, %v4706
    %vm4732 = vcmp.eq.f32.partialorder %v4731, 8.507059e+37
    %v4733 = vand.u32 %v4706, 2147483648
    %v4734 = vor.u32 1.1754944e-38, %v4733
    %v4735 = vsel %vm4732, %v4734, %v4730
    %v4736 = vmul.f32 1.0, %v4735
    %v4737 = vtanh.pop %v4657
    %v4738 = vtanh.pop %v4658
    %v4739 = vxor.u32 %v4659, 2147483648
    %v4740 = vxor.u32 %v4660, 2147483648
    %v4741 = vmul.f32 %v4739, 1.442695
    %v4742 = vpow.pop %v4741
    %v4743 = vmul.f32 %v4740, 1.442695
    %v4744 = vpow.pop %v4743
    %v4745 = vadd.f32 %v4742, 1.0
    %v4746 = vadd.f32 %v4744, 1.0
    %v4747 = vrcp.pop %v4745
    %v4748 = vmul.f32 %v4745, %v4747
    %v4749 = vsub.f32 1.0, %v4748
    %v4750 = vmul.f32 %v4747, %v4749
    %v4751 = vadd.f32 %v4747, %v4750
    %vm4752 = vweird.f32 %v4745
    %vm4753 = vweird.f32 %v4747
    %vm4754 = vmor %vm4752, %vm4753
    %v4755 = vsel %vm4754, %v4747, %v4751
    %v4756 = vand.u32 2147483647, %v4745
    %vm4757 = vcmp.eq.f32.partialorder %v4756, 8.507059e+37
    %v4758 = vand.u32 %v4745, 2147483648
    %v4759 = vor.u32 1.1754944e-38, %v4758
    %v4760 = vsel %vm4757, %v4759, %v4755
    %v4761 = vmul.f32 1.0, %v4760
    %v4762 = vrcp.pop %v4746
    %v4763 = vmul.f32 %v4746, %v4762
    %v4764 = vsub.f32 1.0, %v4763
    %v4765 = vmul.f32 %v4762, %v4764
    %v4766 = vadd.f32 %v4762, %v4765
    %vm4767 = vweird.f32 %v4746
    %vm4768 = vweird.f32 %v4762
    %vm4769 = vmor %vm4767, %vm4768
    %v4770 = vsel %vm4769, %v4762, %v4766
    %v4771 = vand.u32 2147483647, %v4746
    %vm4772 = vcmp.eq.f32.partialorder %v4771, 8.507059e+37
    %v4773 = vand.u32 %v4746, 2147483648
    %v4774 = vor.u32 1.1754944e-38, %v4773
    %v4775 = vsel %vm4772, %v4774, %v4770
    %v4776 = vmul.f32 1.0, %v4775
    %v4777 = vmul.f32 %v4721, %v4429
    %v4778 = vmul.f32 %v4736, %v4430
    %v4779 = vmul.f32 %v4683, %v4737
    %v4780 = vmul.f32 %v4698, %v4738
    %v4781 = vadd.f32 %v4777, %v4779
    %v4782 = vadd.f32 %v4778, %v4780
    %v4783 = vtanh.pop %v4781
    %v4784 = vtanh.pop %v4782
    %v4785 = vmul.f32 %v4761, %v4783
    %v4786 = vmul.f32 %v4776, %v4784
    %v4787 = vld [vmem:[#allocation2 + $0x380] sm:$0xff]
    %v4788 = vld [vmem:[#allocation2 + $0x388] sm:$0xff]
    %v4789 = vld [vmem:[#allocation2 + $0x390] sm:$0xff]
    %v4790 = vld [vmem:[#allocation2 + $0x398] sm:$0xff]
    %v4791 = vld [vmem:[#allocation2 + $0x3a0] sm:$0xff]
    %v4792 = vld [vmem:[#allocation2 + $0x3a8] sm:$0xff]
    %v4793 = vld [vmem:[#allocation2 + $0x3b0] sm:$0xff]
    %v4794 = vld [vmem:[#allocation2 + $0x3b8] sm:$0xff]
    %v4795 = vpack.c.bf16 %v4785, %v4785
    %v4796 = vpack.c.bf16 %v4786, %v4786
    %4797 = vmatpush.bf16.msra.mxu0 %v2133
    %4798 = vmatpush.bf16.msra.mxu0 %v2125
    %4799 = vmatpush.bf16.msra.mxu0 %v2117
    %4800 = vmatpush.bf16.msra.mxu0 %v2109
    %4801 = vmatpush.bf16.msra.mxu0 %v2101
    %4802 = vmatpush.bf16.msra.mxu0 %v2093
    %4803 = vmatpush.bf16.msra.mxu0 %v2085
    %4804 = vmatpush.bf16.msra.mxu0 %v2077
    %4805 = vmatmul.bf16.gmra.mxu0 %v4795
    %v4806 = vpop.f32.mrf.mxu0
    %v4807 = vadd.f32 0.0, %v4806
    %v4808 = vpop.f32.mrf.mxu0
    %4809 = vdwg.mxu0
    %4810 = vmatpush.bf16.msra.mxu0 %v2197
    %4811 = vmatpush.bf16.msra.mxu0 %v2189
    %4812 = vmatpush.bf16.msra.mxu0 %v2181
    %4813 = vmatpush.bf16.msra.mxu0 %v2173
    %4814 = vmatpush.bf16.msra.mxu0 %v2165
    %4815 = vmatpush.bf16.msra.mxu0 %v2157
    %4816 = vmatpush.bf16.msra.mxu0 %v2149
    %4817 = vmatpush.bf16.msra.mxu0 %v2141
    %4818 = vmatmul.bf16.gmra.mxu0 %v4796
    %v4819 = vpop.f32.mrf.mxu0
    %v4820 = vadd.f32 %v4807, %v4819
    %v4821 = vpop.f32.mrf.mxu0
    %4822 = vdwg.mxu0
    %4823 = vmatpush.bf16.msra.mxu0 %v2134
    %4824 = vmatpush.bf16.msra.mxu0 %v2126
    %4825 = vmatpush.bf16.msra.mxu0 %v2118
    %4826 = vmatpush.bf16.msra.mxu0 %v2110
    %4827 = vmatpush.bf16.msra.mxu0 %v2102
    %4828 = vmatpush.bf16.msra.mxu0 %v2094
    %4829 = vmatpush.bf16.msra.mxu0 %v2086
    %4830 = vmatpush.bf16.msra.mxu0 %v2078
    %4831 = vmatmul.bf16.gmra.mxu0 %v4795
    %v4832 = vpop.f32.mrf.mxu0
    %v4833 = vadd.f32 0.0, %v4832
    %v4834 = vpop.f32.mrf.mxu0
    %4835 = vdwg.mxu0
    %4836 = vmatpush.bf16.msra.mxu0 %v2198
    %4837 = vmatpush.bf16.msra.mxu0 %v2190
    %4838 = vmatpush.bf16.msra.mxu0 %v2182
    %4839 = vmatpush.bf16.msra.mxu0 %v2174
    %4840 = vmatpush.bf16.msra.mxu0 %v2166
    %4841 = vmatpush.bf16.msra.mxu0 %v2158
    %4842 = vmatpush.bf16.msra.mxu0 %v2150
    %4843 = vmatpush.bf16.msra.mxu0 %v2142
    %4844 = vmatmul.bf16.gmra.mxu0 %v4796
    %v4845 = vpop.f32.mrf.mxu0
    %v4846 = vadd.f32 %v4833, %v4845
    %v4847 = vpop.f32.mrf.mxu0
    %4848 = vdwg.mxu0
    %4849 = vmatpush.bf16.msra.mxu0 %v2135
    %4850 = vmatpush.bf16.msra.mxu0 %v2127
    %4851 = vmatpush.bf16.msra.mxu0 %v2119
    %4852 = vmatpush.bf16.msra.mxu0 %v2111
    %4853 = vmatpush.bf16.msra.mxu0 %v2103
    %4854 = vmatpush.bf16.msra.mxu0 %v2095
    %4855 = vmatpush.bf16.msra.mxu0 %v2087
    %4856 = vmatpush.bf16.msra.mxu0 %v2079
    %4857 = vmatmul.bf16.gmra.mxu0 %v4795
    %v4858 = vpop.f32.mrf.mxu0
    %v4859 = vadd.f32 0.0, %v4858
    %v4860 = vpop.f32.mrf.mxu0
    %4861 = vdwg.mxu0
    %4862 = vmatpush.bf16.msra.mxu0 %v2199
    %4863 = vmatpush.bf16.msra.mxu0 %v2191
    %4864 = vmatpush.bf16.msra.mxu0 %v2183
    %4865 = vmatpush.bf16.msra.mxu0 %v2175
    %4866 = vmatpush.bf16.msra.mxu0 %v2167
    %4867 = vmatpush.bf16.msra.mxu0 %v2159
    %4868 = vmatpush.bf16.msra.mxu0 %v2151
    %4869 = vmatpush.bf16.msra.mxu0 %v2143
    %4870 = vmatmul.bf16.gmra.mxu0 %v4796
    %v4871 = vpop.f32.mrf.mxu0
    %v4872 = vadd.f32 %v4859, %v4871
    %v4873 = vpop.f32.mrf.mxu0
    %4874 = vdwg.mxu0
    %4875 = vmatpush.bf16.msra.mxu0 %v2136
    %4876 = vmatpush.bf16.msra.mxu0 %v2128
    %4877 = vmatpush.bf16.msra.mxu0 %v2120
    %4878 = vmatpush.bf16.msra.mxu0 %v2112
    %4879 = vmatpush.bf16.msra.mxu0 %v2104
    %4880 = vmatpush.bf16.msra.mxu0 %v2096
    %4881 = vmatpush.bf16.msra.mxu0 %v2088
    %4882 = vmatpush.bf16.msra.mxu0 %v2080
    %4883 = vmatmul.bf16.gmra.mxu0 %v4795
    %v4884 = vpop.f32.mrf.mxu0
    %v4885 = vadd.f32 0.0, %v4884
    %v4886 = vpop.f32.mrf.mxu0
    %4887 = vdwg.mxu0
    %4888 = vmatpush.bf16.msra.mxu0 %v2200
    %4889 = vmatpush.bf16.msra.mxu0 %v2192
    %4890 = vmatpush.bf16.msra.mxu0 %v2184
    %4891 = vmatpush.bf16.msra.mxu0 %v2176
    %4892 = vmatpush.bf16.msra.mxu0 %v2168
    %4893 = vmatpush.bf16.msra.mxu0 %v2160
    %4894 = vmatpush.bf16.msra.mxu0 %v2152
    %4895 = vmatpush.bf16.msra.mxu0 %v2144
    %4896 = vmatmul.bf16.gmra.mxu0 %v4796
    %v4897 = vpop.f32.mrf.mxu0
    %v4898 = vadd.f32 %v4885, %v4897
    %v4899 = vpop.f32.mrf.mxu0
    %4900 = vdwg.mxu0
    %4901 = vmatpush.bf16.msra.mxu0 %v2137
    %4902 = vmatpush.bf16.msra.mxu0 %v2129
    %4903 = vmatpush.bf16.msra.mxu0 %v2121
    %4904 = vmatpush.bf16.msra.mxu0 %v2113
    %4905 = vmatpush.bf16.msra.mxu0 %v2105
    %4906 = vmatpush.bf16.msra.mxu0 %v2097
    %4907 = vmatpush.bf16.msra.mxu0 %v2089
    %4908 = vmatpush.bf16.msra.mxu0 %v2081
    %4909 = vmatmul.bf16.gmra.mxu0 %v4795
    %v4910 = vpop.f32.mrf.mxu0
    %v4911 = vadd.f32 0.0, %v4910
    %v4912 = vpop.f32.mrf.mxu0
    %4913 = vdwg.mxu0
    %4914 = vmatpush.bf16.msra.mxu0 %v2201
    %4915 = vmatpush.bf16.msra.mxu0 %v2193
    %4916 = vmatpush.bf16.msra.mxu0 %v2185
    %4917 = vmatpush.bf16.msra.mxu0 %v2177
    %4918 = vmatpush.bf16.msra.mxu0 %v2169
    %4919 = vmatpush.bf16.msra.mxu0 %v2161
    %4920 = vmatpush.bf16.msra.mxu0 %v2153
    %4921 = vmatpush.bf16.msra.mxu0 %v2145
    %4922 = vmatmul.bf16.gmra.mxu0 %v4796
    %v4923 = vpop.f32.mrf.mxu0
    %v4924 = vadd.f32 %v4911, %v4923
    %v4925 = vpop.f32.mrf.mxu0
    %4926 = vdwg.mxu0
    %4927 = vmatpush.bf16.msra.mxu0 %v2138
    %4928 = vmatpush.bf16.msra.mxu0 %v2130
    %4929 = vmatpush.bf16.msra.mxu0 %v2122
    %4930 = vmatpush.bf16.msra.mxu0 %v2114
    %4931 = vmatpush.bf16.msra.mxu0 %v2106
    %4932 = vmatpush.bf16.msra.mxu0 %v2098
    %4933 = vmatpush.bf16.msra.mxu0 %v2090
    %4934 = vmatpush.bf16.msra.mxu0 %v2082
    %4935 = vmatmul.bf16.gmra.mxu0 %v4795
    %v4936 = vpop.f32.mrf.mxu0
    %v4937 = vadd.f32 0.0, %v4936
    %v4938 = vpop.f32.mrf.mxu0
    %4939 = vdwg.mxu0
    %4940 = vmatpush.bf16.msra.mxu0 %v2202
    %4941 = vmatpush.bf16.msra.mxu0 %v2194
    %4942 = vmatpush.bf16.msra.mxu0 %v2186
    %4943 = vmatpush.bf16.msra.mxu0 %v2178
    %4944 = vmatpush.bf16.msra.mxu0 %v2170
    %4945 = vmatpush.bf16.msra.mxu0 %v2162
    %4946 = vmatpush.bf16.msra.mxu0 %v2154
    %4947 = vmatpush.bf16.msra.mxu0 %v2146
    %4948 = vmatmul.bf16.gmra.mxu0 %v4796
    %v4949 = vpop.f32.mrf.mxu0
    %v4950 = vadd.f32 %v4937, %v4949
    %v4951 = vpop.f32.mrf.mxu0
    %4952 = vdwg.mxu0
    %4953 = vmatpush.bf16.msra.mxu0 %v2139
    %4954 = vmatpush.bf16.msra.mxu0 %v2131
    %4955 = vmatpush.bf16.msra.mxu0 %v2123
    %4956 = vmatpush.bf16.msra.mxu0 %v2115
    %4957 = vmatpush.bf16.msra.mxu0 %v2107
    %4958 = vmatpush.bf16.msra.mxu0 %v2099
    %4959 = vmatpush.bf16.msra.mxu0 %v2091
    %4960 = vmatpush.bf16.msra.mxu0 %v2083
    %4961 = vmatmul.bf16.gmra.mxu0 %v4795
    %v4962 = vpop.f32.mrf.mxu0
    %v4963 = vadd.f32 0.0, %v4962
    %v4964 = vpop.f32.mrf.mxu0
    %4965 = vdwg.mxu0
    %4966 = vmatpush.bf16.msra.mxu0 %v2203
    %4967 = vmatpush.bf16.msra.mxu0 %v2195
    %4968 = vmatpush.bf16.msra.mxu0 %v2187
    %4969 = vmatpush.bf16.msra.mxu0 %v2179
    %4970 = vmatpush.bf16.msra.mxu0 %v2171
    %4971 = vmatpush.bf16.msra.mxu0 %v2163
    %4972 = vmatpush.bf16.msra.mxu0 %v2155
    %4973 = vmatpush.bf16.msra.mxu0 %v2147
    %4974 = vmatmul.bf16.gmra.mxu0 %v4796
    %v4975 = vpop.f32.mrf.mxu0
    %v4976 = vadd.f32 %v4963, %v4975
    %v4977 = vpop.f32.mrf.mxu0
    %4978 = vdwg.mxu0
    %4979 = vmatpush.bf16.msra.mxu0 %v2140
    %4980 = vmatpush.bf16.msra.mxu0 %v2132
    %4981 = vmatpush.bf16.msra.mxu0 %v2124
    %4982 = vmatpush.bf16.msra.mxu0 %v2116
    %4983 = vmatpush.bf16.msra.mxu0 %v2108
    %4984 = vmatpush.bf16.msra.mxu0 %v2100
    %4985 = vmatpush.bf16.msra.mxu0 %v2092
    %4986 = vmatpush.bf16.msra.mxu0 %v2084
    %4987 = vmatmul.bf16.gmra.mxu0 %v4795
    %v4988 = vpop.f32.mrf.mxu0
    %v4989 = vadd.f32 0.0, %v4988
    %v4990 = vpop.f32.mrf.mxu0
    %4991 = vdwg.mxu0
    %4992 = vmatpush.bf16.msra.mxu0 %v2204
    %4993 = vmatpush.bf16.msra.mxu0 %v2196
    %4994 = vmatpush.bf16.msra.mxu0 %v2188
    %4995 = vmatpush.bf16.msra.mxu0 %v2180
    %4996 = vmatpush.bf16.msra.mxu0 %v2172
    %4997 = vmatpush.bf16.msra.mxu0 %v2164
    %4998 = vmatpush.bf16.msra.mxu0 %v2156
    %4999 = vmatpush.bf16.msra.mxu0 %v2148
    %5000 = vmatmul.bf16.gmra.mxu0 %v4796
    %v5001 = vpop.f32.mrf.mxu0
    %v5002 = vadd.f32 %v4989, %v5001
    %v5003 = vpop.f32.mrf.mxu0
    %5004 = vdwg.mxu0
    %v5005 = vadd.f32 %v4787, %v4820
    %v5006 = vadd.f32 %v4788, %v4846
    %v5007 = vadd.f32 %v4789, %v4872
    %v5008 = vadd.f32 %v4790, %v4898
    %v5009 = vadd.f32 %v4791, %v4924
    %v5010 = vadd.f32 %v4792, %v4950
    %v5011 = vadd.f32 %v4793, %v4976
    %v5012 = vadd.f32 %v4794, %v5002
    %v5013 = vxor.u32 %v5005, 2147483648
    %v5014 = vxor.u32 %v5006, 2147483648
    %v5015 = vmul.f32 %v5013, 1.442695
    %v5016 = vpow.pop %v5015
    %v5017 = vmul.f32 %v5014, 1.442695
    %v5018 = vpow.pop %v5017
    %v5019 = vadd.f32 %v5016, 1.0
    %v5020 = vadd.f32 %v5018, 1.0
    %v5021 = vrcp.pop %v5019
    %v5022 = vmul.f32 %v5019, %v5021
    %v5023 = vsub.f32 1.0, %v5022
    %v5024 = vmul.f32 %v5021, %v5023
    %v5025 = vadd.f32 %v5021, %v5024
    %vm5026 = vweird.f32 %v5019
    %vm5027 = vweird.f32 %v5021
    %vm5028 = vmor %vm5026, %vm5027
    %v5029 = vsel %vm5028, %v5021, %v5025
    %v5030 = vand.u32 2147483647, %v5019
    %vm5031 = vcmp.eq.f32.partialorder %v5030, 8.507059e+37
    %v5032 = vand.u32 %v5019, 2147483648
    %v5033 = vor.u32 1.1754944e-38, %v5032
    %v5034 = vsel %vm5031, %v5033, %v5029
    %v5035 = vmul.f32 1.0, %v5034
    %v5036 = vrcp.pop %v5020
    %v5037 = vmul.f32 %v5020, %v5036
    %v5038 = vsub.f32 1.0, %v5037
    %v5039 = vmul.f32 %v5036, %v5038
    %v5040 = vadd.f32 %v5036, %v5039
    %vm5041 = vweird.f32 %v5020
    %vm5042 = vweird.f32 %v5036
    %vm5043 = vmor %vm5041, %vm5042
    %v5044 = vsel %vm5043, %v5036, %v5040
    %v5045 = vand.u32 2147483647, %v5020
    %vm5046 = vcmp.eq.f32.partialorder %v5045, 8.507059e+37
    %v5047 = vand.u32 %v5020, 2147483648
    %v5048 = vor.u32 1.1754944e-38, %v5047
    %v5049 = vsel %vm5046, %v5048, %v5044
    %v5050 = vmul.f32 1.0, %v5049
    %v5051 = vxor.u32 %v5007, 2147483648
    %v5052 = vxor.u32 %v5008, 2147483648
    %v5053 = vmul.f32 %v5051, 1.442695
    %v5054 = vpow.pop %v5053
    %v5055 = vmul.f32 %v5052, 1.442695
    %v5056 = vpow.pop %v5055
    %v5057 = vadd.f32 %v5054, 1.0
    %v5058 = vadd.f32 %v5056, 1.0
    %v5059 = vrcp.pop %v5057
    %v5060 = vmul.f32 %v5057, %v5059
    %v5061 = vsub.f32 1.0, %v5060
    %v5062 = vmul.f32 %v5059, %v5061
    %v5063 = vadd.f32 %v5059, %v5062
    %vm5064 = vweird.f32 %v5057
    %vm5065 = vweird.f32 %v5059
    %vm5066 = vmor %vm5064, %vm5065
    %v5067 = vsel %vm5066, %v5059, %v5063
    %v5068 = vand.u32 2147483647, %v5057
    %vm5069 = vcmp.eq.f32.partialorder %v5068, 8.507059e+37
    %v5070 = vand.u32 %v5057, 2147483648
    %v5071 = vor.u32 1.1754944e-38, %v5070
    %v5072 = vsel %vm5069, %v5071, %v5067
    %v5073 = vmul.f32 1.0, %v5072
    %v5074 = vrcp.pop %v5058
    %v5075 = vmul.f32 %v5058, %v5074
    %v5076 = vsub.f32 1.0, %v5075
    %v5077 = vmul.f32 %v5074, %v5076
    %v5078 = vadd.f32 %v5074, %v5077
    %vm5079 = vweird.f32 %v5058
    %vm5080 = vweird.f32 %v5074
    %vm5081 = vmor %vm5079, %vm5080
    %v5082 = vsel %vm5081, %v5074, %v5078
    %v5083 = vand.u32 2147483647, %v5058
    %vm5084 = vcmp.eq.f32.partialorder %v5083, 8.507059e+37
    %v5085 = vand.u32 %v5058, 2147483648
    %v5086 = vor.u32 1.1754944e-38, %v5085
    %v5087 = vsel %vm5084, %v5086, %v5082
    %v5088 = vmul.f32 1.0, %v5087
    %v5089 = vtanh.pop %v5009
    %v5090 = vtanh.pop %v5010
    %v5091 = vxor.u32 %v5011, 2147483648
    %v5092 = vxor.u32 %v5012, 2147483648
    %v5093 = vmul.f32 %v5091, 1.442695
    %v5094 = vpow.pop %v5093
    %v5095 = vmul.f32 %v5092, 1.442695
    %v5096 = vpow.pop %v5095
    %v5097 = vadd.f32 %v5094, 1.0
    %v5098 = vadd.f32 %v5096, 1.0
    %v5099 = vrcp.pop %v5097
    %v5100 = vmul.f32 %v5097, %v5099
    %v5101 = vsub.f32 1.0, %v5100
    %v5102 = vmul.f32 %v5099, %v5101
    %v5103 = vadd.f32 %v5099, %v5102
    %vm5104 = vweird.f32 %v5097
    %vm5105 = vweird.f32 %v5099
    %vm5106 = vmor %vm5104, %vm5105
    %v5107 = vsel %vm5106, %v5099, %v5103
    %v5108 = vand.u32 2147483647, %v5097
    %vm5109 = vcmp.eq.f32.partialorder %v5108, 8.507059e+37
    %v5110 = vand.u32 %v5097, 2147483648
    %v5111 = vor.u32 1.1754944e-38, %v5110
    %v5112 = vsel %vm5109, %v5111, %v5107
    %v5113 = vmul.f32 1.0, %v5112
    %v5114 = vrcp.pop %v5098
    %v5115 = vmul.f32 %v5098, %v5114
    %v5116 = vsub.f32 1.0, %v5115
    %v5117 = vmul.f32 %v5114, %v5116
    %v5118 = vadd.f32 %v5114, %v5117
    %vm5119 = vweird.f32 %v5098
    %vm5120 = vweird.f32 %v5114
    %vm5121 = vmor %vm5119, %vm5120
    %v5122 = vsel %vm5121, %v5114, %v5118
    %v5123 = vand.u32 2147483647, %v5098
    %vm5124 = vcmp.eq.f32.partialorder %v5123, 8.507059e+37
    %v5125 = vand.u32 %v5098, 2147483648
    %v5126 = vor.u32 1.1754944e-38, %v5125
    %v5127 = vsel %vm5124, %v5126, %v5122
    %v5128 = vmul.f32 1.0, %v5127
    %v5129 = vmul.f32 %v5073, %v4781
    %v5130 = vmul.f32 %v5088, %v4782
    %v5131 = vmul.f32 %v5035, %v5089
    %v5132 = vmul.f32 %v5050, %v5090
    %v5133 = vadd.f32 %v5129, %v5131
    %v5134 = vadd.f32 %v5130, %v5132
    %v5135 = vtanh.pop %v5133
    %v5136 = vtanh.pop %v5134
    %v5137 = vmul.f32 %v5113, %v5135
    %v5138 = vmul.f32 %v5128, %v5136
    %v5139 = vld [vmem:[#allocation2 + $0x3c0] sm:$0xff]
    %v5140 = vld [vmem:[#allocation2 + $0x3c8] sm:$0xff]
    %v5141 = vld [vmem:[#allocation2 + $0x3e0] sm:$0xff]
    %v5142 = vld [vmem:[#allocation2 + $0x3e8] sm:$0xff]
    %v5143 = vld [vmem:[#allocation2 + $0x3f0] sm:$0xff]
    %v5144 = vld [vmem:[#allocation2 + $0x3f8] sm:$0xff]
    %v5145 = vxor.u32 %v5139, 2147483648
    %v5146 = vxor.u32 %v5140, 2147483648
    %v5147 = vmul.f32 %v5145, 1.442695
    %v5148 = vpow.pop %v5147
    %v5149 = vmul.f32 %v5146, 1.442695
    %v5150 = vpow.pop %v5149
    %v5151 = vadd.f32 %v5148, 1.0
    %v5152 = vadd.f32 %v5150, 1.0
    %v5153 = vrcp.pop %v5151
    %v5154 = vmul.f32 %v5151, %v5153
    %v5155 = vsub.f32 1.0, %v5154
    %v5156 = vmul.f32 %v5153, %v5155
    %v5157 = vadd.f32 %v5153, %v5156
    %vm5158 = vweird.f32 %v5151
    %vm5159 = vweird.f32 %v5153
    %vm5160 = vmor %vm5158, %vm5159
    %v5161 = vsel %vm5160, %v5153, %v5157
    %v5162 = vand.u32 2147483647, %v5151
    %vm5163 = vcmp.eq.f32.partialorder %v5162, 8.507059e+37
    %v5164 = vand.u32 %v5151, 2147483648
    %v5165 = vor.u32 1.1754944e-38, %v5164
    %v5166 = vsel %vm5163, %v5165, %v5161
    %v5167 = vmul.f32 1.0, %v5166
    %v5168 = vrcp.pop %v5152
    %v5169 = vmul.f32 %v5152, %v5168
    %v5170 = vsub.f32 1.0, %v5169
    %v5171 = vmul.f32 %v5168, %v5170
    %v5172 = vadd.f32 %v5168, %v5171
    %vm5173 = vweird.f32 %v5152
    %vm5174 = vweird.f32 %v5168
    %vm5175 = vmor %vm5173, %vm5174
    %v5176 = vsel %vm5175, %v5168, %v5172
    %v5177 = vand.u32 2147483647, %v5152
    %vm5178 = vcmp.eq.f32.partialorder %v5177, 8.507059e+37
    %v5179 = vand.u32 %v5152, 2147483648
    %v5180 = vor.u32 1.1754944e-38, %v5179
    %v5181 = vsel %vm5178, %v5180, %v5176
    %v5182 = vmul.f32 1.0, %v5181
    %v5183 = vtanh.pop %v5141
    %v5184 = vtanh.pop %v5142
    %v5185 = vxor.u32 %v5143, 2147483648
    %v5186 = vxor.u32 %v5144, 2147483648
    %v5187 = vmul.f32 %v5185, 1.442695
    %v5188 = vpow.pop %v5187
    %v5189 = vmul.f32 %v5186, 1.442695
    %v5190 = vpow.pop %v5189
    %v5191 = vadd.f32 %v5188, 1.0
    %v5192 = vadd.f32 %v5190, 1.0
    %v5193 = vrcp.pop %v5191
    %v5194 = vmul.f32 %v5191, %v5193
    %v5195 = vsub.f32 1.0, %v5194
    %v5196 = vmul.f32 %v5193, %v5195
    %v5197 = vadd.f32 %v5193, %v5196
    %vm5198 = vweird.f32 %v5191
    %vm5199 = vweird.f32 %v5193
    %vm5200 = vmor %vm5198, %vm5199
    %v5201 = vsel %vm5200, %v5193, %v5197
    %v5202 = vand.u32 2147483647, %v5191
    %vm5203 = vcmp.eq.f32.partialorder %v5202, 8.507059e+37
    %v5204 = vand.u32 %v5191, 2147483648
    %v5205 = vor.u32 1.1754944e-38, %v5204
    %v5206 = vsel %vm5203, %v5205, %v5201
    %v5207 = vmul.f32 1.0, %v5206
    %v5208 = vrcp.pop %v5192
    %v5209 = vmul.f32 %v5192, %v5208
    %v5210 = vsub.f32 1.0, %v5209
    %v5211 = vmul.f32 %v5208, %v5210
    %v5212 = vadd.f32 %v5208, %v5211
    %vm5213 = vweird.f32 %v5192
    %vm5214 = vweird.f32 %v5208
    %vm5215 = vmor %vm5213, %vm5214
    %v5216 = vsel %vm5215, %v5208, %v5212
    %v5217 = vand.u32 2147483647, %v5192
    %vm5218 = vcmp.eq.f32.partialorder %v5217, 8.507059e+37
    %v5219 = vand.u32 %v5192, 2147483648
    %v5220 = vor.u32 1.1754944e-38, %v5219
    %v5221 = vsel %vm5218, %v5220, %v5216
    %v5222 = vmul.f32 1.0, %v5221
    %v5223 = vmul.f32 %v5167, %v5183
    %v5224 = vmul.f32 %v5182, %v5184
    %v5225 = vtanh.pop %v5223
    %v5226 = vtanh.pop %v5224
    %v5227 = vmul.f32 %v5207, %v5225
    %v5228 = vmul.f32 %v5222, %v5226
    %v5229 = vpack.c.bf16 %v5137, %v5137
    %v5230 = vpack.c.bf16 %v5138, %v5138
    %v5231 = vpack.c.bf16 %v5227, %v5227
    %v5232 = vpack.c.bf16 %v5228, %v5228
    %v5233 = vld [vmem:[#allocation7] sm:$0xf]
    %v5234 = vld [vmem:[#allocation7 + $0x4] sm:$0xf]
    %v5235 = vld [vmem:[#allocation7 + $0x8] sm:$0xf]
    %v5236 = vld [vmem:[#allocation7 + $0xc] sm:$0xf]
    %v5237 = vld [vmem:[#allocation7 + $0x10] sm:$0xf]
    %v5238 = vld [vmem:[#allocation7 + $0x14] sm:$0xf]
    %v5239 = vld [vmem:[#allocation7 + $0x18] sm:$0xf]
    %v5240 = vld [vmem:[#allocation7 + $0x1c] sm:$0xf]
    %v5241 = vld [vmem:[#allocation7 + $0x20] sm:$0xf]
    %v5242 = vld [vmem:[#allocation7 + $0x24] sm:$0xf]
    %v5243 = vld [vmem:[#allocation7 + $0x28] sm:$0xf]
    %v5244 = vld [vmem:[#allocation7 + $0x2c] sm:$0xf]
    %v5245 = vld [vmem:[#allocation7 + $0x30] sm:$0xf]
    %v5246 = vld [vmem:[#allocation7 + $0x34] sm:$0xf]
    %v5247 = vld [vmem:[#allocation7 + $0x38] sm:$0xf]
    %v5248 = vld [vmem:[#allocation7 + $0x3c] sm:$0xf]
    %v5249 = vld [vmem:[#allocation7 + $0x40] sm:$0xf]
    %v5250 = vld [vmem:[#allocation7 + $0x44] sm:$0xf]
    %v5251 = vld [vmem:[#allocation7 + $0x48] sm:$0xf]
    %v5252 = vld [vmem:[#allocation7 + $0x4c] sm:$0xf]
    %v5253 = vld [vmem:[#allocation7 + $0x50] sm:$0xf]
    %v5254 = vld [vmem:[#allocation7 + $0x54] sm:$0xf]
    %v5255 = vld [vmem:[#allocation7 + $0x58] sm:$0xf]
    %v5256 = vld [vmem:[#allocation7 + $0x5c] sm:$0xf]
    %v5257 = vld [vmem:[#allocation7 + $0x60] sm:$0xf]
    %v5258 = vld [vmem:[#allocation7 + $0x64] sm:$0xf]
    %v5259 = vld [vmem:[#allocation7 + $0x68] sm:$0xf]
    %v5260 = vld [vmem:[#allocation7 + $0x6c] sm:$0xf]
    %v5261 = vld [vmem:[#allocation7 + $0x70] sm:$0xf]
    %v5262 = vld [vmem:[#allocation7 + $0x74] sm:$0xf]
    %v5263 = vld [vmem:[#allocation7 + $0x78] sm:$0xf]
    %v5264 = vld [vmem:[#allocation7 + $0x7c] sm:$0xf]
    %v5265 = vld [vmem:[#allocation7 + $0x80] sm:$0xf]
    %v5266 = vld [vmem:[#allocation7 + $0x84] sm:$0xf]
    %v5267 = vld [vmem:[#allocation7 + $0x88] sm:$0xf]
    %v5268 = vld [vmem:[#allocation7 + $0x8c] sm:$0xf]
    %v5269 = vld [vmem:[#allocation7 + $0x90] sm:$0xf]
    %v5270 = vld [vmem:[#allocation7 + $0x94] sm:$0xf]
    %v5271 = vld [vmem:[#allocation7 + $0x98] sm:$0xf]
    %v5272 = vld [vmem:[#allocation7 + $0x9c] sm:$0xf]
    %v5273 = vld [vmem:[#allocation7 + $0xa0] sm:$0xf]
    %v5274 = vld [vmem:[#allocation7 + $0xa4] sm:$0xf]
    %v5275 = vld [vmem:[#allocation7 + $0xa8] sm:$0xf]
    %v5276 = vld [vmem:[#allocation7 + $0xac] sm:$0xf]
    %v5277 = vld [vmem:[#allocation7 + $0xb0] sm:$0xf]
    %v5278 = vld [vmem:[#allocation7 + $0xb4] sm:$0xf]
    %v5279 = vld [vmem:[#allocation7 + $0xb8] sm:$0xf]
    %v5280 = vld [vmem:[#allocation7 + $0xbc] sm:$0xf]
    %v5281 = vld [vmem:[#allocation7 + $0xc0] sm:$0xf]
    %v5282 = vld [vmem:[#allocation7 + $0xc4] sm:$0xf]
    %v5283 = vld [vmem:[#allocation7 + $0xc8] sm:$0xf]
    %v5284 = vld [vmem:[#allocation7 + $0xcc] sm:$0xf]
    %v5285 = vld [vmem:[#allocation7 + $0xd0] sm:$0xf]
    %v5286 = vld [vmem:[#allocation7 + $0xd4] sm:$0xf]
    %v5287 = vld [vmem:[#allocation7 + $0xd8] sm:$0xf]
    %v5288 = vld [vmem:[#allocation7 + $0xdc] sm:$0xf]
    %v5289 = vld [vmem:[#allocation7 + $0xe0] sm:$0xf]
    %v5290 = vld [vmem:[#allocation7 + $0xe4] sm:$0xf]
    %v5291 = vld [vmem:[#allocation7 + $0xe8] sm:$0xf]
    %v5292 = vld [vmem:[#allocation7 + $0xec] sm:$0xf]
    %v5293 = vld [vmem:[#allocation7 + $0xf0] sm:$0xf]
    %v5294 = vld [vmem:[#allocation7 + $0xf4] sm:$0xf]
    %v5295 = vld [vmem:[#allocation7 + $0xf8] sm:$0xf]
    %v5296 = vld [vmem:[#allocation7 + $0xfc] sm:$0xf]
    %v5297 = vld [vmem:[%s5] sm:$0x1]
    %v5299 = vperm.slane %v5297, 0
    %v5365 = vunpack.c.l.b16 %v5233
    %v5366 = vunpack.c.l.b16 %v5234
    %v5367 = vunpack.c.l.b16 %v5235
    %v5368 = vunpack.c.l.b16 %v5236
    %v5369 = vunpack.c.l.b16 %v5237
    %v5370 = vunpack.c.l.b16 %v5238
    %v5371 = vunpack.c.l.b16 %v5239
    %v5372 = vunpack.c.l.b16 %v5240
    %v5373 = vunpack.c.l.b16 %v5241
    %v5374 = vunpack.c.l.b16 %v5242
    %v5375 = vunpack.c.l.b16 %v5243
    %v5376 = vunpack.c.l.b16 %v5244
    %v5377 = vunpack.c.l.b16 %v5245
    %v5378 = vunpack.c.l.b16 %v5246
    %v5379 = vunpack.c.l.b16 %v5247
    %v5380 = vunpack.c.l.b16 %v5248
    %v5381 = vunpack.c.l.b16 %v5249
    %v5382 = vunpack.c.l.b16 %v5250
    %v5383 = vunpack.c.l.b16 %v5251
    %v5384 = vunpack.c.l.b16 %v5252
    %v5385 = vunpack.c.l.b16 %v5253
    %v5386 = vunpack.c.l.b16 %v5254
    %v5387 = vunpack.c.l.b16 %v5255
    %v5388 = vunpack.c.l.b16 %v5256
    %v5389 = vunpack.c.l.b16 %v5257
    %v5390 = vunpack.c.l.b16 %v5258
    %v5391 = vunpack.c.l.b16 %v5259
    %v5392 = vunpack.c.l.b16 %v5260
    %v5393 = vunpack.c.l.b16 %v5261
    %v5394 = vunpack.c.l.b16 %v5262
    %v5395 = vunpack.c.l.b16 %v5263
    %v5396 = vunpack.c.l.b16 %v5264
    %v5397 = vunpack.c.l.b16 %v5265
    %v5398 = vunpack.c.l.b16 %v5266
    %v5399 = vunpack.c.l.b16 %v5267
    %v5400 = vunpack.c.l.b16 %v5268
    %v5401 = vunpack.c.l.b16 %v5269
    %v5402 = vunpack.c.l.b16 %v5270
    %v5403 = vunpack.c.l.b16 %v5271
    %v5404 = vunpack.c.l.b16 %v5272
    %v5405 = vunpack.c.l.b16 %v5273
    %v5406 = vunpack.c.l.b16 %v5274
    %v5407 = vunpack.c.l.b16 %v5275
    %v5408 = vunpack.c.l.b16 %v5276
    %v5409 = vunpack.c.l.b16 %v5277
    %v5410 = vunpack.c.l.b16 %v5278
    %v5411 = vunpack.c.l.b16 %v5279
    %v5412 = vunpack.c.l.b16 %v5280
    %v5413 = vunpack.c.l.b16 %v5281
    %v5414 = vunpack.c.l.b16 %v5282
    %v5415 = vunpack.c.l.b16 %v5283
    %v5416 = vunpack.c.l.b16 %v5284
    %v5417 = vunpack.c.l.b16 %v5285
    %v5418 = vunpack.c.l.b16 %v5286
    %v5419 = vunpack.c.l.b16 %v5287
    %v5420 = vunpack.c.l.b16 %v5288
    %v5421 = vunpack.c.l.b16 %v5289
    %v5422 = vunpack.c.l.b16 %v5290
    %v5423 = vunpack.c.l.b16 %v5291
    %v5424 = vunpack.c.l.b16 %v5292
    %v5425 = vunpack.c.l.b16 %v5293
    %v5426 = vunpack.c.l.b16 %v5294
    %v5427 = vunpack.c.l.b16 %v5295
    %v5428 = vunpack.c.l.b16 %v5296
    %v5429 = vpack.c.b16 %v5366, %v5365
    %v5430 = vpack.c.b16 %v5368, %v5367
    %v5431 = vpack.c.b16 %v5370, %v5369
    %v5432 = vpack.c.b16 %v5372, %v5371
    %v5433 = vpack.c.b16 %v5374, %v5373
    %v5434 = vpack.c.b16 %v5376, %v5375
    %v5435 = vpack.c.b16 %v5378, %v5377
    %v5436 = vpack.c.b16 %v5380, %v5379
    %v5437 = vpack.c.b16 %v5382, %v5381
    %v5438 = vpack.c.b16 %v5384, %v5383
    %v5439 = vpack.c.b16 %v5386, %v5385
    %v5440 = vpack.c.b16 %v5388, %v5387
    %v5441 = vpack.c.b16 %v5390, %v5389
    %v5442 = vpack.c.b16 %v5392, %v5391
    %v5443 = vpack.c.b16 %v5394, %v5393
    %v5444 = vpack.c.b16 %v5396, %v5395
    %v5445 = vpack.c.b16 %v5398, %v5397
    %v5446 = vpack.c.b16 %v5400, %v5399
    %v5447 = vpack.c.b16 %v5402, %v5401
    %v5448 = vpack.c.b16 %v5404, %v5403
    %v5449 = vpack.c.b16 %v5406, %v5405
    %v5450 = vpack.c.b16 %v5408, %v5407
    %v5451 = vpack.c.b16 %v5410, %v5409
    %v5452 = vpack.c.b16 %v5412, %v5411
    %v5453 = vpack.c.b16 %v5414, %v5413
    %v5454 = vpack.c.b16 %v5416, %v5415
    %v5455 = vpack.c.b16 %v5418, %v5417
    %v5456 = vpack.c.b16 %v5420, %v5419
    %v5457 = vpack.c.b16 %v5422, %v5421
    %v5458 = vpack.c.b16 %v5424, %v5423
    %v5459 = vpack.c.b16 %v5426, %v5425
    %v5460 = vpack.c.b16 %v5428, %v5427
    %5493 = vmatpush.bf16.msra.mxu0 %v5436
    %5494 = vmatpush.bf16.msra.mxu0 %v5435
    %5495 = vmatpush.bf16.msra.mxu0 %v5434
    %5496 = vmatpush.bf16.msra.mxu0 %v5433
    %5497 = vmatpush.bf16.msra.mxu0 %v5432
    %5498 = vmatpush.bf16.msra.mxu0 %v5431
    %5499 = vmatpush.bf16.msra.mxu0 %v5430
    %5500 = vmatpush.bf16.msra.mxu0 %v5429
    %5501 = vmatmul.bf16.gmra.mxu0 %v5229
    %v5502 = vpop.f32.mrf.mxu0
    %v5503 = vadd.f32 %v5299, %v5502
    %v5504 = vpop.f32.mrf.mxu0
    %5505 = vdwg.mxu0
    %5506 = vmatpush.bf16.msra.mxu0 %v5444
    %5507 = vmatpush.bf16.msra.mxu0 %v5443
    %5508 = vmatpush.bf16.msra.mxu0 %v5442
    %5509 = vmatpush.bf16.msra.mxu0 %v5441
    %5510 = vmatpush.bf16.msra.mxu0 %v5440
    %5511 = vmatpush.bf16.msra.mxu0 %v5439
    %5512 = vmatpush.bf16.msra.mxu0 %v5438
    %5513 = vmatpush.bf16.msra.mxu0 %v5437
    %5514 = vmatmul.bf16.gmra.mxu0 %v5230
    %v5515 = vpop.f32.mrf.mxu0
    %v5516 = vadd.f32 %v5503, %v5515
    %v5517 = vpop.f32.mrf.mxu0
    %5518 = vdwg.mxu0
    %5519 = vmatpush.bf16.msra.mxu0 %v5452
    %5520 = vmatpush.bf16.msra.mxu0 %v5451
    %5521 = vmatpush.bf16.msra.mxu0 %v5450
    %5522 = vmatpush.bf16.msra.mxu0 %v5449
    %5523 = vmatpush.bf16.msra.mxu0 %v5448
    %5524 = vmatpush.bf16.msra.mxu0 %v5447
    %5525 = vmatpush.bf16.msra.mxu0 %v5446
    %5526 = vmatpush.bf16.msra.mxu0 %v5445
    %5527 = vmatmul.bf16.gmra.mxu0 %v5231
    %v5528 = vpop.f32.mrf.mxu0
    %v5529 = vadd.f32 %v5516, %v5528
    %v5530 = vpop.f32.mrf.mxu0
    %5531 = vdwg.mxu0
    %5532 = vmatpush.bf16.msra.mxu0 %v5460
    %5533 = vmatpush.bf16.msra.mxu0 %v5459
    %5534 = vmatpush.bf16.msra.mxu0 %v5458
    %5535 = vmatpush.bf16.msra.mxu0 %v5457
    %5536 = vmatpush.bf16.msra.mxu0 %v5456
    %5537 = vmatpush.bf16.msra.mxu0 %v5455
    %5538 = vmatpush.bf16.msra.mxu0 %v5454
    %5539 = vmatpush.bf16.msra.mxu0 %v5453
    %5540 = vmatmul.bf16.gmra.mxu0 %v5232
    %v5541 = vpop.f32.mrf.mxu0
    %v5542 = vadd.f32 %v5529, %v5541
    %v5543 = vpop.f32.mrf.mxu0
    %5544 = vdwg.mxu0
    %v5545 = vmax.f32 %v5542, 0.0
    %v5546 = vpack.c.bf16 %v5545, %v5545
    %v5547 = vld [vmem:[%s6] sm:$0xf]
    %v5548 = vld [vmem:[%s6 + $0x4] sm:$0xf]
    %v5549 = vld [vmem:[%s6 + $0x8] sm:$0xf]
    %v5550 = vld [vmem:[%s6 + $0xc] sm:$0xf]
    %v5551 = vld [vmem:[%s6 + $0x10] sm:$0xf]
    %v5552 = vld [vmem:[%s6 + $0x14] sm:$0xf]
    %v5553 = vld [vmem:[%s6 + $0x18] sm:$0xf]
    %v5554 = vld [vmem:[%s6 + $0x1c] sm:$0xf]
    %v5555 = vld [vmem:[%s6 + $0x20] sm:$0xf]
    %v5556 = vld [vmem:[%s6 + $0x24] sm:$0xf]
    %v5557 = vld [vmem:[%s6 + $0x28] sm:$0xf]
    %v5558 = vld [vmem:[%s6 + $0x2c] sm:$0xf]
    %v5559 = vld [vmem:[%s6 + $0x30] sm:$0xf]
    %v5560 = vld [vmem:[%s6 + $0x34] sm:$0xf]
    %v5561 = vld [vmem:[%s6 + $0x38] sm:$0xf]
    %v5562 = vld [vmem:[%s6 + $0x3c] sm:$0xf]
    %v5563 = vld [vmem:[%s7] sm:$0x1]
    %v5565 = vperm.slane %v5563, 0
    %v5583 = vunpack.c.l.b16 %v5547
    %v5584 = vunpack.c.l.b16 %v5548
    %v5585 = vunpack.c.l.b16 %v5549
    %v5586 = vunpack.c.l.b16 %v5550
    %v5587 = vunpack.c.l.b16 %v5551
    %v5588 = vunpack.c.l.b16 %v5552
    %v5589 = vunpack.c.l.b16 %v5553
    %v5590 = vunpack.c.l.b16 %v5554
    %v5591 = vunpack.c.l.b16 %v5555
    %v5592 = vunpack.c.l.b16 %v5556
    %v5593 = vunpack.c.l.b16 %v5557
    %v5594 = vunpack.c.l.b16 %v5558
    %v5595 = vunpack.c.l.b16 %v5559
    %v5596 = vunpack.c.l.b16 %v5560
    %v5597 = vunpack.c.l.b16 %v5561
    %v5598 = vunpack.c.l.b16 %v5562
    %v5599 = vpack.c.b16 %v5584, %v5583
    %v5600 = vpack.c.b16 %v5586, %v5585
    %v5601 = vpack.c.b16 %v5588, %v5587
    %v5602 = vpack.c.b16 %v5590, %v5589
    %v5603 = vpack.c.b16 %v5592, %v5591
    %v5604 = vpack.c.b16 %v5594, %v5593
    %v5605 = vpack.c.b16 %v5596, %v5595
    %v5606 = vpack.c.b16 %v5598, %v5597
    %5615 = vmatpush.bf16.msra.mxu0 %v5606
    %5616 = vmatpush.bf16.msra.mxu0 %v5605
    %5617 = vmatpush.bf16.msra.mxu0 %v5604
    %5618 = vmatpush.bf16.msra.mxu0 %v5603
    %5619 = vmatpush.bf16.msra.mxu0 %v5602
    %5620 = vmatpush.bf16.msra.mxu0 %v5601
    %5621 = vmatpush.bf16.msra.mxu0 %v5600
    %5622 = vmatpush.bf16.msra.mxu0 %v5599
    %5623 = vmatmul.bf16.gmra.mxu0 %v5546
    %v5624 = vpop.f32.mrf.mxu0
    %v5625 = vadd.f32 %v5565, %v5624
    %v5626 = vpop.f32.mrf.mxu0
    %5627 = vdwg.mxu0
    %v5628 = vmax.f32 %v5625, 0.0
    %v5629 = vpack.c.bf16 %v5628, %v5628
    %v5630 = vld [vmem:[#allocation8] sm:$0xf]
    %v5631 = vld [vmem:[#allocation8 + $0x4] sm:$0xf]
    %v5632 = vld [vmem:[#allocation8 + $0x8] sm:$0xf]
    %v5633 = vld [vmem:[#allocation8 + $0xc] sm:$0xf]
    %v5634 = vld [vmem:[#allocation8 + $0x10] sm:$0xf]
    %v5635 = vld [vmem:[#allocation8 + $0x14] sm:$0xf]
    %v5636 = vld [vmem:[#allocation8 + $0x18] sm:$0xf]
    %v5637 = vld [vmem:[#allocation8 + $0x1c] sm:$0xf]
    %v5638 = vld [vmem:[#allocation8 + $0x20] sm:$0xf]
    %v5639 = vld [vmem:[#allocation8 + $0x24] sm:$0xf]
    %v5640 = vld [vmem:[#allocation8 + $0x28] sm:$0xf]
    %v5641 = vld [vmem:[#allocation8 + $0x2c] sm:$0xf]
    %v5642 = vld [vmem:[#allocation8 + $0x30] sm:$0xf]
    %v5643 = vld [vmem:[#allocation8 + $0x34] sm:$0xf]
    %v5644 = vld [vmem:[#allocation8 + $0x38] sm:$0xf]
    %v5645 = vld [vmem:[#allocation8 + $0x3c] sm:$0xf]
    %v5646 = vld [vmem:[%s9] sm:$0x1]
    %v5648 = vperm.slane %v5646, 0
    %v5666 = vunpack.c.l.b16 %v5630
    %v5667 = vunpack.c.l.b16 %v5631
    %v5668 = vunpack.c.l.b16 %v5632
    %v5669 = vunpack.c.l.b16 %v5633
    %v5670 = vunpack.c.l.b16 %v5634
    %v5671 = vunpack.c.l.b16 %v5635
    %v5672 = vunpack.c.l.b16 %v5636
    %v5673 = vunpack.c.l.b16 %v5637
    %v5674 = vunpack.c.l.b16 %v5638
    %v5675 = vunpack.c.l.b16 %v5639
    %v5676 = vunpack.c.l.b16 %v5640
    %v5677 = vunpack.c.l.b16 %v5641
    %v5678 = vunpack.c.l.b16 %v5642
    %v5679 = vunpack.c.l.b16 %v5643
    %v5680 = vunpack.c.l.b16 %v5644
    %v5681 = vunpack.c.l.b16 %v5645
    %v5682 = vpack.c.b16 %v5667, %v5666
    %v5683 = vpack.c.b16 %v5669, %v5668
    %v5684 = vpack.c.b16 %v5671, %v5670
    %v5685 = vpack.c.b16 %v5673, %v5672
    %v5686 = vpack.c.b16 %v5675, %v5674
    %v5687 = vpack.c.b16 %v5677, %v5676
    %v5688 = vpack.c.b16 %v5679, %v5678
    %v5689 = vpack.c.b16 %v5681, %v5680
    %5698 = vmatpush.bf16.msra.mxu0 %v5689
    %5699 = vmatpush.bf16.msra.mxu0 %v5688
    %5700 = vmatpush.bf16.msra.mxu0 %v5687
    %5701 = vmatpush.bf16.msra.mxu0 %v5686
    %5702 = vmatpush.bf16.msra.mxu0 %v5685
    %5703 = vmatpush.bf16.msra.mxu0 %v5684
    %5704 = vmatpush.bf16.msra.mxu0 %v5683
    %5705 = vmatpush.bf16.msra.mxu0 %v5682
    %5706 = vmatmul.bf16.gmra.mxu0 %v5629
    %v5707 = vpop.f32.mrf.mxu0
    %v5708 = vadd.f32 %v5648, %v5707
    %v5709 = vpop.f32.mrf.mxu0
    %5710 = vdwg.mxu0
    %5711 = vst [vmem:[%s10] sm:$0xff] %v5708
    // Predicated region
    $region58: #{code_analysis_forward.1} parent=1 // pred_check
      _
    $region59: #{code_analysis_forward.1} parent=1 // pred_check_branch
      %5713 = sbr.rel (0) target = $region61
    $region60: #{code_analysis_forward.1} parent=1 // pred_region
      _
    $region61: #{code_analysis_forward.1} parent=1 // pred_fallthru
      _
    // Predicated region
    $region62: #{code_analysis_forward.1} parent=1 // pred_check
      _
    $region63: #{code_analysis_forward.1} parent=1 // pred_check_branch
      %5715 = sbr.rel (0) target = $region65
    $region64: #{code_analysis_forward.1} parent=1 // pred_region
      _
    $region65: #{code_analysis_forward.1} parent=1 // pred_fallthru
      _
    %5716 = vsyncpa [#allocation4], 1
    %5717 = vsyncpa [#allocation6], 1
    %5718 = vsyncpa [#allocation9], 1

</llo_original>
